<compile_context>
chip_gen: v5e
topology: v5e:2x2
jax: 0.10.0
libtpu: 0.0.40
codegen_flags: <defaults>
</compile_context>

<pallas_src>
import functools

import jax
import jax.numpy as jnp
from jax.experimental import pallas as pl
from jax.experimental.pallas import tpu as pltpu


def _round_up(x, m):
    return (x + m - 1) // m * m


def _fused_head_kernel(x_ref, w_ref, b_ref, o_ref, a_ref, *, H, W, Cpad, P):
    """One (batch, layer) grid step of the fused 5-conv classification head.

    x_ref : (1, H*W, Cpad)        channel-padded input (consumed at layer step 0 only)
    w_ref : (1, 9, Cpad, Cpad)    this layer's 3x3 weights, bf16, tap-major (3*dy+dx)
    b_ref : (1, 1, Cpad)          this layer's bias, f32
    o_ref : (1, H*W, Cpad)        lane-dense sigmoid output (written at last layer only)
    a_ref : (R, Cpad) VMEM f32    flattened activations; interior rows [P, P+H*W),
                                  >= W+1 zero halo rows above and below.
    """
    HW = H * W
    lyr = pl.program_id(1)
    n_layers = pl.num_programs(1)

    # Layer step 0: zero ONLY the halo rows, load this batch element into the interior.
    @pl.when(lyr == 0)
    def _():
        a_ref[0:P, :] = jnp.zeros((P, Cpad), jnp.float32)
        a_ref[P:P + HW, :] = x_ref[0]
        tail = a_ref.shape[0] - (P + HW)
        a_ref[P + HW:, :] = jnp.zeros((tail, Cpad), jnp.float32)

    xa = a_ref[...]                       # (R, Cpad) f32, stays VMEM-resident

    # Column border masks in the flattened row-major layout: dx=0 taps read the previous
    # row's last pixel at x=0, dx=2 taps read the next row's first pixel at x=W-1 — zero
    # those positions.  Row (dy) borders are covered by the zero halo rows.
    col = jax.lax.broadcasted_iota(jnp.int32, (HW, 1), 0) % W
    not_left = col != 0
    not_right = col != (W - 1)

    acc = jnp.zeros((HW, Cpad), jnp.float32)
    for dy in range(3):
        for dx in range(3):
            s = P + (dy - 1) * W + (dx - 1)           # static row offset of this tap
            tap = xa[s:s + HW, :]                     # contiguous slice, no reshape
            if dx == 0:
                tap = jnp.where(not_left, tap, 0.0)
            elif dx == 2:
                tap = jnp.where(not_right, tap, 0.0)
            acc = acc + jnp.dot(tap.astype(jnp.bfloat16), w_ref[0, 3 * dy + dx],
                                preferred_element_type=jnp.float32)
    acc = acc + b_ref[0]                              # (HW, Cpad) f32

    @pl.when(lyr < n_layers - 1)
    def _():                                          # hidden layers: ReLU, stays in VMEM
        a_ref[P:P + HW, :] = jnp.maximum(acc, 0.0)

    @pl.when(lyr == n_layers - 1)
    def _():                                          # output layer: sigmoid, lane-dense
        o_ref[0] = jax.nn.sigmoid(acc)


@functools.partial(jax.jit, static_argnames=("num_classes",))
def classification_model_forward(x_nhwc, packed, *, num_classes):
    """Forward pass matching ClassificationModel.forward semantics (NHWC activations)."""
    B, H, W, Cin = x_nhwc.shape
    w_all, b_all = packed["w"], packed["b"]
    n_layers, _, _, Cpad = w_all.shape
    HW = H * W
    P = _round_up(W + 1, 8)          # >= W+1 zero halo rows; interior sublane-aligned
    R = P + HW + P                   # flattened scratch rows

    # Channel-pad the input to a lane-dense (B, H*W, Cpad) slab (layout only, tiny).
    x_flat = jnp.zeros((B, HW, Cpad), jnp.float32).at[:, :, :Cin].set(
        x_nhwc.reshape(B, HW, Cin))

    kernel = functools.partial(_fused_head_kernel, H=H, W=W, Cpad=Cpad, P=P)

    out = pl.pallas_call(
        kernel,
        out_shape=jax.ShapeDtypeStruct((B, HW, Cpad), jnp.float32),
        grid=(B, n_layers),
        in_specs=[
            pl.BlockSpec((1, HW, Cpad), lambda b, l: (b, 0, 0)),          # input
            pl.BlockSpec((1, 9, Cpad, Cpad), lambda b, l: (l, 0, 0, 0)),  # per-layer W
            pl.BlockSpec((1, 1, Cpad), lambda b, l: (l, 0, 0)),           # per-layer bias
        ],
        out_specs=pl.BlockSpec((1, HW, Cpad), lambda b, l: (b, 0, 0)),
        scratch_shapes=[pltpu.VMEM((R, Cpad), jnp.float32)],
        compiler_params=pltpu.CompilerParams(
            dimension_semantics=("parallel", "arbitrary")),
    )(x_flat, w_all, b_all)

    # Lane-dense kernel output sliced to the real class count; identical to
    # permute(0,2,3,1).view(B, -1, num_classes) of the torch module.
    return out[:, :, :num_classes]


def init_params(key, num_features_in, num_classes, feature_size):
    """Deterministic synthetic parameters (HWIO weights, per-channel bias)."""
    dims = [
        (num_features_in, feature_size),  # conv1
        (feature_size, feature_size),     # conv2
        (feature_size, feature_size),     # conv3
        (feature_size, feature_size),     # conv4
        (feature_size, num_classes),      # output
    ]
    params = []
    for cin, cout in dims:
        key, kw, kb = jax.random.split(key, 3)
        bound = (1.0 / (cin * 9)) ** 0.5
        w = jax.random.uniform(kw, (3, 3, cin, cout), jnp.float32, -bound, bound)
        b = jax.random.uniform(kb, (cout,), jnp.float32, -bound, bound)
        params.append((w, b))
    return params


def pack_params(params):
    """One-time layout plumbing: pad channels to Cpad=128, tap-major reshape, stack."""
    cmax = max(max(w.shape[2], w.shape[3]) for w, _ in params)
    Cpad = _round_up(cmax, 128)
    ws, bs = [], []
    for w, b in params:
        cin, cout = w.shape[2], w.shape[3]
        wp = jnp.zeros((3, 3, Cpad, Cpad), jnp.float32).at[:, :, :cin, :cout].set(w)
        ws.append(wp.reshape(9, Cpad, Cpad).astype(jnp.bfloat16))
        bs.append(jnp.zeros((1, Cpad), jnp.float32).at[:, :cout].set(b))
    return {
        "w": jnp.stack(ws, axis=0),   # (5, 9, Cpad, Cpad) bf16, tap-major
        "b": jnp.stack(bs, axis=0),   # (5, 1, Cpad)       f32
    }


def _reference_forward(x_nhwc, params, num_classes):
    """Pure-JAX (XLA) reference of the torch module, f32 throughout."""
    out = x_nhwc
    n = len(params)
    for li, (w, b) in enumerate(params):
        out = jax.lax.conv_general_dilated(
            out, w, window_strides=(1, 1), padding="SAME",
            dimension_numbers=("NHWC", "HWIO", "NHWC"))
        out = out + b.reshape(1, 1, 1, -1)
        out = jnp.maximum(out, 0.0) if li < n - 1 else jax.nn.sigmoid(out)
    B = out.shape[0]
    return out.reshape(B, -1, num_classes)


if __name__ == "__main__":
    # Small shapes consistent with the module constructor (torch input is NCHW (2,4,16,16)).
    batch = 2
    num_features_in = 4
    H = W = 16
    feature_size = 32
    num_classes = 8

    key = jax.random.PRNGKey(0)
    key, kx = jax.random.split(key)
    x_nchw = jax.random.normal(kx, (batch, num_features_in, H, W), jnp.float32)
    x_nhwc = jnp.transpose(x_nchw, (0, 2, 3, 1))

    params = init_params(key, num_features_in, num_classes, feature_size)
    packed = pack_params(params)

    out = classification_model_forward(x_nhwc, packed, num_classes=num_classes)
    out = jax.block_until_ready(out)

    assert out.shape == (batch, H * W, num_classes), out.shape
    assert bool(jnp.all(jnp.isfinite(out)))
    assert bool(jnp.all((out >= 0.0) & (out <= 1.0)))  # sigmoid output range

    # Numerical check vs. the f32 XLA reference (kernel uses bf16 MXU operands with f32
    # accumulation, so allow a generous tolerance).
    ref = _reference_forward(x_nhwc, params, num_classes)
    max_diff = float(jnp.max(jnp.abs(out - ref)))
    assert max_diff < 5e-2, f"max abs diff vs reference: {max_diff}"

    print("KERNEL_OK")
</pallas_src>

<mosaic_0001>
module attributes {stable_mosaic.version = 11 : i64} {
  func.func @_fused_head_kernel(%arg0: i32, %arg1: i32, %arg2: memref<1x256x128xf32, #tpu.memory_space<vmem>>, %arg3: memref<1x9x128x128xbf16, #tpu.memory_space<vmem>>, %arg4: memref<1x1x128xf32, #tpu.memory_space<vmem>>, %arg5: memref<1x256x128xf32, #tpu.memory_space<vmem>>, %arg6: memref<304x128xf32, #tpu.memory_space<vmem>>) attributes {dimension_semantics = [#tpu.dimension_semantics<parallel>, #tpu.dimension_semantics<arbitrary>], iteration_bounds = array<i64: 2, 5>, scalar_prefetch = 0 : i64, scratch_operands = 1 : i64, tpu.core_type = #tpu.core_type<tc>, window_params = [{transform_indices = @transform_0, window_bounds = array<i64: 1, 256, 128>}, {transform_indices = @transform_1, window_bounds = array<i64: 1, 9, 128, 128>}, {transform_indices = @transform_2, window_bounds = array<i64: 1, 1, 128>}, {transform_indices = @transform_3, window_bounds = array<i64: 1, 256, 128>}]} {
    %c0_i32 = arith.constant 0 : i32
    %0 = arith.cmpi eq, %arg1, %c0_i32 : i32
    %1 = arith.extui %0 : i1 to i32
    %c0_i32_0 = arith.constant 0 : i32
    %2 = arith.cmpi ne, %1, %c0_i32_0 : i32
    scf.if %2 {
      %cst_56 = arith.constant 0.000000e+00 : f32
      %114 = vector.broadcast %cst_56 : f32 to vector<24x128xf32>
      %c0_57 = arith.constant 0 : index
      %c0_58 = arith.constant 0 : index
      %115 = vector.load %arg6[%c0_57, %c0_58] : memref<304x128xf32, #tpu.memory_space<vmem>>, vector<24x128xf32>
      tpu.vector_store %arg6[%c0_57, %c0_58], %114 {strides = array<i32>} : memref<304x128xf32, #tpu.memory_space<vmem>>, vector<24x128xf32>,
      %c0_59 = arith.constant 0 : index
      %c0_60 = arith.constant 0 : index
      %c0_61 = arith.constant 0 : index
      %116 = vector.load %arg2[%c0_59, %c0_60, %c0_61] : memref<1x256x128xf32, #tpu.memory_space<vmem>>, vector<1x256x128xf32>
      %117 = vector.shape_cast %116 : vector<1x256x128xf32> to vector<256x128xf32>
      %c24 = arith.constant 24 : index
      %c0_62 = arith.constant 0 : index
      %118 = vector.load %arg6[%c24, %c0_62] : memref<304x128xf32, #tpu.memory_space<vmem>>, vector<256x128xf32>
      tpu.vector_store %arg6[%c24, %c0_62], %117 {strides = array<i32>} : memref<304x128xf32, #tpu.memory_space<vmem>>, vector<256x128xf32>,
      %cst_63 = arith.constant 0.000000e+00 : f32
      %119 = vector.broadcast %cst_63 : f32 to vector<24x128xf32>
      %c280 = arith.constant 280 : index
      %c0_64 = arith.constant 0 : index
      %120 = vector.load %arg6[%c280, %c0_64] : memref<304x128xf32, #tpu.memory_space<vmem>>, vector<24x128xf32>
      tpu.vector_store %arg6[%c280, %c0_64], %119 {strides = array<i32>} : memref<304x128xf32, #tpu.memory_space<vmem>>, vector<24x128xf32>,
    } else {
    }
    %c0 = arith.constant 0 : index
    %c0_1 = arith.constant 0 : index
    %3 = vector.load %arg6[%c0, %c0_1] : memref<304x128xf32, #tpu.memory_space<vmem>>, vector<304x128xf32>
    %4 = tpu.iota {dimensions = array<i32: 0>} : vector<256x1xi32>
    %c16_i32 = arith.constant 16 : i32
    %c0_i32_2 = arith.constant 0 : i32
    %5 = arith.cmpi eq, %c16_i32, %c0_i32_2 : i32
    %c1_i32 = arith.constant 1 : i32
    %6 = arith.select %5, %c1_i32, %c16_i32 : i32
    %7 = vector.broadcast %6 : i32 to vector<256x1xi32>
    %8 = arith.remsi %4, %7 : vector<256x1xi32>
    %c0_i32_3 = arith.constant 0 : i32
    %9 = vector.broadcast %c0_i32_3 : i32 to vector<256x1xi32>
    %10 = arith.cmpi ne, %8, %9 : vector<256x1xi32>
    %c0_i32_4 = arith.constant 0 : i32
    %11 = vector.broadcast %c0_i32_4 : i32 to vector<256x1xi32>
    %12 = arith.cmpi slt, %8, %11 : vector<256x1xi32>
    %c0_i32_5 = arith.constant 0 : i32
    %13 = arith.cmpi slt, %6, %c0_i32_5 : i32
    %14 = vector.broadcast %13 : i1 to vector<256x1xi1>
    %15 = vector.broadcast %14 : vector<256x1xi1> to vector<256x1xi1>
    %16 = arith.xori %12, %15 : vector<256x1xi1>
    %17 = arith.andi %16, %10 : vector<256x1xi1>
    %18 = vector.broadcast %6 : i32 to vector<256x1xi32>
    %19 = arith.addi %8, %18 : vector<256x1xi32>
    %20 = arith.select %17, %19, %8 : vector<256x1xi1>, vector<256x1xi32>
    %c0_i32_6 = arith.constant 0 : i32
    %21 = vector.broadcast %c0_i32_6 : i32 to vector<256x1xi32>
    %22 = arith.cmpi ne, %20, %21 : vector<256x1xi32>
    %c15_i32 = arith.constant 15 : i32
    %23 = vector.broadcast %c15_i32 : i32 to vector<256x1xi32>
    %24 = arith.cmpi ne, %20, %23 : vector<256x1xi32>
    %cst = arith.constant 0.000000e+00 : f32
    %25 = vector.broadcast %cst : f32 to vector<256x128xf32>
    %26 = vector.extract_strided_slice %3 {offsets = [7, 0], sizes = [256, 128], strides = [1, 1]} : vector<304x128xf32> to vector<256x128xf32>
    %cst_7 = arith.constant 0.000000e+00 : f32
    %27 = vector.shape_cast %22 : vector<256x1xi1> to vector<256x1xi1>
    %28 = vector.broadcast %27 : vector<256x1xi1> to vector<256x128xi1>
    %29 = vector.broadcast %cst_7 : f32 to vector<256x128xf32>
    %30 = arith.select %28, %26, %29 : vector<256x128xi1>, vector<256x128xf32>
    %31 = arith.truncf %30 : vector<256x128xf32> to vector<256x128xbf16>
    %c0_8 = arith.constant 0 : index
    %c0_9 = arith.constant 0 : index
    %c0_10 = arith.constant 0 : index
    %c0_11 = arith.constant 0 : index
    %32 = vector.load %arg3[%c0_8, %c0_9, %c0_10, %c0_11] : memref<1x9x128x128xbf16, #tpu.memory_space<vmem>>, vector<1x1x128x128xbf16>
    %33 = vector.shape_cast %32 : vector<1x1x128x128xbf16> to vector<128x128xbf16>
    %cst_12 = arith.constant dense<0.000000e+00> : vector<256x128xf32>
    %34 = tpu.matmul %31, %33, %cst_12 {dimension_numbers = #tpu.dot_dimension_numbers<[1], [0], [0], [1], [0, 0, 1, 1], [], []>} : vector<256x128xbf16>, vector<128x128xbf16>, vector<256x128xf32> -> vector<256x128xf32>
    %35 = arith.addf %25, %34 : vector<256x128xf32>
    %36 = vector.extract_strided_slice %3 {offsets = [8, 0], sizes = [256, 128], strides = [1, 1]} : vector<304x128xf32> to vector<256x128xf32>
    %37 = arith.truncf %36 : vector<256x128xf32> to vector<256x128xbf16>
    %c0_13 = arith.constant 0 : index
    %c1 = arith.constant 1 : index
    %c0_14 = arith.constant 0 : index
    %c0_15 = arith.constant 0 : index
    %38 = vector.load %arg3[%c0_13, %c1, %c0_14, %c0_15] : memref<1x9x128x128xbf16, #tpu.memory_space<vmem>>, vector<1x1x128x128xbf16>
    %39 = vector.shape_cast %38 : vector<1x1x128x128xbf16> to vector<128x128xbf16>
    %cst_16 = arith.constant dense<0.000000e+00> : vector<256x128xf32>
    %40 = tpu.matmul %37, %39, %cst_16 {dimension_numbers = #tpu.dot_dimension_numbers<[1], [0], [0], [1], [0, 0, 1, 1], [], []>} : vector<256x128xbf16>, vector<128x128xbf16>, vector<256x128xf32> -> vector<256x128xf32>
    %41 = arith.addf %35, %40 : vector<256x128xf32>
    %42 = vector.extract_strided_slice %3 {offsets = [9, 0], sizes = [256, 128], strides = [1, 1]} : vector<304x128xf32> to vector<256x128xf32>
    %cst_17 = arith.constant 0.000000e+00 : f32
    %43 = vector.shape_cast %24 : vector<256x1xi1> to vector<256x1xi1>
    %44 = vector.broadcast %43 : vector<256x1xi1> to vector<256x128xi1>
    %45 = vector.broadcast %cst_17 : f32 to vector<256x128xf32>
    %46 = arith.select %44, %42, %45 : vector<256x128xi1>, vector<256x128xf32>
    %47 = arith.truncf %46 : vector<256x128xf32> to vector<256x128xbf16>
    %c0_18 = arith.constant 0 : index
    %c2 = arith.constant 2 : index
    %c0_19 = arith.constant 0 : index
    %c0_20 = arith.constant 0 : index
    %48 = vector.load %arg3[%c0_18, %c2, %c0_19, %c0_20] : memref<1x9x128x128xbf16, #tpu.memory_space<vmem>>, vector<1x1x128x128xbf16>
    %49 = vector.shape_cast %48 : vector<1x1x128x128xbf16> to vector<128x128xbf16>
    %cst_21 = arith.constant dense<0.000000e+00> : vector<256x128xf32>
    %50 = tpu.matmul %47, %49, %cst_21 {dimension_numbers = #tpu.dot_dimension_numbers<[1], [0], [0], [1], [0, 0, 1, 1], [], []>} : vector<256x128xbf16>, vector<128x128xbf16>, vector<256x128xf32> -> vector<256x128xf32>
    %51 = arith.addf %41, %50 : vector<256x128xf32>
    %52 = vector.extract_strided_slice %3 {offsets = [23, 0], sizes = [256, 128], strides = [1, 1]} : vector<304x128xf32> to vector<256x128xf32>
    %cst_22 = arith.constant 0.000000e+00 : f32
    %53 = vector.shape_cast %22 : vector<256x1xi1> to vector<256x1xi1>
    %54 = vector.broadcast %53 : vector<256x1xi1> to vector<256x128xi1>
    %55 = vector.broadcast %cst_22 : f32 to vector<256x128xf32>
    %56 = arith.select %54, %52, %55 : vector<256x128xi1>, vector<256x128xf32>
    %57 = arith.truncf %56 : vector<256x128xf32> to vector<256x128xbf16>
    %c0_23 = arith.constant 0 : index
    %c3 = arith.constant 3 : index
    %c0_24 = arith.constant 0 : index
    %c0_25 = arith.constant 0 : index
    %58 = vector.load %arg3[%c0_23, %c3, %c0_24, %c0_25] : memref<1x9x128x128xbf16, #tpu.memory_space<vmem>>, vector<1x1x128x128xbf16>
    %59 = vector.shape_cast %58 : vector<1x1x128x128xbf16> to vector<128x128xbf16>
    %cst_26 = arith.constant dense<0.000000e+00> : vector<256x128xf32>
    %60 = tpu.matmul %57, %59, %cst_26 {dimension_numbers = #tpu.dot_dimension_numbers<[1], [0], [0], [1], [0, 0, 1, 1], [], []>} : vector<256x128xbf16>, vector<128x128xbf16>, vector<256x128xf32> -> vector<256x128xf32>
    %61 = arith.addf %51, %60 : vector<256x128xf32>
    %62 = vector.extract_strided_slice %3 {offsets = [24, 0], sizes = [256, 128], strides = [1, 1]} : vector<304x128xf32> to vector<256x128xf32>
    %63 = arith.truncf %62 : vector<256x128xf32> to vector<256x128xbf16>
    %c0_27 = arith.constant 0 : index
    %c4 = arith.constant 4 : index
    %c0_28 = arith.constant 0 : index
    %c0_29 = arith.constant 0 : index
    %64 = vector.load %arg3[%c0_27, %c4, %c0_28, %c0_29] : memref<1x9x128x128xbf16, #tpu.memory_space<vmem>>, vector<1x1x128x128xbf16>
    %65 = vector.shape_cast %64 : vector<1x1x128x128xbf16> to vector<128x128xbf16>
    %cst_30 = arith.constant dense<0.000000e+00> : vector<256x128xf32>
    %66 = tpu.matmul %63, %65, %cst_30 {dimension_numbers = #tpu.dot_dimension_numbers<[1], [0], [0], [1], [0, 0, 1, 1], [], []>} : vector<256x128xbf16>, vector<128x128xbf16>, vector<256x128xf32> -> vector<256x128xf32>
    %67 = arith.addf %61, %66 : vector<256x128xf32>
    %68 = vector.extract_strided_slice %3 {offsets = [25, 0], sizes = [256, 128], strides = [1, 1]} : vector<304x128xf32> to vector<256x128xf32>
    %cst_31 = arith.constant 0.000000e+00 : f32
    %69 = vector.shape_cast %24 : vector<256x1xi1> to vector<256x1xi1>
    %70 = vector.broadcast %69 : vector<256x1xi1> to vector<256x128xi1>
    %71 = vector.broadcast %cst_31 : f32 to vector<256x128xf32>
    %72 = arith.select %70, %68, %71 : vector<256x128xi1>, vector<256x128xf32>
    %73 = arith.truncf %72 : vector<256x128xf32> to vector<256x128xbf16>
    %c0_32 = arith.constant 0 : index
    %c5 = arith.constant 5 : index
    %c0_33 = arith.constant 0 : index
    %c0_34 = arith.constant 0 : index
    %74 = vector.load %arg3[%c0_32, %c5, %c0_33, %c0_34] : memref<1x9x128x128xbf16, #tpu.memory_space<vmem>>, vector<1x1x128x128xbf16>
    %75 = vector.shape_cast %74 : vector<1x1x128x128xbf16> to vector<128x128xbf16>
    %cst_35 = arith.constant dense<0.000000e+00> : vector<256x128xf32>
    %76 = tpu.matmul %73, %75, %cst_35 {dimension_numbers = #tpu.dot_dimension_numbers<[1], [0], [0], [1], [0, 0, 1, 1], [], []>} : vector<256x128xbf16>, vector<128x128xbf16>, vector<256x128xf32> -> vector<256x128xf32>
    %77 = arith.addf %67, %76 : vector<256x128xf32>
    %78 = vector.extract_strided_slice %3 {offsets = [39, 0], sizes = [256, 128], strides = [1, 1]} : vector<304x128xf32> to vector<256x128xf32>
    %cst_36 = arith.constant 0.000000e+00 : f32
    %79 = vector.shape_cast %22 : vector<256x1xi1> to vector<256x1xi1>
    %80 = vector.broadcast %79 : vector<256x1xi1> to vector<256x128xi1>
    %81 = vector.broadcast %cst_36 : f32 to vector<256x128xf32>
    %82 = arith.select %80, %78, %81 : vector<256x128xi1>, vector<256x128xf32>
    %83 = arith.truncf %82 : vector<256x128xf32> to vector<256x128xbf16>
    %c0_37 = arith.constant 0 : index
    %c6 = arith.constant 6 : index
    %c0_38 = arith.constant 0 : index
    %c0_39 = arith.constant 0 : index
    %84 = vector.load %arg3[%c0_37, %c6, %c0_38, %c0_39] : memref<1x9x128x128xbf16, #tpu.memory_space<vmem>>, vector<1x1x128x128xbf16>
    %85 = vector.shape_cast %84 : vector<1x1x128x128xbf16> to vector<128x128xbf16>
    %cst_40 = arith.constant dense<0.000000e+00> : vector<256x128xf32>
    %86 = tpu.matmul %83, %85, %cst_40 {dimension_numbers = #tpu.dot_dimension_numbers<[1], [0], [0], [1], [0, 0, 1, 1], [], []>} : vector<256x128xbf16>, vector<128x128xbf16>, vector<256x128xf32> -> vector<256x128xf32>
    %87 = arith.addf %77, %86 : vector<256x128xf32>
    %88 = vector.extract_strided_slice %3 {offsets = [40, 0], sizes = [256, 128], strides = [1, 1]} : vector<304x128xf32> to vector<256x128xf32>
    %89 = arith.truncf %88 : vector<256x128xf32> to vector<256x128xbf16>
    %c0_41 = arith.constant 0 : index
    %c7 = arith.constant 7 : index
    %c0_42 = arith.constant 0 : index
    %c0_43 = arith.constant 0 : index
    %90 = vector.load %arg3[%c0_41, %c7, %c0_42, %c0_43] : memref<1x9x128x128xbf16, #tpu.memory_space<vmem>>, vector<1x1x128x128xbf16>
    %91 = vector.shape_cast %90 : vector<1x1x128x128xbf16> to vector<128x128xbf16>
    %cst_44 = arith.constant dense<0.000000e+00> : vector<256x128xf32>
    %92 = tpu.matmul %89, %91, %cst_44 {dimension_numbers = #tpu.dot_dimension_numbers<[1], [0], [0], [1], [0, 0, 1, 1], [], []>} : vector<256x128xbf16>, vector<128x128xbf16>, vector<256x128xf32> -> vector<256x128xf32>
    %93 = arith.addf %87, %92 : vector<256x128xf32>
    %94 = vector.extract_strided_slice %3 {offsets = [41, 0], sizes = [256, 128], strides = [1, 1]} : vector<304x128xf32> to vector<256x128xf32>
    %cst_45 = arith.constant 0.000000e+00 : f32
    %95 = vector.shape_cast %24 : vector<256x1xi1> to vector<256x1xi1>
    %96 = vector.broadcast %95 : vector<256x1xi1> to vector<256x128xi1>
    %97 = vector.broadcast %cst_45 : f32 to vector<256x128xf32>
    %98 = arith.select %96, %94, %97 : vector<256x128xi1>, vector<256x128xf32>
    %99 = arith.truncf %98 : vector<256x128xf32> to vector<256x128xbf16>
    %c0_46 = arith.constant 0 : index
    %c8 = arith.constant 8 : index
    %c0_47 = arith.constant 0 : index
    %c0_48 = arith.constant 0 : index
    %100 = vector.load %arg3[%c0_46, %c8, %c0_47, %c0_48] : memref<1x9x128x128xbf16, #tpu.memory_space<vmem>>, vector<1x1x128x128xbf16>
    %101 = vector.shape_cast %100 : vector<1x1x128x128xbf16> to vector<128x128xbf16>
    %cst_49 = arith.constant dense<0.000000e+00> : vector<256x128xf32>
    %102 = tpu.matmul %99, %101, %cst_49 {dimension_numbers = #tpu.dot_dimension_numbers<[1], [0], [0], [1], [0, 0, 1, 1], [], []>} : vector<256x128xbf16>, vector<128x128xbf16>, vector<256x128xf32> -> vector<256x128xf32>
    %103 = arith.addf %93, %102 : vector<256x128xf32>
    %c0_50 = arith.constant 0 : index
    %c0_51 = arith.constant 0 : index
    %c0_52 = arith.constant 0 : index
    %104 = vector.load %arg4[%c0_50, %c0_51, %c0_52] : memref<1x1x128xf32, #tpu.memory_space<vmem>>, vector<1x1x128xf32>
    %105 = vector.shape_cast %104 : vector<1x1x128xf32> to vector<1x128xf32>
    %106 = vector.broadcast %105 : vector<1x128xf32> to vector<256x128xf32>
    %107 = arith.addf %103, %106 : vector<256x128xf32>
    %c4_i32 = arith.constant 4 : i32
    %108 = arith.cmpi slt, %arg1, %c4_i32 : i32
    %109 = arith.extui %108 : i1 to i32
    %c0_i32_53 = arith.constant 0 : i32
    %110 = arith.cmpi ne, %109, %c0_i32_53 : i32
    scf.if %110 {
      %cst_56 = arith.constant 0.000000e+00 : f32
      %114 = vector.broadcast %cst_56 : f32 to vector<256x128xf32>
      %115 = arith.maximumf %107, %114 : vector<256x128xf32>
      %c24 = arith.constant 24 : index
      %c0_57 = arith.constant 0 : index
      %116 = vector.load %arg6[%c24, %c0_57] : memref<304x128xf32, #tpu.memory_space<vmem>>, vector<256x128xf32>
      tpu.vector_store %arg6[%c24, %c0_57], %115 {strides = array<i32>} : memref<304x128xf32, #tpu.memory_space<vmem>>, vector<256x128xf32>,
    } else {
    }
    %c4_i32_54 = arith.constant 4 : i32
    %111 = arith.cmpi eq, %arg1, %c4_i32_54 : i32
    %112 = arith.extui %111 : i1 to i32
    %c0_i32_55 = arith.constant 0 : i32
    %113 = arith.cmpi ne, %112, %c0_i32_55 : i32
    scf.if %113 {
      %114 = arith.negf %107 : vector<256x128xf32>
      %115 = math.exp %114 : vector<256x128xf32>
      %cst_56 = arith.constant 1.000000e+00 : f32
      %116 = vector.broadcast %cst_56 : f32 to vector<256x128xf32>
      %117 = arith.addf %116, %115 : vector<256x128xf32>
      %118 = arith.divf %116, %117 : vector<256x128xf32>
      %c0_57 = arith.constant 0 : index
      %c0_58 = arith.constant 0 : index
      %c0_59 = arith.constant 0 : index
      %119 = vector.load %arg5[%c0_57, %c0_58, %c0_59] : memref<1x256x128xf32, #tpu.memory_space<vmem>>, vector<1x256x128xf32>
      %120 = vector.shape_cast %119 : vector<1x256x128xf32> to vector<256x128xf32>
      %121 = vector.shape_cast %118 : vector<256x128xf32> to vector<1x256x128xf32>
      tpu.vector_store %arg5[%c0_57, %c0_58, %c0_59], %121 {strides = array<i32>} : memref<1x256x128xf32, #tpu.memory_space<vmem>>, vector<1x256x128xf32>,
    } else {
    }
    return
  }
  func.func @transform_0(%arg0: i32, %arg1: i32) -> (i32, i32, i32) {
    %c0_i32 = arith.constant 0 : i32
    %c0_i32_0 = arith.constant 0 : i32
    %c0_i32_1 = arith.constant 0 : i32
    return %arg0, %c0_i32, %c0_i32_0 : i32, i32, i32
  }
  func.func @transform_1(%arg0: i32, %arg1: i32) -> (i32, i32, i32, i32) {
    %c0_i32 = arith.constant 0 : i32
    %c0_i32_0 = arith.constant 0 : i32
    %c0_i32_1 = arith.constant 0 : i32
    %c0_i32_2 = arith.constant 0 : i32
    return %arg1, %c0_i32, %c0_i32_0, %c0_i32_1 : i32, i32, i32, i32
  }
  func.func @transform_2(%arg0: i32, %arg1: i32) -> (i32, i32, i32) {
    %c0_i32 = arith.constant 0 : i32
    %c0_i32_0 = arith.constant 0 : i32
    %c0_i32_1 = arith.constant 0 : i32
    return %arg1, %c0_i32, %c0_i32_0 : i32, i32, i32
  }
  func.func @transform_3(%arg0: i32, %arg1: i32) -> (i32, i32, i32) {
    %c0_i32 = arith.constant 0 : i32
    %c0_i32_0 = arith.constant 0 : i32
    %c0_i32_1 = arith.constant 0 : i32
    return %arg0, %c0_i32, %c0_i32_0 : i32, i32, i32
  }
}

</mosaic_0001>

<llo_original>
// kernel: classification_model_forward.1
$region0: #{classification_model_forward.1}
  #allocation0 [shape = 'u32[]', space=smem, size = 0x4, offset = 0x4, fixed_abs, tag = 'smem constant byte address 0x4 - core index']
  #allocation1 [shape = 'u32[72,128]{1,0:T(1,128)}', space=vmem, size = 0x9000, scoped, tag = 'internal scratch']
  #allocation2 [shape = 'f32[304,128]{1,0:T(8,128)}', space=vmem, size = 0x26000, scoped, tag = 'scratch operand']
  %s0 = inlined_call_operand.vmem [shape: f32[2,256,128], index: 0, kind: input, shape index: {}]
  %s1 = inlined_call_operand.hbm [shape: bf16[5,9,128,128], index: 1, kind: input, shape index: {}]
  %s2 = inlined_call_operand.hbm [shape: f32[5,1,128], index: 2, kind: input, shape index: {}]
  %s3 = inlined_call_operand.vmem [shape: f32[2,256,128], index: 3, kind: output, shape index: {}]
  %s4 = sld [smem:[#allocation0]]
  $region65: #{classification_model_forward.1} parent=0
    _
  %s6 = ssub.s32 1, %s4
  %s7 = scalar_select 0, %s6, %s4
  $region1: #{classification_model_forward.1} parent=0
    #allocation3 [shape = 'u8[589824]{0}', space=vmem, size = 0x90000, scoped, tag = 'input window, operand 1']
    #allocation4 [shape = 's32[2]{0}', space=sflag, size = 0x8, scoped, tag = 'scoped memory for classification_model_forward.1']
    #allocation5 [shape = 'u8[1024]{0}', space=vmem, size = 0x400, scoped, tag = 'input window, operand 2']
    #allocation6 [shape = 's32[2]{0}', space=sflag, size = 0x8, scoped, tag = 'scoped memory for classification_model_forward.1']
    %8 = vsyncpa [#allocation4], 0
    %s9 = scalar_lea.sflag [#allocation4], 1
    %10 = vsyncpa %s9, 0
    %11 = vsyncpa [#allocation6], 0
    %s12 = scalar_lea.sflag [#allocation6], 1
    %13 = vsyncpa %s12, 0
    loop: start=0, step=1, limit=12
    $region2: #{classification_model_forward.1} parent=1 // loop_pre_header
      _
    $region3: #{classification_model_forward.1} parent=1 // loop_header
      %s15 = sphi 0, %s19
      %p16 = scmp.ge.s32.totalorder %s15, 12
      %s22 = sphi 0, %s34
      %s23 = sphi 0, %s30
      %s24 = sphi 0, %s22
      %s25 = sphi 0, %s23
      %s26 = sphi 0, %s24
      %s27 = sphi 0, %s25
      %s37 = sphi 0, %s39
      %s40 = sphi 0, %s37
      %s41 = sphi 0, %s40
      %s57 = sphi 0, %s41
      %s63 = sphi 0, %s65
      %s66 = sphi 0, %s63
      %s67 = sphi 0, %s66
      %s83 = sphi 0, %s67
      %s89 = sphi 0, %s91
      %s92 = sphi 0, %s89
      %s93 = sphi 0, %s92
      %s109 = sphi 0, %s93
      %s115 = sphi 0, %s117
      %s118 = sphi 0, %s115
      %s119 = sphi 0, %s118
      %s135 = sphi 0, %s119
    $region4: #{classification_model_forward.1} parent=1 // loop_header_branch
      %18 = sbr.rel (%p16) target = $region8
    $region5: #{classification_model_forward.1} parent=1 // loop_body
      %s20 = ssub.s32 %s15, 1
      %s21 = ssub.s32 %s15, 2
      %s28 = sadd.s32 1, %s23
      %p29 = scmp.ge.s32.totalorder %s28, 5
      %s30 = scalar_select %p29, 0, %s28
      %s31 = sadd.s32 1, %s22
      %s32 = scalar_select %p29, %s31, %s22
      %p33 = scmp.ge.s32.totalorder %s32, 2
      %s34 = scalar_select %p33, 0, %s32
      %s35 = ssub.s32 %s22, %s34
      %p36 = scmp.eq.s32.totalorder %s35, 0
      %s38 = sadd.s32 %s37, 1
      %s39 = scalar_select %p36, %s37, %s38
      %p42 = pneg %p36
      %p43 = scmp.eq.s32.totalorder %s15, 9
      %p44 = por %p42, %p43
      %p45 = scmp.ne.s32.totalorder %s37, %s40
      %p46 = scmp.eq.s32.totalorder %s15, 0
      %p47 = por %p45, %p46
      %p48 = scmp.ne.s32.totalorder %s37, %s40
      %p49 = scmp.eq.s32.totalorder %s20, 9
      %p50 = por %p48, %p49
      %p51 = scmp.ne.s32.totalorder %s40, %s41
      %p52 = scmp.eq.s32.totalorder %s20, 0
      %p53 = por %p51, %p52
      %p54 = scmp.ne.s32.totalorder %s40, %s41
      %p55 = scmp.eq.s32.totalorder %s21, 9
      %p56 = por %p54, %p55
      %p58 = scmp.ne.s32.totalorder %s41, %s57
      %p59 = scmp.eq.s32.totalorder %s21, 0
      %p60 = por %p58, %p59
      %s61 = ssub.s32 %s23, %s30
      %p62 = scmp.eq.s32.totalorder %s61, 0
      %s64 = sadd.s32 %s63, 1
      %s65 = scalar_select %p62, %s63, %s64
      %p68 = pneg %p62
      %p69 = scmp.eq.s32.totalorder %s15, 9
      %p70 = por %p68, %p69
      %p71 = scmp.ne.s32.totalorder %s63, %s66
      %p72 = scmp.eq.s32.totalorder %s15, 0
      %p73 = por %p71, %p72
      %p74 = scmp.ne.s32.totalorder %s63, %s66
      %p75 = scmp.eq.s32.totalorder %s20, 9
      %p76 = por %p74, %p75
      %p77 = scmp.ne.s32.totalorder %s66, %s67
      %p78 = scmp.eq.s32.totalorder %s20, 0
      %p79 = por %p77, %p78
      %p80 = scmp.ne.s32.totalorder %s66, %s67
      %p81 = scmp.eq.s32.totalorder %s21, 9
      %p82 = por %p80, %p81
      %p84 = scmp.ne.s32.totalorder %s67, %s83
      %p85 = scmp.eq.s32.totalorder %s21, 0
      %p86 = por %p84, %p85
      %s87 = ssub.s32 %s23, %s30
      %p88 = scmp.eq.s32.totalorder %s87, 0
      %s90 = sadd.s32 %s89, 1
      %s91 = scalar_select %p88, %s89, %s90
      %p94 = pneg %p88
      %p95 = scmp.eq.s32.totalorder %s15, 9
      %p96 = por %p94, %p95
      %p97 = scmp.ne.s32.totalorder %s89, %s92
      %p98 = scmp.eq.s32.totalorder %s15, 0
      %p99 = por %p97, %p98
      %p100 = scmp.ne.s32.totalorder %s89, %s92
      %p101 = scmp.eq.s32.totalorder %s20, 9
      %p102 = por %p100, %p101
      %p103 = scmp.ne.s32.totalorder %s92, %s93
      %p104 = scmp.eq.s32.totalorder %s20, 0
      %p105 = por %p103, %p104
      %p106 = scmp.ne.s32.totalorder %s92, %s93
      %p107 = scmp.eq.s32.totalorder %s21, 9
      %p108 = por %p106, %p107
      %p110 = scmp.ne.s32.totalorder %s93, %s109
      %p111 = scmp.eq.s32.totalorder %s21, 0
      %p112 = por %p110, %p111
      %s113 = ssub.s32 %s22, %s34
      %p114 = scmp.eq.s32.totalorder %s113, 0
      %s116 = sadd.s32 %s115, 1
      %s117 = scalar_select %p114, %s115, %s116
      %p120 = pneg %p114
      %p121 = scmp.eq.s32.totalorder %s15, 9
      %p122 = por %p120, %p121
      %p123 = scmp.ne.s32.totalorder %s115, %s118
      %p124 = scmp.eq.s32.totalorder %s15, 0
      %p125 = por %p123, %p124
      %p126 = scmp.ne.s32.totalorder %s115, %s118
      %p127 = scmp.eq.s32.totalorder %s20, 9
      %p128 = por %p126, %p127
      %p129 = scmp.ne.s32.totalorder %s118, %s119
      %p130 = scmp.eq.s32.totalorder %s20, 0
      %p131 = por %p129, %p130
      %p132 = scmp.ne.s32.totalorder %s118, %s119
      %p133 = scmp.eq.s32.totalorder %s21, 9
      %p134 = por %p132, %p133
      %p136 = scmp.ne.s32.totalorder %s119, %s135
      %p137 = scmp.eq.s32.totalorder %s21, 0
      %p138 = por %p136, %p137
      %p139 = scmp.le.s32.totalorder 1, %s15
      %p140 = scmp.lt.s32.totalorder %s15, 11
      %p141 = pnand %p139, %p140
      %p142 = pneg %p141
      // Predicated region
      $region9: #{classification_model_forward.1} parent=5 // pred_check
        _
      $region10: #{classification_model_forward.1} parent=5 // pred_check_branch
        %144 = sbr.rel (%p141) target = $region12
      $region11: #{classification_model_forward.1} parent=5 // pred_region
        %s145 = ssub.s32 %s15, 1
      $region12: #{classification_model_forward.1} parent=5 // pred_fallthru
        _
      %p146 = scmp.lt.s32.totalorder %s15, 10
      // Predicated region
      $region13: #{classification_model_forward.1} parent=5 // pred_check
        %p147 = pneg %p146
      $region14: #{classification_model_forward.1} parent=5 // pred_check_branch
        %149 = sbr.rel (%p147) target = $region16
      $region15: #{classification_model_forward.1} parent=5 // pred_region
        // Predicated region
        $region17: #{classification_model_forward.1} parent=15 // pred_check
          %p150 = pneg %p47
        $region18: #{classification_model_forward.1} parent=15 // pred_check_branch
          %152 = sbr.rel (%p150) target = $region20
        $region19: #{classification_model_forward.1} parent=15 // pred_region
          %p153 = scmp.lt.s32.totalorder %s22, 1
          %s154 = scalar_select %p153, %s22, 1
          %s155 = smul.addr %s154, 32
          %s156 = smul.addr %s155, 8
          %s157 = scalar_lea.vmem %s0, %s156
        $region20: #{classification_model_forward.1} parent=15 // pred_fallthru
          _
        // Predicated region
        $region21: #{classification_model_forward.1} parent=15 // pred_check
          %p158 = pneg %p73
        $region22: #{classification_model_forward.1} parent=15 // pred_check_branch
          %160 = sbr.rel (%p158) target = $region24
        $region23: #{classification_model_forward.1} parent=15 // pred_region
          %s161 = sand.u32 %s63, 1
          %s162 = scalar_lea.sflag [#allocation4], %s161
          %s163 = sand.u32 %s63, 1
          %s164 = smul.addr %s163, 576
          %s165 = scalar_lea.vmem [#allocation3], %s164
          %167 = vsyncadd %s162, 0
          %s168 = smul.addr %s23, 144
          %s169 = smul.addr %s168, 4
          %s170 = scalar_lea.hbm %s1, %s169
          %s171 = sshll.u32 %s170, 4
          %s172 = int_to_ptr.hbm [resolvable:$true] %s171
          %s173 = sshll.u32 %s165, 4
          %s174 = int_to_ptr.vmem [resolvable:$true] %s173
          %179 = dma.hbm_to_vmem [thread:$0]  %s172, 9216, %s174, %s162, 64, 64, 4
        $region24: #{classification_model_forward.1} parent=15 // pred_fallthru
          _
        // Predicated region
        $region25: #{classification_model_forward.1} parent=15 // pred_check
          %p180 = pneg %p99
        $region26: #{classification_model_forward.1} parent=15 // pred_check_branch
          %182 = sbr.rel (%p180) target = $region28
        $region27: #{classification_model_forward.1} parent=15 // pred_region
          %s183 = sand.u32 %s89, 1
          %s184 = scalar_lea.sflag [#allocation6], %s183
          %s185 = sand.u32 %s89, 1
          %s186 = scalar_lea.vmem [#allocation5], %s185
          %188 = vsyncadd %s184, 0
          %s189 = scalar_lea.hbm %s2, %s23
          %s191 = sshll.u32 %s189, 4
          %s192 = int_to_ptr.hbm [resolvable:$true] %s191
          %s193 = sshll.u32 %s186, 4
          %s194 = int_to_ptr.vmem [resolvable:$true] %s193
          %196 = dma.hbm_to_vmem [thread:$0]  %s192, 16, %s194, %s184
        $region28: #{classification_model_forward.1} parent=15 // pred_fallthru
          _
      $region16: #{classification_model_forward.1} parent=5 // pred_fallthru
        _
      %p197 = scmp.le.s32.totalorder 1, %s15
      %p198 = scmp.lt.s32.totalorder %s15, 11
      %p199 = pnand %p197, %p198
      %p200 = pneg %p199
      // Predicated region
      $region29: #{classification_model_forward.1} parent=5 // pred_check
        _
      $region30: #{classification_model_forward.1} parent=5 // pred_check_branch
        %202 = sbr.rel (%p199) target = $region32
      $region31: #{classification_model_forward.1} parent=5 // pred_region
        %s203 = ssub.s32 %s15, 1
        %s204 = sand.u32 %s66, 1
        %s205 = scalar_lea.sflag [#allocation4], %s204
        %s206 = sand.u32 %s66, 1
        %s207 = smul.addr %s206, 576
        %s208 = scalar_lea.vmem [#allocation3], %s207
        // Predicated region
        $region33: #{classification_model_forward.1} parent=31 // pred_check
          %p209 = pneg %p79
        $region34: #{classification_model_forward.1} parent=31 // pred_check_branch
          %211 = sbr.rel (%p209) target = $region36
        $region35: #{classification_model_forward.1} parent=31 // pred_region
          %213 = dma.done %s205, 9216
        $region36: #{classification_model_forward.1} parent=31 // pred_fallthru
          _
        %s214 = sand.u32 %s92, 1
        %s215 = scalar_lea.sflag [#allocation6], %s214
        %s216 = sand.u32 %s92, 1
        %s217 = scalar_lea.vmem [#allocation5], %s216
        // Predicated region
        $region37: #{classification_model_forward.1} parent=31 // pred_check
          %p218 = pneg %p105
        $region38: #{classification_model_forward.1} parent=31 // pred_check_branch
          %220 = sbr.rel (%p218) target = $region40
        $region39: #{classification_model_forward.1} parent=31 // pred_region
          %222 = dma.done %s215, 16
        $region40: #{classification_model_forward.1} parent=31 // pred_fallthru
          _
        %p223 = scmp.lt.s32.totalorder %s24, 1
        %s224 = scalar_select %p223, %s24, 1
        %s225 = smul.addr %s224, 32
        %s226 = smul.addr %s225, 8
        %s227 = scalar_lea.vmem %s0, %s226
        %p228 = pneg %p53
        %p229 = pneg %p50
        %s230 = sand.u32 %s66, 1
        %s231 = scalar_lea.sflag [#allocation4], %s230
        %s232 = sand.u32 %s66, 1
        %s233 = smul.addr %s232, 576
        %s234 = scalar_lea.vmem [#allocation3], %s233
        %p235 = pneg %p79
        %p236 = pneg %p76
        %s237 = sand.u32 %s92, 1
        %s238 = scalar_lea.sflag [#allocation6], %s237
        %s239 = sand.u32 %s92, 1
        %s240 = scalar_lea.vmem [#allocation5], %s239
        %p241 = pneg %p105
        %p242 = pneg %p102
        %p243 = pneg %p131
        %p244 = pneg %p128
        %p245 = scmp.lt.s32.totalorder %s24, 1
        %s246 = scalar_select %p245, %s24, 1
        %s247 = smul.addr %s246, 32
        %s248 = smul.addr %s247, 8
        %s249 = scalar_lea.vmem %s3, %s248
        %p250 = scmp.lt.s32.totalorder %s24, 1
        %s251 = scalar_select %p250, %s24, 1
        %s252 = smul.addr %s251, 32
        %s253 = smul.addr %s252, 8
        %s254 = scalar_lea.vmem %s0, %s253
        %p255 = scmp.lt.s32.totalorder %s24, 1
        %s256 = scalar_select %p255, %s24, 1
        %s257 = smul.addr %s256, 32
        %s258 = smul.addr %s257, 8
        %s259 = scalar_lea.vmem %s3, %s258
        %p260 = scmp.eq.s32.totalorder %s25, 0
        // Predicated region
        $region41: #{classification_model_forward.1} parent=31 // pred_check
          %p261 = pneg %p260
        $region42: #{classification_model_forward.1} parent=31 // pred_check_branch
          %263 = sbr.rel (%p261) target = $region44
        $region43: #{classification_model_forward.1} parent=31 // pred_region
          %264 = vst [vmem:[#allocation2] sm:$0xff] 0.0
          %265 = vst [vmem:[#allocation2 + $0x8] sm:$0xff] 0.0
          %266 = vst [vmem:[#allocation2 + $0x10] sm:$0xff] 0.0
          %v267 = vld [vmem:[%s254] sm:$0xff]
          %v268 = vld [vmem:[%s254 + $0x8] sm:$0xff]
          %v269 = vld [vmem:[%s254 + $0x10] sm:$0xff]
          %v270 = vld [vmem:[%s254 + $0x18] sm:$0xff]
          %v271 = vld [vmem:[%s254 + $0x20] sm:$0xff]
          %v272 = vld [vmem:[%s254 + $0x28] sm:$0xff]
          %v273 = vld [vmem:[%s254 + $0x30] sm:$0xff]
          %v274 = vld [vmem:[%s254 + $0x38] sm:$0xff]
          %v275 = vld [vmem:[%s254 + $0x40] sm:$0xff]
          %v276 = vld [vmem:[%s254 + $0x48] sm:$0xff]
          %v277 = vld [vmem:[%s254 + $0x50] sm:$0xff]
          %v278 = vld [vmem:[%s254 + $0x58] sm:$0xff]
          %v279 = vld [vmem:[%s254 + $0x60] sm:$0xff]
          %v280 = vld [vmem:[%s254 + $0x68] sm:$0xff]
          %v281 = vld [vmem:[%s254 + $0x70] sm:$0xff]
          %v282 = vld [vmem:[%s254 + $0x78] sm:$0xff]
          %v283 = vld [vmem:[%s254 + $0x80] sm:$0xff]
          %v284 = vld [vmem:[%s254 + $0x88] sm:$0xff]
          %v285 = vld [vmem:[%s254 + $0x90] sm:$0xff]
          %v286 = vld [vmem:[%s254 + $0x98] sm:$0xff]
          %v287 = vld [vmem:[%s254 + $0xa0] sm:$0xff]
          %v288 = vld [vmem:[%s254 + $0xa8] sm:$0xff]
          %v289 = vld [vmem:[%s254 + $0xb0] sm:$0xff]
          %v290 = vld [vmem:[%s254 + $0xb8] sm:$0xff]
          %v291 = vld [vmem:[%s254 + $0xc0] sm:$0xff]
          %v292 = vld [vmem:[%s254 + $0xc8] sm:$0xff]
          %v293 = vld [vmem:[%s254 + $0xd0] sm:$0xff]
          %v294 = vld [vmem:[%s254 + $0xd8] sm:$0xff]
          %v295 = vld [vmem:[%s254 + $0xe0] sm:$0xff]
          %v296 = vld [vmem:[%s254 + $0xe8] sm:$0xff]
          %v297 = vld [vmem:[%s254 + $0xf0] sm:$0xff]
          %v298 = vld [vmem:[%s254 + $0xf8] sm:$0xff]
          %299 = vst [vmem:[#allocation2 + $0x18] sm:$0xff] %v267
          %300 = vst [vmem:[#allocation2 + $0x20] sm:$0xff] %v268
          %301 = vst [vmem:[#allocation2 + $0x28] sm:$0xff] %v269
          %302 = vst [vmem:[#allocation2 + $0x30] sm:$0xff] %v270
          %303 = vst [vmem:[#allocation2 + $0x38] sm:$0xff] %v271
          %304 = vst [vmem:[#allocation2 + $0x40] sm:$0xff] %v272
          %305 = vst [vmem:[#allocation2 + $0x48] sm:$0xff] %v273
          %306 = vst [vmem:[#allocation2 + $0x50] sm:$0xff] %v274
          %307 = vst [vmem:[#allocation2 + $0x58] sm:$0xff] %v275
          %308 = vst [vmem:[#allocation2 + $0x60] sm:$0xff] %v276
          %309 = vst [vmem:[#allocation2 + $0x68] sm:$0xff] %v277
          %310 = vst [vmem:[#allocation2 + $0x70] sm:$0xff] %v278
          %311 = vst [vmem:[#allocation2 + $0x78] sm:$0xff] %v279
          %312 = vst [vmem:[#allocation2 + $0x80] sm:$0xff] %v280
          %313 = vst [vmem:[#allocation2 + $0x88] sm:$0xff] %v281
          %314 = vst [vmem:[#allocation2 + $0x90] sm:$0xff] %v282
          %315 = vst [vmem:[#allocation2 + $0x98] sm:$0xff] %v283
          %316 = vst [vmem:[#allocation2 + $0xa0] sm:$0xff] %v284
          %317 = vst [vmem:[#allocation2 + $0xa8] sm:$0xff] %v285
          %318 = vst [vmem:[#allocation2 + $0xb0] sm:$0xff] %v286
          %319 = vst [vmem:[#allocation2 + $0xb8] sm:$0xff] %v287
          %320 = vst [vmem:[#allocation2 + $0xc0] sm:$0xff] %v288
          %321 = vst [vmem:[#allocation2 + $0xc8] sm:$0xff] %v289
          %322 = vst [vmem:[#allocation2 + $0xd0] sm:$0xff] %v290
          %323 = vst [vmem:[#allocation2 + $0xd8] sm:$0xff] %v291
          %324 = vst [vmem:[#allocation2 + $0xe0] sm:$0xff] %v292
          %325 = vst [vmem:[#allocation2 + $0xe8] sm:$0xff] %v293
          %326 = vst [vmem:[#allocation2 + $0xf0] sm:$0xff] %v294
          %327 = vst [vmem:[#allocation2 + $0xf8] sm:$0xff] %v295
          %328 = vst [vmem:[#allocation2 + $0x100] sm:$0xff] %v296
          %329 = vst [vmem:[#allocation2 + $0x108] sm:$0xff] %v297
          %330 = vst [vmem:[#allocation2 + $0x110] sm:$0xff] %v298
          %331 = vst [vmem:[#allocation2 + $0x118] sm:$0xff] 0.0
          %332 = vst [vmem:[#allocation2 + $0x120] sm:$0xff] 0.0
          %333 = vst [vmem:[#allocation2 + $0x128] sm:$0xff] 0.0
        $region44: #{classification_model_forward.1} parent=31 // pred_fallthru
          _
        %v334 = vld [vmem:[#allocation2] sm:$0xff]
        %v335 = vld [vmem:[#allocation2 + $0x8] sm:$0xff]
        %v336 = vld [vmem:[#allocation2 + $0x10] sm:$0xff]
        %v337 = vld [vmem:[#allocation2 + $0x18] sm:$0xff]
        %v338 = vld [vmem:[#allocation2 + $0x20] sm:$0xff]
        %v339 = vld [vmem:[#allocation2 + $0x28] sm:$0xff]
        %v340 = vld [vmem:[#allocation2 + $0x30] sm:$0xff]
        %v341 = vld [vmem:[#allocation2 + $0x38] sm:$0xff]
        %v342 = vld [vmem:[#allocation2 + $0x40] sm:$0xff]
        %v343 = vld [vmem:[#allocation2 + $0x48] sm:$0xff]
        %v344 = vld [vmem:[#allocation2 + $0x50] sm:$0xff]
        %v345 = vld [vmem:[#allocation2 + $0x58] sm:$0xff]
        %v346 = vld [vmem:[#allocation2 + $0x60] sm:$0xff]
        %v347 = vld [vmem:[#allocation2 + $0x68] sm:$0xff]
        %v348 = vld [vmem:[#allocation2 + $0x70] sm:$0xff]
        %v349 = vld [vmem:[#allocation2 + $0x78] sm:$0xff]
        %v350 = vld [vmem:[#allocation2 + $0x80] sm:$0xff]
        %v351 = vld [vmem:[#allocation2 + $0x88] sm:$0xff]
        %v352 = vld [vmem:[#allocation2 + $0x90] sm:$0xff]
        %v353 = vld [vmem:[#allocation2 + $0x98] sm:$0xff]
        %v354 = vld [vmem:[#allocation2 + $0xa0] sm:$0xff]
        %v355 = vld [vmem:[#allocation2 + $0xa8] sm:$0xff]
        %v356 = vld [vmem:[#allocation2 + $0xb0] sm:$0xff]
        %v357 = vld [vmem:[#allocation2 + $0xb8] sm:$0xff]
        %v358 = vld [vmem:[#allocation2 + $0xc0] sm:$0xff]
        %v359 = vld [vmem:[#allocation2 + $0xc8] sm:$0xff]
        %v360 = vld [vmem:[#allocation2 + $0xd0] sm:$0xff]
        %v361 = vld [vmem:[#allocation2 + $0xd8] sm:$0xff]
        %v362 = vld [vmem:[#allocation2 + $0xe0] sm:$0xff]
        %v363 = vld [vmem:[#allocation2 + $0xe8] sm:$0xff]
        %v364 = vld [vmem:[#allocation2 + $0xf0] sm:$0xff]
        %v365 = vld [vmem:[#allocation2 + $0xf8] sm:$0xff]
        %v366 = vld [vmem:[#allocation2 + $0x100] sm:$0xff]
        %v367 = vld [vmem:[#allocation2 + $0x108] sm:$0xff]
        %v368 = vld [vmem:[#allocation2 + $0x110] sm:$0xff]
        %v369 = vld [vmem:[#allocation2 + $0x118] sm:$0xff]
        %v370 = vld [vmem:[#allocation2 + $0x120] sm:$0xff]
        %v371 = vld [vmem:[#allocation2 + $0x128] sm:$0xff]
        %v372 = vlaneseq
        %v373 = vshrl.u32 %v372, 7
        %v374 = vadd.s32 %v373, 8
        %v375 = vadd.s32 %v373, 16
        %v376 = vadd.s32 %v373, 24
        %v377 = vadd.s32 %v373, 32
        %v378 = vadd.s32 %v373, 40
        %v379 = vadd.s32 %v373, 48
        %v380 = vadd.s32 %v373, 56
        %v381 = vadd.s32 %v373, 64
        %v382 = vadd.s32 %v373, 72
        %v383 = vadd.s32 %v373, 80
        %v384 = vadd.s32 %v373, 88
        %v385 = vadd.s32 %v373, 96
        %v386 = vadd.s32 %v373, 104
        %v387 = vadd.s32 %v373, 112
        %v388 = vadd.s32 %v373, 120
        %v389 = vadd.s32 %v373, 128
        %v390 = vadd.s32 %v373, 136
        %v391 = vadd.s32 %v373, 144
        %v392 = vadd.s32 %v373, 152
        %v393 = vadd.s32 %v373, 160
        %v394 = vadd.s32 %v373, 168
        %v395 = vadd.s32 %v373, 176
        %v396 = vadd.s32 %v373, 184
        %v397 = vadd.s32 %v373, 192
        %v398 = vadd.s32 %v373, 200
        %v399 = vadd.s32 %v373, 208
        %v400 = vadd.s32 %v373, 216
        %v401 = vadd.s32 %v373, 224
        %v402 = vadd.s32 %v373, 232
        %v403 = vadd.s32 %v373, 240
        %v404 = vadd.s32 %v373, 248
        %vm405 = vcmp.lt.s32.totalorder %v373, 0
        %v406 = vsub.s32 0, %v373
        %v407 = vsel %vm405, %v406, %v373
        %v408 = vshrl.u32 %v407, 4
        %v409 = vand.u32 %v407, 15
        %v410 = vsub.s32 0, %v409
        %v411 = vsel %vm405, %v410, %v409
        %vm412 = vcmp.lt.s32.totalorder %v374, 0
        %v413 = vsub.s32 0, %v374
        %v414 = vsel %vm412, %v413, %v374
        %v415 = vshrl.u32 %v414, 4
        %v416 = vand.u32 %v414, 15
        %v417 = vsub.s32 0, %v416
        %v418 = vsel %vm412, %v417, %v416
        %vm419 = vcmp.lt.s32.totalorder %v375, 0
        %v420 = vsub.s32 0, %v375
        %v421 = vsel %vm419, %v420, %v375
        %v422 = vshrl.u32 %v421, 4
        %v423 = vand.u32 %v421, 15
        %v424 = vsub.s32 0, %v423
        %v425 = vsel %vm419, %v424, %v423
        %vm426 = vcmp.lt.s32.totalorder %v376, 0
        %v427 = vsub.s32 0, %v376
        %v428 = vsel %vm426, %v427, %v376
        %v429 = vshrl.u32 %v428, 4
        %v430 = vand.u32 %v428, 15
        %v431 = vsub.s32 0, %v430
        %v432 = vsel %vm426, %v431, %v430
        %vm433 = vcmp.lt.s32.totalorder %v377, 0
        %v434 = vsub.s32 0, %v377
        %v435 = vsel %vm433, %v434, %v377
        %v436 = vshrl.u32 %v435, 4
        %v437 = vand.u32 %v435, 15
        %v438 = vsub.s32 0, %v437
        %v439 = vsel %vm433, %v438, %v437
        %vm440 = vcmp.lt.s32.totalorder %v378, 0
        %v441 = vsub.s32 0, %v378
        %v442 = vsel %vm440, %v441, %v378
        %v443 = vshrl.u32 %v442, 4
        %v444 = vand.u32 %v442, 15
        %v445 = vsub.s32 0, %v444
        %v446 = vsel %vm440, %v445, %v444
        %vm447 = vcmp.lt.s32.totalorder %v379, 0
        %v448 = vsub.s32 0, %v379
        %v449 = vsel %vm447, %v448, %v379
        %v450 = vshrl.u32 %v449, 4
        %v451 = vand.u32 %v449, 15
        %v452 = vsub.s32 0, %v451
        %v453 = vsel %vm447, %v452, %v451
        %vm454 = vcmp.lt.s32.totalorder %v380, 0
        %v455 = vsub.s32 0, %v380
        %v456 = vsel %vm454, %v455, %v380
        %v457 = vshrl.u32 %v456, 4
        %v458 = vand.u32 %v456, 15
        %v459 = vsub.s32 0, %v458
        %v460 = vsel %vm454, %v459, %v458
        %vm461 = vcmp.lt.s32.totalorder %v381, 0
        %v462 = vsub.s32 0, %v381
        %v463 = vsel %vm461, %v462, %v381
        %v464 = vshrl.u32 %v463, 4
        %v465 = vand.u32 %v463, 15
        %v466 = vsub.s32 0, %v465
        %v467 = vsel %vm461, %v466, %v465
        %vm468 = vcmp.lt.s32.totalorder %v382, 0
        %v469 = vsub.s32 0, %v382
        %v470 = vsel %vm468, %v469, %v382
        %v471 = vshrl.u32 %v470, 4
        %v472 = vand.u32 %v470, 15
        %v473 = vsub.s32 0, %v472
        %v474 = vsel %vm468, %v473, %v472
        %vm475 = vcmp.lt.s32.totalorder %v383, 0
        %v476 = vsub.s32 0, %v383
        %v477 = vsel %vm475, %v476, %v383
        %v478 = vshrl.u32 %v477, 4
        %v479 = vand.u32 %v477, 15
        %v480 = vsub.s32 0, %v479
        %v481 = vsel %vm475, %v480, %v479
        %vm482 = vcmp.lt.s32.totalorder %v384, 0
        %v483 = vsub.s32 0, %v384
        %v484 = vsel %vm482, %v483, %v384
        %v485 = vshrl.u32 %v484, 4
        %v486 = vand.u32 %v484, 15
        %v487 = vsub.s32 0, %v486
        %v488 = vsel %vm482, %v487, %v486
        %vm489 = vcmp.lt.s32.totalorder %v385, 0
        %v490 = vsub.s32 0, %v385
        %v491 = vsel %vm489, %v490, %v385
        %v492 = vshrl.u32 %v491, 4
        %v493 = vand.u32 %v491, 15
        %v494 = vsub.s32 0, %v493
        %v495 = vsel %vm489, %v494, %v493
        %vm496 = vcmp.lt.s32.totalorder %v386, 0
        %v497 = vsub.s32 0, %v386
        %v498 = vsel %vm496, %v497, %v386
        %v499 = vshrl.u32 %v498, 4
        %v500 = vand.u32 %v498, 15
        %v501 = vsub.s32 0, %v500
        %v502 = vsel %vm496, %v501, %v500
        %vm503 = vcmp.lt.s32.totalorder %v387, 0
        %v504 = vsub.s32 0, %v387
        %v505 = vsel %vm503, %v504, %v387
        %v506 = vshrl.u32 %v505, 4
        %v507 = vand.u32 %v505, 15
        %v508 = vsub.s32 0, %v507
        %v509 = vsel %vm503, %v508, %v507
        %vm510 = vcmp.lt.s32.totalorder %v388, 0
        %v511 = vsub.s32 0, %v388
        %v512 = vsel %vm510, %v511, %v388
        %v513 = vshrl.u32 %v512, 4
        %v514 = vand.u32 %v512, 15
        %v515 = vsub.s32 0, %v514
        %v516 = vsel %vm510, %v515, %v514
        %vm517 = vcmp.lt.s32.totalorder %v389, 0
        %v518 = vsub.s32 0, %v389
        %v519 = vsel %vm517, %v518, %v389
        %v520 = vshrl.u32 %v519, 4
        %v521 = vand.u32 %v519, 15
        %v522 = vsub.s32 0, %v521
        %v523 = vsel %vm517, %v522, %v521
        %vm524 = vcmp.lt.s32.totalorder %v390, 0
        %v525 = vsub.s32 0, %v390
        %v526 = vsel %vm524, %v525, %v390
        %v527 = vshrl.u32 %v526, 4
        %v528 = vand.u32 %v526, 15
        %v529 = vsub.s32 0, %v528
        %v530 = vsel %vm524, %v529, %v528
        %vm531 = vcmp.lt.s32.totalorder %v391, 0
        %v532 = vsub.s32 0, %v391
        %v533 = vsel %vm531, %v532, %v391
        %v534 = vshrl.u32 %v533, 4
        %v535 = vand.u32 %v533, 15
        %v536 = vsub.s32 0, %v535
        %v537 = vsel %vm531, %v536, %v535
        %vm538 = vcmp.lt.s32.totalorder %v392, 0
        %v539 = vsub.s32 0, %v392
        %v540 = vsel %vm538, %v539, %v392
        %v541 = vshrl.u32 %v540, 4
        %v542 = vand.u32 %v540, 15
        %v543 = vsub.s32 0, %v542
        %v544 = vsel %vm538, %v543, %v542
        %vm545 = vcmp.lt.s32.totalorder %v393, 0
        %v546 = vsub.s32 0, %v393
        %v547 = vsel %vm545, %v546, %v393
        %v548 = vshrl.u32 %v547, 4
        %v549 = vand.u32 %v547, 15
        %v550 = vsub.s32 0, %v549
        %v551 = vsel %vm545, %v550, %v549
        %vm552 = vcmp.lt.s32.totalorder %v394, 0
        %v553 = vsub.s32 0, %v394
        %v554 = vsel %vm552, %v553, %v394
        %v555 = vshrl.u32 %v554, 4
        %v556 = vand.u32 %v554, 15
        %v557 = vsub.s32 0, %v556
        %v558 = vsel %vm552, %v557, %v556
        %vm559 = vcmp.lt.s32.totalorder %v395, 0
        %v560 = vsub.s32 0, %v395
        %v561 = vsel %vm559, %v560, %v395
        %v562 = vshrl.u32 %v561, 4
        %v563 = vand.u32 %v561, 15
        %v564 = vsub.s32 0, %v563
        %v565 = vsel %vm559, %v564, %v563
        %vm566 = vcmp.lt.s32.totalorder %v396, 0
        %v567 = vsub.s32 0, %v396
        %v568 = vsel %vm566, %v567, %v396
        %v569 = vshrl.u32 %v568, 4
        %v570 = vand.u32 %v568, 15
        %v571 = vsub.s32 0, %v570
        %v572 = vsel %vm566, %v571, %v570
        %vm573 = vcmp.lt.s32.totalorder %v397, 0
        %v574 = vsub.s32 0, %v397
        %v575 = vsel %vm573, %v574, %v397
        %v576 = vshrl.u32 %v575, 4
        %v577 = vand.u32 %v575, 15
        %v578 = vsub.s32 0, %v577
        %v579 = vsel %vm573, %v578, %v577
        %vm580 = vcmp.lt.s32.totalorder %v398, 0
        %v581 = vsub.s32 0, %v398
        %v582 = vsel %vm580, %v581, %v398
        %v583 = vshrl.u32 %v582, 4
        %v584 = vand.u32 %v582, 15
        %v585 = vsub.s32 0, %v584
        %v586 = vsel %vm580, %v585, %v584
        %vm587 = vcmp.lt.s32.totalorder %v399, 0
        %v588 = vsub.s32 0, %v399
        %v589 = vsel %vm587, %v588, %v399
        %v590 = vshrl.u32 %v589, 4
        %v591 = vand.u32 %v589, 15
        %v592 = vsub.s32 0, %v591
        %v593 = vsel %vm587, %v592, %v591
        %vm594 = vcmp.lt.s32.totalorder %v400, 0
        %v595 = vsub.s32 0, %v400
        %v596 = vsel %vm594, %v595, %v400
        %v597 = vshrl.u32 %v596, 4
        %v598 = vand.u32 %v596, 15
        %v599 = vsub.s32 0, %v598
        %v600 = vsel %vm594, %v599, %v598
        %vm601 = vcmp.lt.s32.totalorder %v401, 0
        %v602 = vsub.s32 0, %v401
        %v603 = vsel %vm601, %v602, %v401
        %v604 = vshrl.u32 %v603, 4
        %v605 = vand.u32 %v603, 15
        %v606 = vsub.s32 0, %v605
        %v607 = vsel %vm601, %v606, %v605
        %vm608 = vcmp.lt.s32.totalorder %v402, 0
        %v609 = vsub.s32 0, %v402
        %v610 = vsel %vm608, %v609, %v402
        %v611 = vshrl.u32 %v610, 4
        %v612 = vand.u32 %v610, 15
        %v613 = vsub.s32 0, %v612
        %v614 = vsel %vm608, %v613, %v612
        %vm615 = vcmp.lt.s32.totalorder %v403, 0
        %v616 = vsub.s32 0, %v403
        %v617 = vsel %vm615, %v616, %v403
        %v618 = vshrl.u32 %v617, 4
        %v619 = vand.u32 %v617, 15
        %v620 = vsub.s32 0, %v619
        %v621 = vsel %vm615, %v620, %v619
        %vm622 = vcmp.lt.s32.totalorder %v404, 0
        %v623 = vsub.s32 0, %v404
        %v624 = vsel %vm622, %v623, %v404
        %v625 = vshrl.u32 %v624, 4
        %v626 = vand.u32 %v624, 15
        %v627 = vsub.s32 0, %v626
        %v628 = vsel %vm622, %v627, %v626
        %vm629 = vcmp.ne.s32.totalorder %v411, 0
        %vm630 = vcmp.ne.s32.totalorder %v418, 0
        %vm631 = vcmp.ne.s32.totalorder %v425, 0
        %vm632 = vcmp.ne.s32.totalorder %v432, 0
        %vm633 = vcmp.ne.s32.totalorder %v439, 0
        %vm634 = vcmp.ne.s32.totalorder %v446, 0
        %vm635 = vcmp.ne.s32.totalorder %v453, 0
        %vm636 = vcmp.ne.s32.totalorder %v460, 0
        %vm637 = vcmp.ne.s32.totalorder %v467, 0
        %vm638 = vcmp.ne.s32.totalorder %v474, 0
        %vm639 = vcmp.ne.s32.totalorder %v481, 0
        %vm640 = vcmp.ne.s32.totalorder %v488, 0
        %vm641 = vcmp.ne.s32.totalorder %v495, 0
        %vm642 = vcmp.ne.s32.totalorder %v502, 0
        %vm643 = vcmp.ne.s32.totalorder %v509, 0
        %vm644 = vcmp.ne.s32.totalorder %v516, 0
        %vm645 = vcmp.ne.s32.totalorder %v523, 0
        %vm646 = vcmp.ne.s32.totalorder %v530, 0
        %vm647 = vcmp.ne.s32.totalorder %v537, 0
        %vm648 = vcmp.ne.s32.totalorder %v544, 0
        %vm649 = vcmp.ne.s32.totalorder %v551, 0
        %vm650 = vcmp.ne.s32.totalorder %v558, 0
        %vm651 = vcmp.ne.s32.totalorder %v565, 0
        %vm652 = vcmp.ne.s32.totalorder %v572, 0
        %vm653 = vcmp.ne.s32.totalorder %v579, 0
        %vm654 = vcmp.ne.s32.totalorder %v586, 0
        %vm655 = vcmp.ne.s32.totalorder %v593, 0
        %vm656 = vcmp.ne.s32.totalorder %v600, 0
        %vm657 = vcmp.ne.s32.totalorder %v607, 0
        %vm658 = vcmp.ne.s32.totalorder %v614, 0
        %vm659 = vcmp.ne.s32.totalorder %v621, 0
        %vm660 = vcmp.ne.s32.totalorder %v628, 0
        %vm661 = vcmp.lt.s32.totalorder %v411, 0
        %vm662 = vcmp.lt.s32.totalorder %v418, 0
        %vm663 = vcmp.lt.s32.totalorder %v425, 0
        %vm664 = vcmp.lt.s32.totalorder %v432, 0
        %vm665 = vcmp.lt.s32.totalorder %v439, 0
        %vm666 = vcmp.lt.s32.totalorder %v446, 0
        %vm667 = vcmp.lt.s32.totalorder %v453, 0
        %vm668 = vcmp.lt.s32.totalorder %v460, 0
        %vm669 = vcmp.lt.s32.totalorder %v467, 0
        %vm670 = vcmp.lt.s32.totalorder %v474, 0
        %vm671 = vcmp.lt.s32.totalorder %v481, 0
        %vm672 = vcmp.lt.s32.totalorder %v488, 0
        %vm673 = vcmp.lt.s32.totalorder %v495, 0
        %vm674 = vcmp.lt.s32.totalorder %v502, 0
        %vm675 = vcmp.lt.s32.totalorder %v509, 0
        %vm676 = vcmp.lt.s32.totalorder %v516, 0
        %vm677 = vcmp.lt.s32.totalorder %v523, 0
        %vm678 = vcmp.lt.s32.totalorder %v530, 0
        %vm679 = vcmp.lt.s32.totalorder %v537, 0
        %vm680 = vcmp.lt.s32.totalorder %v544, 0
        %vm681 = vcmp.lt.s32.totalorder %v551, 0
        %vm682 = vcmp.lt.s32.totalorder %v558, 0
        %vm683 = vcmp.lt.s32.totalorder %v565, 0
        %vm684 = vcmp.lt.s32.totalorder %v572, 0
        %vm685 = vcmp.lt.s32.totalorder %v579, 0
        %vm686 = vcmp.lt.s32.totalorder %v586, 0
        %vm687 = vcmp.lt.s32.totalorder %v593, 0
        %vm688 = vcmp.lt.s32.totalorder %v600, 0
        %vm689 = vcmp.lt.s32.totalorder %v607, 0
        %vm690 = vcmp.lt.s32.totalorder %v614, 0
        %vm691 = vcmp.lt.s32.totalorder %v621, 0
        %vm692 = vcmp.lt.s32.totalorder %v628, 0
        %vm693 = vmand %vm661, %vm629
        %vm694 = vmand %vm662, %vm630
        %vm695 = vmand %vm663, %vm631
        %vm696 = vmand %vm664, %vm632
        %vm697 = vmand %vm665, %vm633
        %vm698 = vmand %vm666, %vm634
        %vm699 = vmand %vm667, %vm635
        %vm700 = vmand %vm668, %vm636
        %vm701 = vmand %vm669, %vm637
        %vm702 = vmand %vm670, %vm638
        %vm703 = vmand %vm671, %vm639
        %vm704 = vmand %vm672, %vm640
        %vm705 = vmand %vm673, %vm641
        %vm706 = vmand %vm674, %vm642
        %vm707 = vmand %vm675, %vm643
        %vm708 = vmand %vm676, %vm644
        %vm709 = vmand %vm677, %vm645
        %vm710 = vmand %vm678, %vm646
        %vm711 = vmand %vm679, %vm647
        %vm712 = vmand %vm680, %vm648
        %vm713 = vmand %vm681, %vm649
        %vm714 = vmand %vm682, %vm650
        %vm715 = vmand %vm683, %vm651
        %vm716 = vmand %vm684, %vm652
        %vm717 = vmand %vm685, %vm653
        %vm718 = vmand %vm686, %vm654
        %vm719 = vmand %vm687, %vm655
        %vm720 = vmand %vm688, %vm656
        %vm721 = vmand %vm689, %vm657
        %vm722 = vmand %vm690, %vm658
        %vm723 = vmand %vm691, %vm659
        %vm724 = vmand %vm692, %vm660
        %v725 = vadd.s32 %v411, 16
        %v726 = vadd.s32 %v418, 16
        %v727 = vadd.s32 %v425, 16
        %v728 = vadd.s32 %v432, 16
        %v729 = vadd.s32 %v439, 16
        %v730 = vadd.s32 %v446, 16
        %v731 = vadd.s32 %v453, 16
        %v732 = vadd.s32 %v460, 16
        %v733 = vadd.s32 %v467, 16
        %v734 = vadd.s32 %v474, 16
        %v735 = vadd.s32 %v481, 16
        %v736 = vadd.s32 %v488, 16
        %v737 = vadd.s32 %v495, 16
        %v738 = vadd.s32 %v502, 16
        %v739 = vadd.s32 %v509, 16
        %v740 = vadd.s32 %v516, 16
        %v741 = vadd.s32 %v523, 16
        %v742 = vadd.s32 %v530, 16
        %v743 = vadd.s32 %v537, 16
        %v744 = vadd.s32 %v544, 16
        %v745 = vadd.s32 %v551, 16
        %v746 = vadd.s32 %v558, 16
        %v747 = vadd.s32 %v565, 16
        %v748 = vadd.s32 %v572, 16
        %v749 = vadd.s32 %v579, 16
        %v750 = vadd.s32 %v586, 16
        %v751 = vadd.s32 %v593, 16
        %v752 = vadd.s32 %v600, 16
        %v753 = vadd.s32 %v607, 16
        %v754 = vadd.s32 %v614, 16
        %v755 = vadd.s32 %v621, 16
        %v756 = vadd.s32 %v628, 16
        %v757 = vsel %vm693, %v725, %v411
        %v758 = vsel %vm694, %v726, %v418
        %v759 = vsel %vm695, %v727, %v425
        %v760 = vsel %vm696, %v728, %v432
        %v761 = vsel %vm697, %v729, %v439
        %v762 = vsel %vm698, %v730, %v446
        %v763 = vsel %vm699, %v731, %v453
        %v764 = vsel %vm700, %v732, %v460
        %v765 = vsel %vm701, %v733, %v467
        %v766 = vsel %vm702, %v734, %v474
        %v767 = vsel %vm703, %v735, %v481
        %v768 = vsel %vm704, %v736, %v488
        %v769 = vsel %vm705, %v737, %v495
        %v770 = vsel %vm706, %v738, %v502
        %v771 = vsel %vm707, %v739, %v509
        %v772 = vsel %vm708, %v740, %v516
        %v773 = vsel %vm709, %v741, %v523
        %v774 = vsel %vm710, %v742, %v530
        %v775 = vsel %vm711, %v743, %v537
        %v776 = vsel %vm712, %v744, %v544
        %v777 = vsel %vm713, %v745, %v551
        %v778 = vsel %vm714, %v746, %v558
        %v779 = vsel %vm715, %v747, %v565
        %v780 = vsel %vm716, %v748, %v572
        %v781 = vsel %vm717, %v749, %v579
        %v782 = vsel %vm718, %v750, %v586
        %v783 = vsel %vm719, %v751, %v593
        %v784 = vsel %vm720, %v752, %v600
        %v785 = vsel %vm721, %v753, %v607
        %v786 = vsel %vm722, %v754, %v614
        %v787 = vsel %vm723, %v755, %v621
        %v788 = vsel %vm724, %v756, %v628
        %vm789 = vcmp.ne.s32.totalorder %v757, 0
        %vm790 = vcmp.ne.s32.totalorder %v758, 0
        %vm791 = vcmp.ne.s32.totalorder %v759, 0
        %vm792 = vcmp.ne.s32.totalorder %v760, 0
        %vm793 = vcmp.ne.s32.totalorder %v761, 0
        %vm794 = vcmp.ne.s32.totalorder %v762, 0
        %vm795 = vcmp.ne.s32.totalorder %v763, 0
        %vm796 = vcmp.ne.s32.totalorder %v764, 0
        %vm797 = vcmp.ne.s32.totalorder %v765, 0
        %vm798 = vcmp.ne.s32.totalorder %v766, 0
        %vm799 = vcmp.ne.s32.totalorder %v767, 0
        %vm800 = vcmp.ne.s32.totalorder %v768, 0
        %vm801 = vcmp.ne.s32.totalorder %v769, 0
        %vm802 = vcmp.ne.s32.totalorder %v770, 0
        %vm803 = vcmp.ne.s32.totalorder %v771, 0
        %vm804 = vcmp.ne.s32.totalorder %v772, 0
        %vm805 = vcmp.ne.s32.totalorder %v773, 0
        %vm806 = vcmp.ne.s32.totalorder %v774, 0
        %vm807 = vcmp.ne.s32.totalorder %v775, 0
        %vm808 = vcmp.ne.s32.totalorder %v776, 0
        %vm809 = vcmp.ne.s32.totalorder %v777, 0
        %vm810 = vcmp.ne.s32.totalorder %v778, 0
        %vm811 = vcmp.ne.s32.totalorder %v779, 0
        %vm812 = vcmp.ne.s32.totalorder %v780, 0
        %vm813 = vcmp.ne.s32.totalorder %v781, 0
        %vm814 = vcmp.ne.s32.totalorder %v782, 0
        %vm815 = vcmp.ne.s32.totalorder %v783, 0
        %vm816 = vcmp.ne.s32.totalorder %v784, 0
        %vm817 = vcmp.ne.s32.totalorder %v785, 0
        %vm818 = vcmp.ne.s32.totalorder %v786, 0
        %vm819 = vcmp.ne.s32.totalorder %v787, 0
        %vm820 = vcmp.ne.s32.totalorder %v788, 0
        %vm821 = vcmp.ne.s32.totalorder %v757, 15
        %vm822 = vcmp.ne.s32.totalorder %v758, 15
        %vm823 = vcmp.ne.s32.totalorder %v759, 15
        %vm824 = vcmp.ne.s32.totalorder %v760, 15
        %vm825 = vcmp.ne.s32.totalorder %v761, 15
        %vm826 = vcmp.ne.s32.totalorder %v762, 15
        %vm827 = vcmp.ne.s32.totalorder %v763, 15
        %vm828 = vcmp.ne.s32.totalorder %v764, 15
        %vm829 = vcmp.ne.s32.totalorder %v765, 15
        %vm830 = vcmp.ne.s32.totalorder %v766, 15
        %vm831 = vcmp.ne.s32.totalorder %v767, 15
        %vm832 = vcmp.ne.s32.totalorder %v768, 15
        %vm833 = vcmp.ne.s32.totalorder %v769, 15
        %vm834 = vcmp.ne.s32.totalorder %v770, 15
        %vm835 = vcmp.ne.s32.totalorder %v771, 15
        %vm836 = vcmp.ne.s32.totalorder %v772, 15
        %vm837 = vcmp.ne.s32.totalorder %v773, 15
        %vm838 = vcmp.ne.s32.totalorder %v774, 15
        %vm839 = vcmp.ne.s32.totalorder %v775, 15
        %vm840 = vcmp.ne.s32.totalorder %v776, 15
        %vm841 = vcmp.ne.s32.totalorder %v777, 15
        %vm842 = vcmp.ne.s32.totalorder %v778, 15
        %vm843 = vcmp.ne.s32.totalorder %v779, 15
        %vm844 = vcmp.ne.s32.totalorder %v780, 15
        %vm845 = vcmp.ne.s32.totalorder %v781, 15
        %vm846 = vcmp.ne.s32.totalorder %v782, 15
        %vm847 = vcmp.ne.s32.totalorder %v783, 15
        %vm848 = vcmp.ne.s32.totalorder %v784, 15
        %vm849 = vcmp.ne.s32.totalorder %v785, 15
        %vm850 = vcmp.ne.s32.totalorder %v786, 15
        %vm851 = vcmp.ne.s32.totalorder %v787, 15
        %vm852 = vcmp.ne.s32.totalorder %v788, 15
        %v853 = vsel %vm789, 1, 0
        %v854 = vsel %vm790, 1, 0
        %v855 = vsel %vm791, 1, 0
        %v856 = vsel %vm792, 1, 0
        %v857 = vsel %vm793, 1, 0
        %v858 = vsel %vm794, 1, 0
        %v859 = vsel %vm795, 1, 0
        %v860 = vsel %vm796, 1, 0
        %v861 = vsel %vm797, 1, 0
        %v862 = vsel %vm798, 1, 0
        %v863 = vsel %vm799, 1, 0
        %v864 = vsel %vm800, 1, 0
        %v865 = vsel %vm801, 1, 0
        %v866 = vsel %vm802, 1, 0
        %v867 = vsel %vm803, 1, 0
        %v868 = vsel %vm804, 1, 0
        %v869 = vsel %vm805, 1, 0
        %v870 = vsel %vm806, 1, 0
        %v871 = vsel %vm807, 1, 0
        %v872 = vsel %vm808, 1, 0
        %v873 = vsel %vm809, 1, 0
        %v874 = vsel %vm810, 1, 0
        %v875 = vsel %vm811, 1, 0
        %v876 = vsel %vm812, 1, 0
        %v877 = vsel %vm813, 1, 0
        %v878 = vsel %vm814, 1, 0
        %v879 = vsel %vm815, 1, 0
        %v880 = vsel %vm816, 1, 0
        %v881 = vsel %vm817, 1, 0
        %v882 = vsel %vm818, 1, 0
        %v883 = vsel %vm819, 1, 0
        %v884 = vsel %vm820, 1, 0
        %vm885 = vcmp.eq.s32.totalorder %v853, 1
        %vm886 = vcmp.eq.s32.totalorder %v854, 1
        %vm887 = vcmp.eq.s32.totalorder %v855, 1
        %vm888 = vcmp.eq.s32.totalorder %v856, 1
        %vm889 = vcmp.eq.s32.totalorder %v857, 1
        %vm890 = vcmp.eq.s32.totalorder %v858, 1
        %vm891 = vcmp.eq.s32.totalorder %v859, 1
        %vm892 = vcmp.eq.s32.totalorder %v860, 1
        %vm893 = vcmp.eq.s32.totalorder %v861, 1
        %vm894 = vcmp.eq.s32.totalorder %v862, 1
        %vm895 = vcmp.eq.s32.totalorder %v863, 1
        %vm896 = vcmp.eq.s32.totalorder %v864, 1
        %vm897 = vcmp.eq.s32.totalorder %v865, 1
        %vm898 = vcmp.eq.s32.totalorder %v866, 1
        %vm899 = vcmp.eq.s32.totalorder %v867, 1
        %vm900 = vcmp.eq.s32.totalorder %v868, 1
        %vm901 = vcmp.eq.s32.totalorder %v869, 1
        %vm902 = vcmp.eq.s32.totalorder %v870, 1
        %vm903 = vcmp.eq.s32.totalorder %v871, 1
        %vm904 = vcmp.eq.s32.totalorder %v872, 1
        %vm905 = vcmp.eq.s32.totalorder %v873, 1
        %vm906 = vcmp.eq.s32.totalorder %v874, 1
        %vm907 = vcmp.eq.s32.totalorder %v875, 1
        %vm908 = vcmp.eq.s32.totalorder %v876, 1
        %vm909 = vcmp.eq.s32.totalorder %v877, 1
        %vm910 = vcmp.eq.s32.totalorder %v878, 1
        %vm911 = vcmp.eq.s32.totalorder %v879, 1
        %vm912 = vcmp.eq.s32.totalorder %v880, 1
        %vm913 = vcmp.eq.s32.totalorder %v881, 1
        %vm914 = vcmp.eq.s32.totalorder %v882, 1
        %vm915 = vcmp.eq.s32.totalorder %v883, 1
        %vm916 = vcmp.eq.s32.totalorder %v884, 1
        %vm950 = vcmask 1040384
        %v951 = vrot.slane %v334, 7
        %v952 = vrot.slane %v335, 7
        %v953 = vsel %vm950, %v951, %v952
        %v954 = vrot.slane %v336, 7
        %v955 = vsel %vm950, %v952, %v954
        %v956 = vrot.slane %v337, 7
        %v957 = vsel %vm950, %v954, %v956
        %v958 = vrot.slane %v338, 7
        %v959 = vsel %vm950, %v956, %v958
        %v960 = vrot.slane %v339, 7
        %v961 = vsel %vm950, %v958, %v960
        %v962 = vrot.slane %v340, 7
        %v963 = vsel %vm950, %v960, %v962
        %v964 = vrot.slane %v341, 7
        %v965 = vsel %vm950, %v962, %v964
        %v966 = vrot.slane %v342, 7
        %v967 = vsel %vm950, %v964, %v966
        %v968 = vrot.slane %v343, 7
        %v969 = vsel %vm950, %v966, %v968
        %v970 = vrot.slane %v344, 7
        %v971 = vsel %vm950, %v968, %v970
        %v972 = vrot.slane %v345, 7
        %v973 = vsel %vm950, %v970, %v972
        %v974 = vrot.slane %v346, 7
        %v975 = vsel %vm950, %v972, %v974
        %v976 = vrot.slane %v347, 7
        %v977 = vsel %vm950, %v974, %v976
        %v978 = vrot.slane %v348, 7
        %v979 = vsel %vm950, %v976, %v978
        %v980 = vrot.slane %v349, 7
        %v981 = vsel %vm950, %v978, %v980
        %v982 = vrot.slane %v350, 7
        %v983 = vsel %vm950, %v980, %v982
        %v984 = vrot.slane %v351, 7
        %v985 = vsel %vm950, %v982, %v984
        %v986 = vrot.slane %v352, 7
        %v987 = vsel %vm950, %v984, %v986
        %v988 = vrot.slane %v353, 7
        %v989 = vsel %vm950, %v986, %v988
        %v990 = vrot.slane %v354, 7
        %v991 = vsel %vm950, %v988, %v990
        %v992 = vrot.slane %v355, 7
        %v993 = vsel %vm950, %v990, %v992
        %v994 = vrot.slane %v356, 7
        %v995 = vsel %vm950, %v992, %v994
        %v996 = vrot.slane %v357, 7
        %v997 = vsel %vm950, %v994, %v996
        %v998 = vrot.slane %v358, 7
        %v999 = vsel %vm950, %v996, %v998
        %v1000 = vrot.slane %v359, 7
        %v1001 = vsel %vm950, %v998, %v1000
        %v1002 = vrot.slane %v360, 7
        %v1003 = vsel %vm950, %v1000, %v1002
        %v1004 = vrot.slane %v361, 7
        %v1005 = vsel %vm950, %v1002, %v1004
        %v1006 = vrot.slane %v362, 7
        %v1007 = vsel %vm950, %v1004, %v1006
        %v1008 = vrot.slane %v363, 7
        %v1009 = vsel %vm950, %v1006, %v1008
        %v1010 = vrot.slane %v364, 7
        %v1011 = vsel %vm950, %v1008, %v1010
        %v1012 = vrot.slane %v365, 7
        %v1013 = vsel %vm950, %v1010, %v1012
        %v1014 = vrot.slane %v366, 7
        %v1015 = vsel %vm950, %v1012, %v1014
        %v1048 = vsel %vm885, %v953, 0.0
        %v1049 = vsel %vm886, %v955, 0.0
        %v1050 = vsel %vm887, %v957, 0.0
        %v1051 = vsel %vm888, %v959, 0.0
        %v1052 = vsel %vm889, %v961, 0.0
        %v1053 = vsel %vm890, %v963, 0.0
        %v1054 = vsel %vm891, %v965, 0.0
        %v1055 = vsel %vm892, %v967, 0.0
        %v1056 = vsel %vm893, %v969, 0.0
        %v1057 = vsel %vm894, %v971, 0.0
        %v1058 = vsel %vm895, %v973, 0.0
        %v1059 = vsel %vm896, %v975, 0.0
        %v1060 = vsel %vm897, %v977, 0.0
        %v1061 = vsel %vm898, %v979, 0.0
        %v1062 = vsel %vm899, %v981, 0.0
        %v1063 = vsel %vm900, %v983, 0.0
        %v1064 = vsel %vm901, %v985, 0.0
        %v1065 = vsel %vm902, %v987, 0.0
        %v1066 = vsel %vm903, %v989, 0.0
        %v1067 = vsel %vm904, %v991, 0.0
        %v1068 = vsel %vm905, %v993, 0.0
        %v1069 = vsel %vm906, %v995, 0.0
        %v1070 = vsel %vm907, %v997, 0.0
        %v1071 = vsel %vm908, %v999, 0.0
        %v1072 = vsel %vm909, %v1001, 0.0
        %v1073 = vsel %vm910, %v1003, 0.0
        %v1074 = vsel %vm911, %v1005, 0.0
        %v1075 = vsel %vm912, %v1007, 0.0
        %v1076 = vsel %vm913, %v1009, 0.0
        %v1077 = vsel %vm914, %v1011, 0.0
        %v1078 = vsel %vm915, %v1013, 0.0
        %v1079 = vsel %vm916, %v1015, 0.0
        %v1080 = vpack.c.bf16 %v1049, %v1048
        %v1081 = vpack.c.bf16 %v1051, %v1050
        %v1082 = vpack.c.bf16 %v1053, %v1052
        %v1083 = vpack.c.bf16 %v1055, %v1054
        %v1084 = vpack.c.bf16 %v1057, %v1056
        %v1085 = vpack.c.bf16 %v1059, %v1058
        %v1086 = vpack.c.bf16 %v1061, %v1060
        %v1087 = vpack.c.bf16 %v1063, %v1062
        %v1088 = vpack.c.bf16 %v1065, %v1064
        %v1089 = vpack.c.bf16 %v1067, %v1066
        %v1090 = vpack.c.bf16 %v1069, %v1068
        %v1091 = vpack.c.bf16 %v1071, %v1070
        %v1092 = vpack.c.bf16 %v1073, %v1072
        %v1093 = vpack.c.bf16 %v1075, %v1074
        %v1094 = vpack.c.bf16 %v1077, %v1076
        %v1095 = vpack.c.bf16 %v1079, %v1078
        %v1096 = vld [vmem:[%s208] sm:$0xf]
        %v1097 = vld [vmem:[%s208 + $0x4] sm:$0xf]
        %v1098 = vld [vmem:[%s208 + $0x8] sm:$0xf]
        %v1099 = vld [vmem:[%s208 + $0xc] sm:$0xf]
        %v1100 = vld [vmem:[%s208 + $0x10] sm:$0xf]
        %v1101 = vld [vmem:[%s208 + $0x14] sm:$0xf]
        %v1102 = vld [vmem:[%s208 + $0x18] sm:$0xf]
        %v1103 = vld [vmem:[%s208 + $0x1c] sm:$0xf]
        %v1104 = vld [vmem:[%s208 + $0x20] sm:$0xf]
        %v1105 = vld [vmem:[%s208 + $0x24] sm:$0xf]
        %v1106 = vld [vmem:[%s208 + $0x28] sm:$0xf]
        %v1107 = vld [vmem:[%s208 + $0x2c] sm:$0xf]
        %v1108 = vld [vmem:[%s208 + $0x30] sm:$0xf]
        %v1109 = vld [vmem:[%s208 + $0x34] sm:$0xf]
        %v1110 = vld [vmem:[%s208 + $0x38] sm:$0xf]
        %v1111 = vld [vmem:[%s208 + $0x3c] sm:$0xf]
        %v1112 = vpack.c.bf16 %v336, %v335
        %v1113 = vpack.c.bf16 %v338, %v337
        %v1114 = vpack.c.bf16 %v340, %v339
        %v1115 = vpack.c.bf16 %v342, %v341
        %v1116 = vpack.c.bf16 %v344, %v343
        %v1117 = vpack.c.bf16 %v346, %v345
        %v1118 = vpack.c.bf16 %v348, %v347
        %v1119 = vpack.c.bf16 %v350, %v349
        %v1120 = vpack.c.bf16 %v352, %v351
        %v1121 = vpack.c.bf16 %v354, %v353
        %v1122 = vpack.c.bf16 %v356, %v355
        %v1123 = vpack.c.bf16 %v358, %v357
        %v1124 = vpack.c.bf16 %v360, %v359
        %v1125 = vpack.c.bf16 %v362, %v361
        %v1126 = vpack.c.bf16 %v364, %v363
        %v1127 = vpack.c.bf16 %v366, %v365
        %s1128 = scalar_lea.vmem %s208, 64 [#allocation3]
        %v1129 = vld [vmem:[%s1128] sm:$0xf]
        %v1130 = vld [vmem:[%s1128 + $0x4] sm:$0xf]
        %v1131 = vld [vmem:[%s1128 + $0x8] sm:$0xf]
        %v1132 = vld [vmem:[%s1128 + $0xc] sm:$0xf]
        %v1133 = vld [vmem:[%s1128 + $0x10] sm:$0xf]
        %v1134 = vld [vmem:[%s1128 + $0x14] sm:$0xf]
        %v1135 = vld [vmem:[%s1128 + $0x18] sm:$0xf]
        %v1136 = vld [vmem:[%s1128 + $0x1c] sm:$0xf]
        %v1137 = vld [vmem:[%s1128 + $0x20] sm:$0xf]
        %v1138 = vld [vmem:[%s1128 + $0x24] sm:$0xf]
        %v1139 = vld [vmem:[%s1128 + $0x28] sm:$0xf]
        %v1140 = vld [vmem:[%s1128 + $0x2c] sm:$0xf]
        %v1141 = vld [vmem:[%s1128 + $0x30] sm:$0xf]
        %v1142 = vld [vmem:[%s1128 + $0x34] sm:$0xf]
        %v1143 = vld [vmem:[%s1128 + $0x38] sm:$0xf]
        %v1144 = vld [vmem:[%s1128 + $0x3c] sm:$0xf]
        %v1161 = vunpack.c.l.b16 %v1129
        %v1162 = vunpack.c.l.b16 %v1130
        %v1163 = vunpack.c.l.b16 %v1131
        %v1164 = vunpack.c.l.b16 %v1132
        %v1165 = vunpack.c.l.b16 %v1133
        %v1166 = vunpack.c.l.b16 %v1134
        %v1167 = vunpack.c.l.b16 %v1135
        %v1168 = vunpack.c.l.b16 %v1136
        %v1169 = vunpack.c.l.b16 %v1137
        %v1170 = vunpack.c.l.b16 %v1138
        %v1171 = vunpack.c.l.b16 %v1139
        %v1172 = vunpack.c.l.b16 %v1140
        %v1173 = vunpack.c.l.b16 %v1141
        %v1174 = vunpack.c.l.b16 %v1142
        %v1175 = vunpack.c.l.b16 %v1143
        %v1176 = vunpack.c.l.b16 %v1144
        %v1177 = vpack.c.b16 %v1162, %v1161
        %v1178 = vpack.c.b16 %v1164, %v1163
        %v1179 = vpack.c.b16 %v1166, %v1165
        %v1180 = vpack.c.b16 %v1168, %v1167
        %v1181 = vpack.c.b16 %v1170, %v1169
        %v1182 = vpack.c.b16 %v1172, %v1171
        %v1183 = vpack.c.b16 %v1174, %v1173
        %v1184 = vpack.c.b16 %v1176, %v1175
        %1193 = vmatpush.bf16.msra.mxu0 %v1184
        %1194 = vmatpush.bf16.msra.mxu0 %v1183
        %1195 = vmatpush.bf16.msra.mxu0 %v1182
        %1196 = vmatpush.bf16.msra.mxu0 %v1181
        %1197 = vmatpush.bf16.msra.mxu0 %v1180
        %1198 = vmatpush.bf16.msra.mxu0 %v1179
        %1199 = vmatpush.bf16.msra.mxu0 %v1178
        %1200 = vmatpush.bf16.msra.mxu0 %v1177
        %1201 = vmatmul.bf16.gmra.mxu0 %v1112
        %v1202 = vpop.f32.mrf.mxu0
        %v1203 = vadd.f32 0.0, %v1202
        %v1204 = vpop.f32.mrf.mxu0
        %v1205 = vadd.f32 0.0, %v1204
        %1206 = vmatmul.bf16.gmra.mxu0 %v1113
        %v1207 = vpop.f32.mrf.mxu0
        %v1208 = vadd.f32 0.0, %v1207
        %v1209 = vpop.f32.mrf.mxu0
        %v1210 = vadd.f32 0.0, %v1209
        %1211 = vmatmul.bf16.gmra.mxu0 %v1114
        %v1212 = vpop.f32.mrf.mxu0
        %v1213 = vadd.f32 0.0, %v1212
        %v1214 = vpop.f32.mrf.mxu0
        %v1215 = vadd.f32 0.0, %v1214
        %1216 = vmatmul.bf16.gmra.mxu0 %v1115
        %v1217 = vpop.f32.mrf.mxu0
        %v1218 = vadd.f32 0.0, %v1217
        %v1219 = vpop.f32.mrf.mxu0
        %v1220 = vadd.f32 0.0, %v1219
        %1221 = vmatmul.bf16.gmra.mxu0 %v1116
        %v1222 = vpop.f32.mrf.mxu0
        %v1223 = vadd.f32 0.0, %v1222
        %v1224 = vpop.f32.mrf.mxu0
        %v1225 = vadd.f32 0.0, %v1224
        %1226 = vmatmul.bf16.gmra.mxu0 %v1117
        %v1227 = vpop.f32.mrf.mxu0
        %v1228 = vadd.f32 0.0, %v1227
        %v1229 = vpop.f32.mrf.mxu0
        %v1230 = vadd.f32 0.0, %v1229
        %1231 = vmatmul.bf16.gmra.mxu0 %v1118
        %v1232 = vpop.f32.mrf.mxu0
        %v1233 = vadd.f32 0.0, %v1232
        %v1234 = vpop.f32.mrf.mxu0
        %v1235 = vadd.f32 0.0, %v1234
        %1236 = vmatmul.bf16.gmra.mxu0 %v1119
        %v1237 = vpop.f32.mrf.mxu0
        %v1238 = vadd.f32 0.0, %v1237
        %v1239 = vpop.f32.mrf.mxu0
        %v1240 = vadd.f32 0.0, %v1239
        %1241 = vmatmul.bf16.gmra.mxu0 %v1120
        %v1242 = vpop.f32.mrf.mxu0
        %v1243 = vadd.f32 0.0, %v1242
        %v1244 = vpop.f32.mrf.mxu0
        %v1245 = vadd.f32 0.0, %v1244
        %1246 = vmatmul.bf16.gmra.mxu0 %v1121
        %v1247 = vpop.f32.mrf.mxu0
        %v1248 = vadd.f32 0.0, %v1247
        %v1249 = vpop.f32.mrf.mxu0
        %v1250 = vadd.f32 0.0, %v1249
        %1251 = vmatmul.bf16.gmra.mxu0 %v1122
        %v1252 = vpop.f32.mrf.mxu0
        %v1253 = vadd.f32 0.0, %v1252
        %v1254 = vpop.f32.mrf.mxu0
        %v1255 = vadd.f32 0.0, %v1254
        %1256 = vmatmul.bf16.gmra.mxu0 %v1123
        %v1257 = vpop.f32.mrf.mxu0
        %v1258 = vadd.f32 0.0, %v1257
        %v1259 = vpop.f32.mrf.mxu0
        %v1260 = vadd.f32 0.0, %v1259
        %1261 = vmatmul.bf16.gmra.mxu0 %v1124
        %v1262 = vpop.f32.mrf.mxu0
        %v1263 = vadd.f32 0.0, %v1262
        %v1264 = vpop.f32.mrf.mxu0
        %v1265 = vadd.f32 0.0, %v1264
        %1266 = vmatmul.bf16.gmra.mxu0 %v1125
        %v1267 = vpop.f32.mrf.mxu0
        %v1268 = vadd.f32 0.0, %v1267
        %v1269 = vpop.f32.mrf.mxu0
        %v1270 = vadd.f32 0.0, %v1269
        %1271 = vmatmul.bf16.gmra.mxu0 %v1126
        %v1272 = vpop.f32.mrf.mxu0
        %v1273 = vadd.f32 0.0, %v1272
        %v1274 = vpop.f32.mrf.mxu0
        %v1275 = vadd.f32 0.0, %v1274
        %1276 = vmatmul.bf16.gmra.mxu0 %v1127
        %v1277 = vpop.f32.mrf.mxu0
        %v1278 = vadd.f32 0.0, %v1277
        %v1279 = vpop.f32.mrf.mxu0
        %v1280 = vadd.f32 0.0, %v1279
        %1281 = vdwg.mxu0
        %v1298 = vunpack.c.l.b16 %v1096
        %v1299 = vunpack.c.l.b16 %v1097
        %v1300 = vunpack.c.l.b16 %v1098
        %v1301 = vunpack.c.l.b16 %v1099
        %v1302 = vunpack.c.l.b16 %v1100
        %v1303 = vunpack.c.l.b16 %v1101
        %v1304 = vunpack.c.l.b16 %v1102
        %v1305 = vunpack.c.l.b16 %v1103
        %v1306 = vunpack.c.l.b16 %v1104
        %v1307 = vunpack.c.l.b16 %v1105
        %v1308 = vunpack.c.l.b16 %v1106
        %v1309 = vunpack.c.l.b16 %v1107
        %v1310 = vunpack.c.l.b16 %v1108
        %v1311 = vunpack.c.l.b16 %v1109
        %v1312 = vunpack.c.l.b16 %v1110
        %v1313 = vunpack.c.l.b16 %v1111
        %v1314 = vpack.c.b16 %v1299, %v1298
        %v1315 = vpack.c.b16 %v1301, %v1300
        %v1316 = vpack.c.b16 %v1303, %v1302
        %v1317 = vpack.c.b16 %v1305, %v1304
        %v1318 = vpack.c.b16 %v1307, %v1306
        %v1319 = vpack.c.b16 %v1309, %v1308
        %v1320 = vpack.c.b16 %v1311, %v1310
        %v1321 = vpack.c.b16 %v1313, %v1312
        %1330 = vmatpush.bf16.msra.mxu0 %v1321
        %1331 = vmatpush.bf16.msra.mxu0 %v1320
        %1332 = vmatpush.bf16.msra.mxu0 %v1319
        %1333 = vmatpush.bf16.msra.mxu0 %v1318
        %1334 = vmatpush.bf16.msra.mxu0 %v1317
        %1335 = vmatpush.bf16.msra.mxu0 %v1316
        %1336 = vmatpush.bf16.msra.mxu0 %v1315
        %1337 = vmatpush.bf16.msra.mxu0 %v1314
        %1338 = vmatmul.bf16.gmra.mxu0 %v1080
        %v1339 = vpop.f32.mrf.mxu0
        %v1340 = vadd.f32 %v1203, %v1339
        %v1341 = vpop.f32.mrf.mxu0
        %v1342 = vadd.f32 %v1205, %v1341
        %1343 = vmatmul.bf16.gmra.mxu0 %v1081
        %v1344 = vpop.f32.mrf.mxu0
        %v1345 = vadd.f32 %v1208, %v1344
        %v1346 = vpop.f32.mrf.mxu0
        %v1347 = vadd.f32 %v1210, %v1346
        %1348 = vmatmul.bf16.gmra.mxu0 %v1082
        %v1349 = vpop.f32.mrf.mxu0
        %v1350 = vadd.f32 %v1213, %v1349
        %v1351 = vpop.f32.mrf.mxu0
        %v1352 = vadd.f32 %v1215, %v1351
        %1353 = vmatmul.bf16.gmra.mxu0 %v1083
        %v1354 = vpop.f32.mrf.mxu0
        %v1355 = vadd.f32 %v1218, %v1354
        %v1356 = vpop.f32.mrf.mxu0
        %v1357 = vadd.f32 %v1220, %v1356
        %1358 = vmatmul.bf16.gmra.mxu0 %v1084
        %v1359 = vpop.f32.mrf.mxu0
        %v1360 = vadd.f32 %v1223, %v1359
        %v1361 = vpop.f32.mrf.mxu0
        %v1362 = vadd.f32 %v1225, %v1361
        %1363 = vmatmul.bf16.gmra.mxu0 %v1085
        %v1364 = vpop.f32.mrf.mxu0
        %v1365 = vadd.f32 %v1228, %v1364
        %v1366 = vpop.f32.mrf.mxu0
        %v1367 = vadd.f32 %v1230, %v1366
        %1368 = vmatmul.bf16.gmra.mxu0 %v1086
        %v1369 = vpop.f32.mrf.mxu0
        %v1370 = vadd.f32 %v1233, %v1369
        %v1371 = vpop.f32.mrf.mxu0
        %v1372 = vadd.f32 %v1235, %v1371
        %1373 = vmatmul.bf16.gmra.mxu0 %v1087
        %v1374 = vpop.f32.mrf.mxu0
        %v1375 = vadd.f32 %v1238, %v1374
        %v1376 = vpop.f32.mrf.mxu0
        %v1377 = vadd.f32 %v1240, %v1376
        %1378 = vmatmul.bf16.gmra.mxu0 %v1088
        %v1379 = vpop.f32.mrf.mxu0
        %v1380 = vadd.f32 %v1243, %v1379
        %v1381 = vpop.f32.mrf.mxu0
        %v1382 = vadd.f32 %v1245, %v1381
        %1383 = vmatmul.bf16.gmra.mxu0 %v1089
        %v1384 = vpop.f32.mrf.mxu0
        %v1385 = vadd.f32 %v1248, %v1384
        %v1386 = vpop.f32.mrf.mxu0
        %v1387 = vadd.f32 %v1250, %v1386
        %1388 = vmatmul.bf16.gmra.mxu0 %v1090
        %v1389 = vpop.f32.mrf.mxu0
        %v1390 = vadd.f32 %v1253, %v1389
        %v1391 = vpop.f32.mrf.mxu0
        %v1392 = vadd.f32 %v1255, %v1391
        %1393 = vmatmul.bf16.gmra.mxu0 %v1091
        %v1394 = vpop.f32.mrf.mxu0
        %v1395 = vadd.f32 %v1258, %v1394
        %v1396 = vpop.f32.mrf.mxu0
        %v1397 = vadd.f32 %v1260, %v1396
        %1398 = vmatmul.bf16.gmra.mxu0 %v1092
        %v1399 = vpop.f32.mrf.mxu0
        %v1400 = vadd.f32 %v1263, %v1399
        %v1401 = vpop.f32.mrf.mxu0
        %v1402 = vadd.f32 %v1265, %v1401
        %1403 = vmatmul.bf16.gmra.mxu0 %v1093
        %v1404 = vpop.f32.mrf.mxu0
        %v1405 = vadd.f32 %v1268, %v1404
        %v1406 = vpop.f32.mrf.mxu0
        %v1407 = vadd.f32 %v1270, %v1406
        %1408 = vmatmul.bf16.gmra.mxu0 %v1094
        %v1409 = vpop.f32.mrf.mxu0
        %v1410 = vadd.f32 %v1273, %v1409
        %v1411 = vpop.f32.mrf.mxu0
        %v1412 = vadd.f32 %v1275, %v1411
        %1413 = vmatmul.bf16.gmra.mxu0 %v1095
        %v1414 = vpop.f32.mrf.mxu0
        %v1415 = vadd.f32 %v1278, %v1414
        %v1416 = vpop.f32.mrf.mxu0
        %v1417 = vadd.f32 %v1280, %v1416
        %1418 = vdwg.mxu0
        %v1419 = vsel %vm821, 1, 0
        %v1420 = vsel %vm822, 1, 0
        %v1421 = vsel %vm823, 1, 0
        %v1422 = vsel %vm824, 1, 0
        %v1423 = vsel %vm825, 1, 0
        %v1424 = vsel %vm826, 1, 0
        %v1425 = vsel %vm827, 1, 0
        %v1426 = vsel %vm828, 1, 0
        %v1427 = vsel %vm829, 1, 0
        %v1428 = vsel %vm830, 1, 0
        %v1429 = vsel %vm831, 1, 0
        %v1430 = vsel %vm832, 1, 0
        %v1431 = vsel %vm833, 1, 0
        %v1432 = vsel %vm834, 1, 0
        %v1433 = vsel %vm835, 1, 0
        %v1434 = vsel %vm836, 1, 0
        %v1435 = vsel %vm837, 1, 0
        %v1436 = vsel %vm838, 1, 0
        %v1437 = vsel %vm839, 1, 0
        %v1438 = vsel %vm840, 1, 0
        %v1439 = vsel %vm841, 1, 0
        %v1440 = vsel %vm842, 1, 0
        %v1441 = vsel %vm843, 1, 0
        %v1442 = vsel %vm844, 1, 0
        %v1443 = vsel %vm845, 1, 0
        %v1444 = vsel %vm846, 1, 0
        %v1445 = vsel %vm847, 1, 0
        %v1446 = vsel %vm848, 1, 0
        %v1447 = vsel %vm849, 1, 0
        %v1448 = vsel %vm850, 1, 0
        %v1449 = vsel %vm851, 1, 0
        %v1450 = vsel %vm852, 1, 0
        %vm1451 = vcmp.eq.s32.totalorder %v1419, 1
        %vm1452 = vcmp.eq.s32.totalorder %v1420, 1
        %vm1453 = vcmp.eq.s32.totalorder %v1421, 1
        %vm1454 = vcmp.eq.s32.totalorder %v1422, 1
        %vm1455 = vcmp.eq.s32.totalorder %v1423, 1
        %vm1456 = vcmp.eq.s32.totalorder %v1424, 1
        %vm1457 = vcmp.eq.s32.totalorder %v1425, 1
        %vm1458 = vcmp.eq.s32.totalorder %v1426, 1
        %vm1459 = vcmp.eq.s32.totalorder %v1427, 1
        %vm1460 = vcmp.eq.s32.totalorder %v1428, 1
        %vm1461 = vcmp.eq.s32.totalorder %v1429, 1
        %vm1462 = vcmp.eq.s32.totalorder %v1430, 1
        %vm1463 = vcmp.eq.s32.totalorder %v1431, 1
        %vm1464 = vcmp.eq.s32.totalorder %v1432, 1
        %vm1465 = vcmp.eq.s32.totalorder %v1433, 1
        %vm1466 = vcmp.eq.s32.totalorder %v1434, 1
        %vm1467 = vcmp.eq.s32.totalorder %v1435, 1
        %vm1468 = vcmp.eq.s32.totalorder %v1436, 1
        %vm1469 = vcmp.eq.s32.totalorder %v1437, 1
        %vm1470 = vcmp.eq.s32.totalorder %v1438, 1
        %vm1471 = vcmp.eq.s32.totalorder %v1439, 1
        %vm1472 = vcmp.eq.s32.totalorder %v1440, 1
        %vm1473 = vcmp.eq.s32.totalorder %v1441, 1
        %vm1474 = vcmp.eq.s32.totalorder %v1442, 1
        %vm1475 = vcmp.eq.s32.totalorder %v1443, 1
        %vm1476 = vcmp.eq.s32.totalorder %v1444, 1
        %vm1477 = vcmp.eq.s32.totalorder %v1445, 1
        %vm1478 = vcmp.eq.s32.totalorder %v1446, 1
        %vm1479 = vcmp.eq.s32.totalorder %v1447, 1
        %vm1480 = vcmp.eq.s32.totalorder %v1448, 1
        %vm1481 = vcmp.eq.s32.totalorder %v1449, 1
        %vm1482 = vcmp.eq.s32.totalorder %v1450, 1
        %vm1484 = vcmask 1046528
        %v1485 = vrot.slane %v335, 1
        %v1486 = vrot.slane %v336, 1
        %v1487 = vsel %vm1484, %v1485, %v1486
        %v1488 = vrot.slane %v337, 1
        %v1489 = vsel %vm1484, %v1486, %v1488
        %v1490 = vrot.slane %v338, 1
        %v1491 = vsel %vm1484, %v1488, %v1490
        %v1492 = vrot.slane %v339, 1
        %v1493 = vsel %vm1484, %v1490, %v1492
        %v1494 = vrot.slane %v340, 1
        %v1495 = vsel %vm1484, %v1492, %v1494
        %v1496 = vrot.slane %v341, 1
        %v1497 = vsel %vm1484, %v1494, %v1496
        %v1498 = vrot.slane %v342, 1
        %v1499 = vsel %vm1484, %v1496, %v1498
        %v1500 = vrot.slane %v343, 1
        %v1501 = vsel %vm1484, %v1498, %v1500
        %v1502 = vrot.slane %v344, 1
        %v1503 = vsel %vm1484, %v1500, %v1502
        %v1504 = vrot.slane %v345, 1
        %v1505 = vsel %vm1484, %v1502, %v1504
        %v1506 = vrot.slane %v346, 1
        %v1507 = vsel %vm1484, %v1504, %v1506
        %v1508 = vrot.slane %v347, 1
        %v1509 = vsel %vm1484, %v1506, %v1508
        %v1510 = vrot.slane %v348, 1
        %v1511 = vsel %vm1484, %v1508, %v1510
        %v1512 = vrot.slane %v349, 1
        %v1513 = vsel %vm1484, %v1510, %v1512
        %v1514 = vrot.slane %v350, 1
        %v1515 = vsel %vm1484, %v1512, %v1514
        %v1516 = vrot.slane %v351, 1
        %v1517 = vsel %vm1484, %v1514, %v1516
        %v1518 = vrot.slane %v352, 1
        %v1519 = vsel %vm1484, %v1516, %v1518
        %v1520 = vrot.slane %v353, 1
        %v1521 = vsel %vm1484, %v1518, %v1520
        %v1522 = vrot.slane %v354, 1
        %v1523 = vsel %vm1484, %v1520, %v1522
        %v1524 = vrot.slane %v355, 1
        %v1525 = vsel %vm1484, %v1522, %v1524
        %v1526 = vrot.slane %v356, 1
        %v1527 = vsel %vm1484, %v1524, %v1526
        %v1528 = vrot.slane %v357, 1
        %v1529 = vsel %vm1484, %v1526, %v1528
        %v1530 = vrot.slane %v358, 1
        %v1531 = vsel %vm1484, %v1528, %v1530
        %v1532 = vrot.slane %v359, 1
        %v1533 = vsel %vm1484, %v1530, %v1532
        %v1534 = vrot.slane %v360, 1
        %v1535 = vsel %vm1484, %v1532, %v1534
        %v1536 = vrot.slane %v361, 1
        %v1537 = vsel %vm1484, %v1534, %v1536
        %v1538 = vrot.slane %v362, 1
        %v1539 = vsel %vm1484, %v1536, %v1538
        %v1540 = vrot.slane %v363, 1
        %v1541 = vsel %vm1484, %v1538, %v1540
        %v1542 = vrot.slane %v364, 1
        %v1543 = vsel %vm1484, %v1540, %v1542
        %v1544 = vrot.slane %v365, 1
        %v1545 = vsel %vm1484, %v1542, %v1544
        %v1546 = vrot.slane %v366, 1
        %v1547 = vsel %vm1484, %v1544, %v1546
        %v1548 = vrot.slane %v367, 1
        %v1549 = vsel %vm1484, %v1546, %v1548
        %v1582 = vsel %vm1451, %v1487, 0.0
        %v1583 = vsel %vm1452, %v1489, 0.0
        %v1584 = vsel %vm1453, %v1491, 0.0
        %v1585 = vsel %vm1454, %v1493, 0.0
        %v1586 = vsel %vm1455, %v1495, 0.0
        %v1587 = vsel %vm1456, %v1497, 0.0
        %v1588 = vsel %vm1457, %v1499, 0.0
        %v1589 = vsel %vm1458, %v1501, 0.0
        %v1590 = vsel %vm1459, %v1503, 0.0
        %v1591 = vsel %vm1460, %v1505, 0.0
        %v1592 = vsel %vm1461, %v1507, 0.0
        %v1593 = vsel %vm1462, %v1509, 0.0
        %v1594 = vsel %vm1463, %v1511, 0.0
        %v1595 = vsel %vm1464, %v1513, 0.0
        %v1596 = vsel %vm1465, %v1515, 0.0
        %v1597 = vsel %vm1466, %v1517, 0.0
        %v1598 = vsel %vm1467, %v1519, 0.0
        %v1599 = vsel %vm1468, %v1521, 0.0
        %v1600 = vsel %vm1469, %v1523, 0.0
        %v1601 = vsel %vm1470, %v1525, 0.0
        %v1602 = vsel %vm1471, %v1527, 0.0
        %v1603 = vsel %vm1472, %v1529, 0.0
        %v1604 = vsel %vm1473, %v1531, 0.0
        %v1605 = vsel %vm1474, %v1533, 0.0
        %v1606 = vsel %vm1475, %v1535, 0.0
        %v1607 = vsel %vm1476, %v1537, 0.0
        %v1608 = vsel %vm1477, %v1539, 0.0
        %v1609 = vsel %vm1478, %v1541, 0.0
        %v1610 = vsel %vm1479, %v1543, 0.0
        %v1611 = vsel %vm1480, %v1545, 0.0
        %v1612 = vsel %vm1481, %v1547, 0.0
        %v1613 = vsel %vm1482, %v1549, 0.0
        %v1614 = vpack.c.bf16 %v1583, %v1582
        %v1615 = vpack.c.bf16 %v1585, %v1584
        %v1616 = vpack.c.bf16 %v1587, %v1586
        %v1617 = vpack.c.bf16 %v1589, %v1588
        %v1618 = vpack.c.bf16 %v1591, %v1590
        %v1619 = vpack.c.bf16 %v1593, %v1592
        %v1620 = vpack.c.bf16 %v1595, %v1594
        %v1621 = vpack.c.bf16 %v1597, %v1596
        %v1622 = vpack.c.bf16 %v1599, %v1598
        %v1623 = vpack.c.bf16 %v1601, %v1600
        %v1624 = vpack.c.bf16 %v1603, %v1602
        %v1625 = vpack.c.bf16 %v1605, %v1604
        %v1626 = vpack.c.bf16 %v1607, %v1606
        %v1627 = vpack.c.bf16 %v1609, %v1608
        %v1628 = vpack.c.bf16 %v1611, %v1610
        %v1629 = vpack.c.bf16 %v1613, %v1612
        %s1630 = scalar_lea.vmem %s208, 128 [#allocation3]
        %v1631 = vld [vmem:[%s1630] sm:$0xf]
        %v1632 = vld [vmem:[%s1630 + $0x4] sm:$0xf]
        %v1633 = vld [vmem:[%s1630 + $0x8] sm:$0xf]
        %v1634 = vld [vmem:[%s1630 + $0xc] sm:$0xf]
        %v1635 = vld [vmem:[%s1630 + $0x10] sm:$0xf]
        %v1636 = vld [vmem:[%s1630 + $0x14] sm:$0xf]
        %v1637 = vld [vmem:[%s1630 + $0x18] sm:$0xf]
        %v1638 = vld [vmem:[%s1630 + $0x1c] sm:$0xf]
        %v1639 = vld [vmem:[%s1630 + $0x20] sm:$0xf]
        %v1640 = vld [vmem:[%s1630 + $0x24] sm:$0xf]
        %v1641 = vld [vmem:[%s1630 + $0x28] sm:$0xf]
        %v1642 = vld [vmem:[%s1630 + $0x2c] sm:$0xf]
        %v1643 = vld [vmem:[%s1630 + $0x30] sm:$0xf]
        %v1644 = vld [vmem:[%s1630 + $0x34] sm:$0xf]
        %v1645 = vld [vmem:[%s1630 + $0x38] sm:$0xf]
        %v1646 = vld [vmem:[%s1630 + $0x3c] sm:$0xf]
        %v1663 = vunpack.c.l.b16 %v1631
        %v1664 = vunpack.c.l.b16 %v1632
        %v1665 = vunpack.c.l.b16 %v1633
        %v1666 = vunpack.c.l.b16 %v1634
        %v1667 = vunpack.c.l.b16 %v1635
        %v1668 = vunpack.c.l.b16 %v1636
        %v1669 = vunpack.c.l.b16 %v1637
        %v1670 = vunpack.c.l.b16 %v1638
        %v1671 = vunpack.c.l.b16 %v1639
        %v1672 = vunpack.c.l.b16 %v1640
        %v1673 = vunpack.c.l.b16 %v1641
        %v1674 = vunpack.c.l.b16 %v1642
        %v1675 = vunpack.c.l.b16 %v1643
        %v1676 = vunpack.c.l.b16 %v1644
        %v1677 = vunpack.c.l.b16 %v1645
        %v1678 = vunpack.c.l.b16 %v1646
        %v1679 = vpack.c.b16 %v1664, %v1663
        %v1680 = vpack.c.b16 %v1666, %v1665
        %v1681 = vpack.c.b16 %v1668, %v1667
        %v1682 = vpack.c.b16 %v1670, %v1669
        %v1683 = vpack.c.b16 %v1672, %v1671
        %v1684 = vpack.c.b16 %v1674, %v1673
        %v1685 = vpack.c.b16 %v1676, %v1675
        %v1686 = vpack.c.b16 %v1678, %v1677
        %1695 = vmatpush.bf16.msra.mxu0 %v1686
        %1696 = vmatpush.bf16.msra.mxu0 %v1685
        %1697 = vmatpush.bf16.msra.mxu0 %v1684
        %1698 = vmatpush.bf16.msra.mxu0 %v1683
        %1699 = vmatpush.bf16.msra.mxu0 %v1682
        %1700 = vmatpush.bf16.msra.mxu0 %v1681
        %1701 = vmatpush.bf16.msra.mxu0 %v1680
        %1702 = vmatpush.bf16.msra.mxu0 %v1679
        %1703 = vmatmul.bf16.gmra.mxu0 %v1614
        %v1704 = vpop.f32.mrf.mxu0
        %v1705 = vadd.f32 0.0, %v1704
        %v1706 = vpop.f32.mrf.mxu0
        %v1707 = vadd.f32 0.0, %v1706
        %1708 = vmatmul.bf16.gmra.mxu0 %v1615
        %v1709 = vpop.f32.mrf.mxu0
        %v1710 = vadd.f32 0.0, %v1709
        %v1711 = vpop.f32.mrf.mxu0
        %v1712 = vadd.f32 0.0, %v1711
        %1713 = vmatmul.bf16.gmra.mxu0 %v1616
        %v1714 = vpop.f32.mrf.mxu0
        %v1715 = vadd.f32 0.0, %v1714
        %v1716 = vpop.f32.mrf.mxu0
        %v1717 = vadd.f32 0.0, %v1716
        %1718 = vmatmul.bf16.gmra.mxu0 %v1617
        %v1719 = vpop.f32.mrf.mxu0
        %v1720 = vadd.f32 0.0, %v1719
        %v1721 = vpop.f32.mrf.mxu0
        %v1722 = vadd.f32 0.0, %v1721
        %1723 = vmatmul.bf16.gmra.mxu0 %v1618
        %v1724 = vpop.f32.mrf.mxu0
        %v1725 = vadd.f32 0.0, %v1724
        %v1726 = vpop.f32.mrf.mxu0
        %v1727 = vadd.f32 0.0, %v1726
        %1728 = vmatmul.bf16.gmra.mxu0 %v1619
        %v1729 = vpop.f32.mrf.mxu0
        %v1730 = vadd.f32 0.0, %v1729
        %v1731 = vpop.f32.mrf.mxu0
        %v1732 = vadd.f32 0.0, %v1731
        %1733 = vmatmul.bf16.gmra.mxu0 %v1620
        %v1734 = vpop.f32.mrf.mxu0
        %v1735 = vadd.f32 0.0, %v1734
        %v1736 = vpop.f32.mrf.mxu0
        %v1737 = vadd.f32 0.0, %v1736
        %1738 = vmatmul.bf16.gmra.mxu0 %v1621
        %v1739 = vpop.f32.mrf.mxu0
        %v1740 = vadd.f32 0.0, %v1739
        %v1741 = vpop.f32.mrf.mxu0
        %v1742 = vadd.f32 0.0, %v1741
        %1743 = vmatmul.bf16.gmra.mxu0 %v1622
        %v1744 = vpop.f32.mrf.mxu0
        %v1745 = vadd.f32 0.0, %v1744
        %v1746 = vpop.f32.mrf.mxu0
        %v1747 = vadd.f32 0.0, %v1746
        %1748 = vmatmul.bf16.gmra.mxu0 %v1623
        %v1749 = vpop.f32.mrf.mxu0
        %v1750 = vadd.f32 0.0, %v1749
        %v1751 = vpop.f32.mrf.mxu0
        %v1752 = vadd.f32 0.0, %v1751
        %1753 = vmatmul.bf16.gmra.mxu0 %v1624
        %v1754 = vpop.f32.mrf.mxu0
        %v1755 = vadd.f32 0.0, %v1754
        %v1756 = vpop.f32.mrf.mxu0
        %v1757 = vadd.f32 0.0, %v1756
        %1758 = vmatmul.bf16.gmra.mxu0 %v1625
        %v1759 = vpop.f32.mrf.mxu0
        %v1760 = vadd.f32 0.0, %v1759
        %v1761 = vpop.f32.mrf.mxu0
        %v1762 = vadd.f32 0.0, %v1761
        %1763 = vmatmul.bf16.gmra.mxu0 %v1626
        %v1764 = vpop.f32.mrf.mxu0
        %v1765 = vadd.f32 0.0, %v1764
        %v1766 = vpop.f32.mrf.mxu0
        %v1767 = vadd.f32 0.0, %v1766
        %1768 = vmatmul.bf16.gmra.mxu0 %v1627
        %v1769 = vpop.f32.mrf.mxu0
        %v1770 = vadd.f32 0.0, %v1769
        %v1771 = vpop.f32.mrf.mxu0
        %v1772 = vadd.f32 0.0, %v1771
        %1773 = vmatmul.bf16.gmra.mxu0 %v1628
        %v1774 = vpop.f32.mrf.mxu0
        %v1775 = vadd.f32 0.0, %v1774
        %v1776 = vpop.f32.mrf.mxu0
        %v1777 = vadd.f32 0.0, %v1776
        %1778 = vmatmul.bf16.gmra.mxu0 %v1629
        %v1779 = vpop.f32.mrf.mxu0
        %v1780 = vadd.f32 0.0, %v1779
        %v1781 = vpop.f32.mrf.mxu0
        %v1782 = vadd.f32 0.0, %v1781
        %1783 = vdwg.mxu0
        %v1784 = vadd.f32 %v1340, %v1705
        %v1785 = vadd.f32 %v1342, %v1707
        %v1786 = vadd.f32 %v1345, %v1710
        %v1787 = vadd.f32 %v1347, %v1712
        %v1788 = vadd.f32 %v1350, %v1715
        %v1789 = vadd.f32 %v1352, %v1717
        %v1790 = vadd.f32 %v1355, %v1720
        %v1791 = vadd.f32 %v1357, %v1722
        %v1792 = vadd.f32 %v1360, %v1725
        %v1793 = vadd.f32 %v1362, %v1727
        %v1794 = vadd.f32 %v1365, %v1730
        %v1795 = vadd.f32 %v1367, %v1732
        %v1796 = vadd.f32 %v1370, %v1735
        %v1797 = vadd.f32 %v1372, %v1737
        %v1798 = vadd.f32 %v1375, %v1740
        %v1799 = vadd.f32 %v1377, %v1742
        %v1800 = vadd.f32 %v1380, %v1745
        %v1801 = vadd.f32 %v1382, %v1747
        %v1802 = vadd.f32 %v1385, %v1750
        %v1803 = vadd.f32 %v1387, %v1752
        %v1804 = vadd.f32 %v1390, %v1755
        %v1805 = vadd.f32 %v1392, %v1757
        %v1806 = vadd.f32 %v1395, %v1760
        %v1807 = vadd.f32 %v1397, %v1762
        %v1808 = vadd.f32 %v1400, %v1765
        %v1809 = vadd.f32 %v1402, %v1767
        %v1810 = vadd.f32 %v1405, %v1770
        %v1811 = vadd.f32 %v1407, %v1772
        %v1812 = vadd.f32 %v1410, %v1775
        %v1813 = vadd.f32 %v1412, %v1777
        %v1814 = vadd.f32 %v1415, %v1780
        %v1815 = vadd.f32 %v1417, %v1782
        %v1817 = vrot.slane %v367, 7
        %v1818 = vsel %vm950, %v1014, %v1817
        %v1819 = vrot.slane %v368, 7
        %v1820 = vsel %vm950, %v1817, %v1819
        %v1823 = vsel %vm885, %v957, 0.0
        %v1824 = vsel %vm886, %v959, 0.0
        %v1825 = vsel %vm887, %v961, 0.0
        %v1826 = vsel %vm888, %v963, 0.0
        %v1827 = vsel %vm889, %v965, 0.0
        %v1828 = vsel %vm890, %v967, 0.0
        %v1829 = vsel %vm891, %v969, 0.0
        %v1830 = vsel %vm892, %v971, 0.0
        %v1831 = vsel %vm893, %v973, 0.0
        %v1832 = vsel %vm894, %v975, 0.0
        %v1833 = vsel %vm895, %v977, 0.0
        %v1834 = vsel %vm896, %v979, 0.0
        %v1835 = vsel %vm897, %v981, 0.0
        %v1836 = vsel %vm898, %v983, 0.0
        %v1837 = vsel %vm899, %v985, 0.0
        %v1838 = vsel %vm900, %v987, 0.0
        %v1839 = vsel %vm901, %v989, 0.0
        %v1840 = vsel %vm902, %v991, 0.0
        %v1841 = vsel %vm903, %v993, 0.0
        %v1842 = vsel %vm904, %v995, 0.0
        %v1843 = vsel %vm905, %v997, 0.0
        %v1844 = vsel %vm906, %v999, 0.0
        %v1845 = vsel %vm907, %v1001, 0.0
        %v1846 = vsel %vm908, %v1003, 0.0
        %v1847 = vsel %vm909, %v1005, 0.0
        %v1848 = vsel %vm910, %v1007, 0.0
        %v1849 = vsel %vm911, %v1009, 0.0
        %v1850 = vsel %vm912, %v1011, 0.0
        %v1851 = vsel %vm913, %v1013, 0.0
        %v1852 = vsel %vm914, %v1015, 0.0
        %v1853 = vsel %vm915, %v1818, 0.0
        %v1854 = vsel %vm916, %v1820, 0.0
        %v1855 = vpack.c.bf16 %v1824, %v1823
        %v1856 = vpack.c.bf16 %v1826, %v1825
        %v1857 = vpack.c.bf16 %v1828, %v1827
        %v1858 = vpack.c.bf16 %v1830, %v1829
        %v1859 = vpack.c.bf16 %v1832, %v1831
        %v1860 = vpack.c.bf16 %v1834, %v1833
        %v1861 = vpack.c.bf16 %v1836, %v1835
        %v1862 = vpack.c.bf16 %v1838, %v1837
        %v1863 = vpack.c.bf16 %v1840, %v1839
        %v1864 = vpack.c.bf16 %v1842, %v1841
        %v1865 = vpack.c.bf16 %v1844, %v1843
        %v1866 = vpack.c.bf16 %v1846, %v1845
        %v1867 = vpack.c.bf16 %v1848, %v1847
        %v1868 = vpack.c.bf16 %v1850, %v1849
        %v1869 = vpack.c.bf16 %v1852, %v1851
        %v1870 = vpack.c.bf16 %v1854, %v1853
        %s1871 = scalar_lea.vmem %s208, 192 [#allocation3]
        %v1872 = vld [vmem:[%s1871] sm:$0xf]
        %v1873 = vld [vmem:[%s1871 + $0x4] sm:$0xf]
        %v1874 = vld [vmem:[%s1871 + $0x8] sm:$0xf]
        %v1875 = vld [vmem:[%s1871 + $0xc] sm:$0xf]
        %v1876 = vld [vmem:[%s1871 + $0x10] sm:$0xf]
        %v1877 = vld [vmem:[%s1871 + $0x14] sm:$0xf]
        %v1878 = vld [vmem:[%s1871 + $0x18] sm:$0xf]
        %v1879 = vld [vmem:[%s1871 + $0x1c] sm:$0xf]
        %v1880 = vld [vmem:[%s1871 + $0x20] sm:$0xf]
        %v1881 = vld [vmem:[%s1871 + $0x24] sm:$0xf]
        %v1882 = vld [vmem:[%s1871 + $0x28] sm:$0xf]
        %v1883 = vld [vmem:[%s1871 + $0x2c] sm:$0xf]
        %v1884 = vld [vmem:[%s1871 + $0x30] sm:$0xf]
        %v1885 = vld [vmem:[%s1871 + $0x34] sm:$0xf]
        %v1886 = vld [vmem:[%s1871 + $0x38] sm:$0xf]
        %v1887 = vld [vmem:[%s1871 + $0x3c] sm:$0xf]
        %v1904 = vunpack.c.l.b16 %v1872
        %v1905 = vunpack.c.l.b16 %v1873
        %v1906 = vunpack.c.l.b16 %v1874
        %v1907 = vunpack.c.l.b16 %v1875
        %v1908 = vunpack.c.l.b16 %v1876
        %v1909 = vunpack.c.l.b16 %v1877
        %v1910 = vunpack.c.l.b16 %v1878
        %v1911 = vunpack.c.l.b16 %v1879
        %v1912 = vunpack.c.l.b16 %v1880
        %v1913 = vunpack.c.l.b16 %v1881
        %v1914 = vunpack.c.l.b16 %v1882
        %v1915 = vunpack.c.l.b16 %v1883
        %v1916 = vunpack.c.l.b16 %v1884
        %v1917 = vunpack.c.l.b16 %v1885
        %v1918 = vunpack.c.l.b16 %v1886
        %v1919 = vunpack.c.l.b16 %v1887
        %v1920 = vpack.c.b16 %v1905, %v1904
        %v1921 = vpack.c.b16 %v1907, %v1906
        %v1922 = vpack.c.b16 %v1909, %v1908
        %v1923 = vpack.c.b16 %v1911, %v1910
        %v1924 = vpack.c.b16 %v1913, %v1912
        %v1925 = vpack.c.b16 %v1915, %v1914
        %v1926 = vpack.c.b16 %v1917, %v1916
        %v1927 = vpack.c.b16 %v1919, %v1918
        %1936 = vmatpush.bf16.msra.mxu0 %v1927
        %1937 = vmatpush.bf16.msra.mxu0 %v1926
        %1938 = vmatpush.bf16.msra.mxu0 %v1925
        %1939 = vmatpush.bf16.msra.mxu0 %v1924
        %1940 = vmatpush.bf16.msra.mxu0 %v1923
        %1941 = vmatpush.bf16.msra.mxu0 %v1922
        %1942 = vmatpush.bf16.msra.mxu0 %v1921
        %1943 = vmatpush.bf16.msra.mxu0 %v1920
        %1944 = vmatmul.bf16.gmra.mxu0 %v1855
        %v1945 = vpop.f32.mrf.mxu0
        %v1946 = vadd.f32 0.0, %v1945
        %v1947 = vpop.f32.mrf.mxu0
        %v1948 = vadd.f32 0.0, %v1947
        %1949 = vmatmul.bf16.gmra.mxu0 %v1856
        %v1950 = vpop.f32.mrf.mxu0
        %v1951 = vadd.f32 0.0, %v1950
        %v1952 = vpop.f32.mrf.mxu0
        %v1953 = vadd.f32 0.0, %v1952
        %1954 = vmatmul.bf16.gmra.mxu0 %v1857
        %v1955 = vpop.f32.mrf.mxu0
        %v1956 = vadd.f32 0.0, %v1955
        %v1957 = vpop.f32.mrf.mxu0
        %v1958 = vadd.f32 0.0, %v1957
        %1959 = vmatmul.bf16.gmra.mxu0 %v1858
        %v1960 = vpop.f32.mrf.mxu0
        %v1961 = vadd.f32 0.0, %v1960
        %v1962 = vpop.f32.mrf.mxu0
        %v1963 = vadd.f32 0.0, %v1962
        %1964 = vmatmul.bf16.gmra.mxu0 %v1859
        %v1965 = vpop.f32.mrf.mxu0
        %v1966 = vadd.f32 0.0, %v1965
        %v1967 = vpop.f32.mrf.mxu0
        %v1968 = vadd.f32 0.0, %v1967
        %1969 = vmatmul.bf16.gmra.mxu0 %v1860
        %v1970 = vpop.f32.mrf.mxu0
        %v1971 = vadd.f32 0.0, %v1970
        %v1972 = vpop.f32.mrf.mxu0
        %v1973 = vadd.f32 0.0, %v1972
        %1974 = vmatmul.bf16.gmra.mxu0 %v1861
        %v1975 = vpop.f32.mrf.mxu0
        %v1976 = vadd.f32 0.0, %v1975
        %v1977 = vpop.f32.mrf.mxu0
        %v1978 = vadd.f32 0.0, %v1977
        %1979 = vmatmul.bf16.gmra.mxu0 %v1862
        %v1980 = vpop.f32.mrf.mxu0
        %v1981 = vadd.f32 0.0, %v1980
        %v1982 = vpop.f32.mrf.mxu0
        %v1983 = vadd.f32 0.0, %v1982
        %1984 = vmatmul.bf16.gmra.mxu0 %v1863
        %v1985 = vpop.f32.mrf.mxu0
        %v1986 = vadd.f32 0.0, %v1985
        %v1987 = vpop.f32.mrf.mxu0
        %v1988 = vadd.f32 0.0, %v1987
        %1989 = vmatmul.bf16.gmra.mxu0 %v1864
        %v1990 = vpop.f32.mrf.mxu0
        %v1991 = vadd.f32 0.0, %v1990
        %v1992 = vpop.f32.mrf.mxu0
        %v1993 = vadd.f32 0.0, %v1992
        %1994 = vmatmul.bf16.gmra.mxu0 %v1865
        %v1995 = vpop.f32.mrf.mxu0
        %v1996 = vadd.f32 0.0, %v1995
        %v1997 = vpop.f32.mrf.mxu0
        %v1998 = vadd.f32 0.0, %v1997
        %1999 = vmatmul.bf16.gmra.mxu0 %v1866
        %v2000 = vpop.f32.mrf.mxu0
        %v2001 = vadd.f32 0.0, %v2000
        %v2002 = vpop.f32.mrf.mxu0
        %v2003 = vadd.f32 0.0, %v2002
        %2004 = vmatmul.bf16.gmra.mxu0 %v1867
        %v2005 = vpop.f32.mrf.mxu0
        %v2006 = vadd.f32 0.0, %v2005
        %v2007 = vpop.f32.mrf.mxu0
        %v2008 = vadd.f32 0.0, %v2007
        %2009 = vmatmul.bf16.gmra.mxu0 %v1868
        %v2010 = vpop.f32.mrf.mxu0
        %v2011 = vadd.f32 0.0, %v2010
        %v2012 = vpop.f32.mrf.mxu0
        %v2013 = vadd.f32 0.0, %v2012
        %2014 = vmatmul.bf16.gmra.mxu0 %v1869
        %v2015 = vpop.f32.mrf.mxu0
        %v2016 = vadd.f32 0.0, %v2015
        %v2017 = vpop.f32.mrf.mxu0
        %v2018 = vadd.f32 0.0, %v2017
        %2019 = vmatmul.bf16.gmra.mxu0 %v1870
        %v2020 = vpop.f32.mrf.mxu0
        %v2021 = vadd.f32 0.0, %v2020
        %v2022 = vpop.f32.mrf.mxu0
        %v2023 = vadd.f32 0.0, %v2022
        %2024 = vdwg.mxu0
        %v2025 = vadd.f32 %v1784, %v1946
        %v2026 = vadd.f32 %v1785, %v1948
        %v2027 = vadd.f32 %v1786, %v1951
        %v2028 = vadd.f32 %v1787, %v1953
        %v2029 = vadd.f32 %v1788, %v1956
        %v2030 = vadd.f32 %v1789, %v1958
        %v2031 = vadd.f32 %v1790, %v1961
        %v2032 = vadd.f32 %v1791, %v1963
        %v2033 = vadd.f32 %v1792, %v1966
        %v2034 = vadd.f32 %v1793, %v1968
        %v2035 = vadd.f32 %v1794, %v1971
        %v2036 = vadd.f32 %v1795, %v1973
        %v2037 = vadd.f32 %v1796, %v1976
        %v2038 = vadd.f32 %v1797, %v1978
        %v2039 = vadd.f32 %v1798, %v1981
        %v2040 = vadd.f32 %v1799, %v1983
        %v2041 = vadd.f32 %v1800, %v1986
        %v2042 = vadd.f32 %v1801, %v1988
        %v2043 = vadd.f32 %v1802, %v1991
        %v2044 = vadd.f32 %v1803, %v1993
        %v2045 = vadd.f32 %v1804, %v1996
        %v2046 = vadd.f32 %v1805, %v1998
        %v2047 = vadd.f32 %v1806, %v2001
        %v2048 = vadd.f32 %v1807, %v2003
        %v2049 = vadd.f32 %v1808, %v2006
        %v2050 = vadd.f32 %v1809, %v2008
        %v2051 = vadd.f32 %v1810, %v2011
        %v2052 = vadd.f32 %v1811, %v2013
        %v2053 = vadd.f32 %v1812, %v2016
        %v2054 = vadd.f32 %v1813, %v2018
        %v2055 = vadd.f32 %v1814, %v2021
        %v2056 = vadd.f32 %v1815, %v2023
        %v2057 = vpack.c.bf16 %v368, %v367
        %s2058 = scalar_lea.vmem %s208, 256 [#allocation3]
        %v2059 = vld [vmem:[%s2058] sm:$0xf]
        %v2060 = vld [vmem:[%s2058 + $0x4] sm:$0xf]
        %v2061 = vld [vmem:[%s2058 + $0x8] sm:$0xf]
        %v2062 = vld [vmem:[%s2058 + $0xc] sm:$0xf]
        %v2063 = vld [vmem:[%s2058 + $0x10] sm:$0xf]
        %v2064 = vld [vmem:[%s2058 + $0x14] sm:$0xf]
        %v2065 = vld [vmem:[%s2058 + $0x18] sm:$0xf]
        %v2066 = vld [vmem:[%s2058 + $0x1c] sm:$0xf]
        %v2067 = vld [vmem:[%s2058 + $0x20] sm:$0xf]
        %v2068 = vld [vmem:[%s2058 + $0x24] sm:$0xf]
        %v2069 = vld [vmem:[%s2058 + $0x28] sm:$0xf]
        %v2070 = vld [vmem:[%s2058 + $0x2c] sm:$0xf]
        %v2071 = vld [vmem:[%s2058 + $0x30] sm:$0xf]
        %v2072 = vld [vmem:[%s2058 + $0x34] sm:$0xf]
        %v2073 = vld [vmem:[%s2058 + $0x38] sm:$0xf]
        %v2074 = vld [vmem:[%s2058 + $0x3c] sm:$0xf]
        %v2091 = vunpack.c.l.b16 %v2059
        %v2092 = vunpack.c.l.b16 %v2060
        %v2093 = vunpack.c.l.b16 %v2061
        %v2094 = vunpack.c.l.b16 %v2062
        %v2095 = vunpack.c.l.b16 %v2063
        %v2096 = vunpack.c.l.b16 %v2064
        %v2097 = vunpack.c.l.b16 %v2065
        %v2098 = vunpack.c.l.b16 %v2066
        %v2099 = vunpack.c.l.b16 %v2067
        %v2100 = vunpack.c.l.b16 %v2068
        %v2101 = vunpack.c.l.b16 %v2069
        %v2102 = vunpack.c.l.b16 %v2070
        %v2103 = vunpack.c.l.b16 %v2071
        %v2104 = vunpack.c.l.b16 %v2072
        %v2105 = vunpack.c.l.b16 %v2073
        %v2106 = vunpack.c.l.b16 %v2074
        %v2107 = vpack.c.b16 %v2092, %v2091
        %v2108 = vpack.c.b16 %v2094, %v2093
        %v2109 = vpack.c.b16 %v2096, %v2095
        %v2110 = vpack.c.b16 %v2098, %v2097
        %v2111 = vpack.c.b16 %v2100, %v2099
        %v2112 = vpack.c.b16 %v2102, %v2101
        %v2113 = vpack.c.b16 %v2104, %v2103
        %v2114 = vpack.c.b16 %v2106, %v2105
        %2123 = vmatpush.bf16.msra.mxu0 %v2114
        %2124 = vmatpush.bf16.msra.mxu0 %v2113
        %2125 = vmatpush.bf16.msra.mxu0 %v2112
        %2126 = vmatpush.bf16.msra.mxu0 %v2111
        %2127 = vmatpush.bf16.msra.mxu0 %v2110
        %2128 = vmatpush.bf16.msra.mxu0 %v2109
        %2129 = vmatpush.bf16.msra.mxu0 %v2108
        %2130 = vmatpush.bf16.msra.mxu0 %v2107
        %2131 = vmatmul.bf16.gmra.mxu0 %v1113
        %v2132 = vpop.f32.mrf.mxu0
        %v2133 = vadd.f32 0.0, %v2132
        %v2134 = vpop.f32.mrf.mxu0
        %v2135 = vadd.f32 0.0, %v2134
        %2136 = vmatmul.bf16.gmra.mxu0 %v1114
        %v2137 = vpop.f32.mrf.mxu0
        %v2138 = vadd.f32 0.0, %v2137
        %v2139 = vpop.f32.mrf.mxu0
        %v2140 = vadd.f32 0.0, %v2139
        %2141 = vmatmul.bf16.gmra.mxu0 %v1115
        %v2142 = vpop.f32.mrf.mxu0
        %v2143 = vadd.f32 0.0, %v2142
        %v2144 = vpop.f32.mrf.mxu0
        %v2145 = vadd.f32 0.0, %v2144
        %2146 = vmatmul.bf16.gmra.mxu0 %v1116
        %v2147 = vpop.f32.mrf.mxu0
        %v2148 = vadd.f32 0.0, %v2147
        %v2149 = vpop.f32.mrf.mxu0
        %v2150 = vadd.f32 0.0, %v2149
        %2151 = vmatmul.bf16.gmra.mxu0 %v1117
        %v2152 = vpop.f32.mrf.mxu0
        %v2153 = vadd.f32 0.0, %v2152
        %v2154 = vpop.f32.mrf.mxu0
        %v2155 = vadd.f32 0.0, %v2154
        %2156 = vmatmul.bf16.gmra.mxu0 %v1118
        %v2157 = vpop.f32.mrf.mxu0
        %v2158 = vadd.f32 0.0, %v2157
        %v2159 = vpop.f32.mrf.mxu0
        %v2160 = vadd.f32 0.0, %v2159
        %2161 = vmatmul.bf16.gmra.mxu0 %v1119
        %v2162 = vpop.f32.mrf.mxu0
        %v2163 = vadd.f32 0.0, %v2162
        %v2164 = vpop.f32.mrf.mxu0
        %v2165 = vadd.f32 0.0, %v2164
        %2166 = vmatmul.bf16.gmra.mxu0 %v1120
        %v2167 = vpop.f32.mrf.mxu0
        %v2168 = vadd.f32 0.0, %v2167
        %v2169 = vpop.f32.mrf.mxu0
        %v2170 = vadd.f32 0.0, %v2169
        %2171 = vmatmul.bf16.gmra.mxu0 %v1121
        %v2172 = vpop.f32.mrf.mxu0
        %v2173 = vadd.f32 0.0, %v2172
        %v2174 = vpop.f32.mrf.mxu0
        %v2175 = vadd.f32 0.0, %v2174
        %2176 = vmatmul.bf16.gmra.mxu0 %v1122
        %v2177 = vpop.f32.mrf.mxu0
        %v2178 = vadd.f32 0.0, %v2177
        %v2179 = vpop.f32.mrf.mxu0
        %v2180 = vadd.f32 0.0, %v2179
        %2181 = vmatmul.bf16.gmra.mxu0 %v1123
        %v2182 = vpop.f32.mrf.mxu0
        %v2183 = vadd.f32 0.0, %v2182
        %v2184 = vpop.f32.mrf.mxu0
        %v2185 = vadd.f32 0.0, %v2184
        %2186 = vmatmul.bf16.gmra.mxu0 %v1124
        %v2187 = vpop.f32.mrf.mxu0
        %v2188 = vadd.f32 0.0, %v2187
        %v2189 = vpop.f32.mrf.mxu0
        %v2190 = vadd.f32 0.0, %v2189
        %2191 = vmatmul.bf16.gmra.mxu0 %v1125
        %v2192 = vpop.f32.mrf.mxu0
        %v2193 = vadd.f32 0.0, %v2192
        %v2194 = vpop.f32.mrf.mxu0
        %v2195 = vadd.f32 0.0, %v2194
        %2196 = vmatmul.bf16.gmra.mxu0 %v1126
        %v2197 = vpop.f32.mrf.mxu0
        %v2198 = vadd.f32 0.0, %v2197
        %v2199 = vpop.f32.mrf.mxu0
        %v2200 = vadd.f32 0.0, %v2199
        %2201 = vmatmul.bf16.gmra.mxu0 %v1127
        %v2202 = vpop.f32.mrf.mxu0
        %v2203 = vadd.f32 0.0, %v2202
        %v2204 = vpop.f32.mrf.mxu0
        %v2205 = vadd.f32 0.0, %v2204
        %2206 = vmatmul.bf16.gmra.mxu0 %v2057
        %v2207 = vpop.f32.mrf.mxu0
        %v2208 = vadd.f32 0.0, %v2207
        %v2209 = vpop.f32.mrf.mxu0
        %v2210 = vadd.f32 0.0, %v2209
        %2211 = vdwg.mxu0
        %v2212 = vadd.f32 %v2025, %v2133
        %v2213 = vadd.f32 %v2026, %v2135
        %v2214 = vadd.f32 %v2027, %v2138
        %v2215 = vadd.f32 %v2028, %v2140
        %v2216 = vadd.f32 %v2029, %v2143
        %v2217 = vadd.f32 %v2030, %v2145
        %v2218 = vadd.f32 %v2031, %v2148
        %v2219 = vadd.f32 %v2032, %v2150
        %v2220 = vadd.f32 %v2033, %v2153
        %v2221 = vadd.f32 %v2034, %v2155
        %v2222 = vadd.f32 %v2035, %v2158
        %v2223 = vadd.f32 %v2036, %v2160
        %v2224 = vadd.f32 %v2037, %v2163
        %v2225 = vadd.f32 %v2038, %v2165
        %v2226 = vadd.f32 %v2039, %v2168
        %v2227 = vadd.f32 %v2040, %v2170
        %v2228 = vadd.f32 %v2041, %v2173
        %v2229 = vadd.f32 %v2042, %v2175
        %v2230 = vadd.f32 %v2043, %v2178
        %v2231 = vadd.f32 %v2044, %v2180
        %v2232 = vadd.f32 %v2045, %v2183
        %v2233 = vadd.f32 %v2046, %v2185
        %v2234 = vadd.f32 %v2047, %v2188
        %v2235 = vadd.f32 %v2048, %v2190
        %v2236 = vadd.f32 %v2049, %v2193
        %v2237 = vadd.f32 %v2050, %v2195
        %v2238 = vadd.f32 %v2051, %v2198
        %v2239 = vadd.f32 %v2052, %v2200
        %v2240 = vadd.f32 %v2053, %v2203
        %v2241 = vadd.f32 %v2054, %v2205
        %v2242 = vadd.f32 %v2055, %v2208
        %v2243 = vadd.f32 %v2056, %v2210
        %v2245 = vrot.slane %v368, 1
        %v2246 = vsel %vm1484, %v1548, %v2245
        %v2247 = vrot.slane %v369, 1
        %v2248 = vsel %vm1484, %v2245, %v2247
        %v2251 = vsel %vm1451, %v1491, 0.0
        %v2252 = vsel %vm1452, %v1493, 0.0
        %v2253 = vsel %vm1453, %v1495, 0.0
        %v2254 = vsel %vm1454, %v1497, 0.0
        %v2255 = vsel %vm1455, %v1499, 0.0
        %v2256 = vsel %vm1456, %v1501, 0.0
        %v2257 = vsel %vm1457, %v1503, 0.0
        %v2258 = vsel %vm1458, %v1505, 0.0
        %v2259 = vsel %vm1459, %v1507, 0.0
        %v2260 = vsel %vm1460, %v1509, 0.0
        %v2261 = vsel %vm1461, %v1511, 0.0
        %v2262 = vsel %vm1462, %v1513, 0.0
        %v2263 = vsel %vm1463, %v1515, 0.0
        %v2264 = vsel %vm1464, %v1517, 0.0
        %v2265 = vsel %vm1465, %v1519, 0.0
        %v2266 = vsel %vm1466, %v1521, 0.0
        %v2267 = vsel %vm1467, %v1523, 0.0
        %v2268 = vsel %vm1468, %v1525, 0.0
        %v2269 = vsel %vm1469, %v1527, 0.0
        %v2270 = vsel %vm1470, %v1529, 0.0
        %v2271 = vsel %vm1471, %v1531, 0.0
        %v2272 = vsel %vm1472, %v1533, 0.0
        %v2273 = vsel %vm1473, %v1535, 0.0
        %v2274 = vsel %vm1474, %v1537, 0.0
        %v2275 = vsel %vm1475, %v1539, 0.0
        %v2276 = vsel %vm1476, %v1541, 0.0
        %v2277 = vsel %vm1477, %v1543, 0.0
        %v2278 = vsel %vm1478, %v1545, 0.0
        %v2279 = vsel %vm1479, %v1547, 0.0
        %v2280 = vsel %vm1480, %v1549, 0.0
        %v2281 = vsel %vm1481, %v2246, 0.0
        %v2282 = vsel %vm1482, %v2248, 0.0
        %v2283 = vpack.c.bf16 %v2252, %v2251
        %v2284 = vpack.c.bf16 %v2254, %v2253
        %v2285 = vpack.c.bf16 %v2256, %v2255
        %v2286 = vpack.c.bf16 %v2258, %v2257
        %v2287 = vpack.c.bf16 %v2260, %v2259
        %v2288 = vpack.c.bf16 %v2262, %v2261
        %v2289 = vpack.c.bf16 %v2264, %v2263
        %v2290 = vpack.c.bf16 %v2266, %v2265
        %v2291 = vpack.c.bf16 %v2268, %v2267
        %v2292 = vpack.c.bf16 %v2270, %v2269
        %v2293 = vpack.c.bf16 %v2272, %v2271
        %v2294 = vpack.c.bf16 %v2274, %v2273
        %v2295 = vpack.c.bf16 %v2276, %v2275
        %v2296 = vpack.c.bf16 %v2278, %v2277
        %v2297 = vpack.c.bf16 %v2280, %v2279
        %v2298 = vpack.c.bf16 %v2282, %v2281
        %s2299 = scalar_lea.vmem %s208, 320 [#allocation3]
        %v2300 = vld [vmem:[%s2299] sm:$0xf]
        %v2301 = vld [vmem:[%s2299 + $0x4] sm:$0xf]
        %v2302 = vld [vmem:[%s2299 + $0x8] sm:$0xf]
        %v2303 = vld [vmem:[%s2299 + $0xc] sm:$0xf]
        %v2304 = vld [vmem:[%s2299 + $0x10] sm:$0xf]
        %v2305 = vld [vmem:[%s2299 + $0x14] sm:$0xf]
        %v2306 = vld [vmem:[%s2299 + $0x18] sm:$0xf]
        %v2307 = vld [vmem:[%s2299 + $0x1c] sm:$0xf]
        %v2308 = vld [vmem:[%s2299 + $0x20] sm:$0xf]
        %v2309 = vld [vmem:[%s2299 + $0x24] sm:$0xf]
        %v2310 = vld [vmem:[%s2299 + $0x28] sm:$0xf]
        %v2311 = vld [vmem:[%s2299 + $0x2c] sm:$0xf]
        %v2312 = vld [vmem:[%s2299 + $0x30] sm:$0xf]
        %v2313 = vld [vmem:[%s2299 + $0x34] sm:$0xf]
        %v2314 = vld [vmem:[%s2299 + $0x38] sm:$0xf]
        %v2315 = vld [vmem:[%s2299 + $0x3c] sm:$0xf]
        %v2332 = vunpack.c.l.b16 %v2300
        %v2333 = vunpack.c.l.b16 %v2301
        %v2334 = vunpack.c.l.b16 %v2302
        %v2335 = vunpack.c.l.b16 %v2303
        %v2336 = vunpack.c.l.b16 %v2304
        %v2337 = vunpack.c.l.b16 %v2305
        %v2338 = vunpack.c.l.b16 %v2306
        %v2339 = vunpack.c.l.b16 %v2307
        %v2340 = vunpack.c.l.b16 %v2308
        %v2341 = vunpack.c.l.b16 %v2309
        %v2342 = vunpack.c.l.b16 %v2310
        %v2343 = vunpack.c.l.b16 %v2311
        %v2344 = vunpack.c.l.b16 %v2312
        %v2345 = vunpack.c.l.b16 %v2313
        %v2346 = vunpack.c.l.b16 %v2314
        %v2347 = vunpack.c.l.b16 %v2315
        %v2348 = vpack.c.b16 %v2333, %v2332
        %v2349 = vpack.c.b16 %v2335, %v2334
        %v2350 = vpack.c.b16 %v2337, %v2336
        %v2351 = vpack.c.b16 %v2339, %v2338
        %v2352 = vpack.c.b16 %v2341, %v2340
        %v2353 = vpack.c.b16 %v2343, %v2342
        %v2354 = vpack.c.b16 %v2345, %v2344
        %v2355 = vpack.c.b16 %v2347, %v2346
        %2364 = vmatpush.bf16.msra.mxu0 %v2355
        %2365 = vmatpush.bf16.msra.mxu0 %v2354
        %2366 = vmatpush.bf16.msra.mxu0 %v2353
        %2367 = vmatpush.bf16.msra.mxu0 %v2352
        %2368 = vmatpush.bf16.msra.mxu0 %v2351
        %2369 = vmatpush.bf16.msra.mxu0 %v2350
        %2370 = vmatpush.bf16.msra.mxu0 %v2349
        %2371 = vmatpush.bf16.msra.mxu0 %v2348
        %2372 = vmatmul.bf16.gmra.mxu0 %v2283
        %v2373 = vpop.f32.mrf.mxu0
        %v2374 = vadd.f32 0.0, %v2373
        %v2375 = vpop.f32.mrf.mxu0
        %v2376 = vadd.f32 0.0, %v2375
        %2377 = vmatmul.bf16.gmra.mxu0 %v2284
        %v2378 = vpop.f32.mrf.mxu0
        %v2379 = vadd.f32 0.0, %v2378
        %v2380 = vpop.f32.mrf.mxu0
        %v2381 = vadd.f32 0.0, %v2380
        %2382 = vmatmul.bf16.gmra.mxu0 %v2285
        %v2383 = vpop.f32.mrf.mxu0
        %v2384 = vadd.f32 0.0, %v2383
        %v2385 = vpop.f32.mrf.mxu0
        %v2386 = vadd.f32 0.0, %v2385
        %2387 = vmatmul.bf16.gmra.mxu0 %v2286
        %v2388 = vpop.f32.mrf.mxu0
        %v2389 = vadd.f32 0.0, %v2388
        %v2390 = vpop.f32.mrf.mxu0
        %v2391 = vadd.f32 0.0, %v2390
        %2392 = vmatmul.bf16.gmra.mxu0 %v2287
        %v2393 = vpop.f32.mrf.mxu0
        %v2394 = vadd.f32 0.0, %v2393
        %v2395 = vpop.f32.mrf.mxu0
        %v2396 = vadd.f32 0.0, %v2395
        %2397 = vmatmul.bf16.gmra.mxu0 %v2288
        %v2398 = vpop.f32.mrf.mxu0
        %v2399 = vadd.f32 0.0, %v2398
        %v2400 = vpop.f32.mrf.mxu0
        %v2401 = vadd.f32 0.0, %v2400
        %2402 = vmatmul.bf16.gmra.mxu0 %v2289
        %v2403 = vpop.f32.mrf.mxu0
        %v2404 = vadd.f32 0.0, %v2403
        %v2405 = vpop.f32.mrf.mxu0
        %v2406 = vadd.f32 0.0, %v2405
        %2407 = vmatmul.bf16.gmra.mxu0 %v2290
        %v2408 = vpop.f32.mrf.mxu0
        %v2409 = vadd.f32 0.0, %v2408
        %v2410 = vpop.f32.mrf.mxu0
        %v2411 = vadd.f32 0.0, %v2410
        %2412 = vmatmul.bf16.gmra.mxu0 %v2291
        %v2413 = vpop.f32.mrf.mxu0
        %v2414 = vadd.f32 0.0, %v2413
        %v2415 = vpop.f32.mrf.mxu0
        %v2416 = vadd.f32 0.0, %v2415
        %2417 = vmatmul.bf16.gmra.mxu0 %v2292
        %v2418 = vpop.f32.mrf.mxu0
        %v2419 = vadd.f32 0.0, %v2418
        %v2420 = vpop.f32.mrf.mxu0
        %v2421 = vadd.f32 0.0, %v2420
        %2422 = vmatmul.bf16.gmra.mxu0 %v2293
        %v2423 = vpop.f32.mrf.mxu0
        %v2424 = vadd.f32 0.0, %v2423
        %v2425 = vpop.f32.mrf.mxu0
        %v2426 = vadd.f32 0.0, %v2425
        %2427 = vmatmul.bf16.gmra.mxu0 %v2294
        %v2428 = vpop.f32.mrf.mxu0
        %v2429 = vadd.f32 0.0, %v2428
        %v2430 = vpop.f32.mrf.mxu0
        %v2431 = vadd.f32 0.0, %v2430
        %2432 = vmatmul.bf16.gmra.mxu0 %v2295
        %v2433 = vpop.f32.mrf.mxu0
        %v2434 = vadd.f32 0.0, %v2433
        %v2435 = vpop.f32.mrf.mxu0
        %v2436 = vadd.f32 0.0, %v2435
        %2437 = vmatmul.bf16.gmra.mxu0 %v2296
        %v2438 = vpop.f32.mrf.mxu0
        %v2439 = vadd.f32 0.0, %v2438
        %v2440 = vpop.f32.mrf.mxu0
        %v2441 = vadd.f32 0.0, %v2440
        %2442 = vmatmul.bf16.gmra.mxu0 %v2297
        %v2443 = vpop.f32.mrf.mxu0
        %v2444 = vadd.f32 0.0, %v2443
        %v2445 = vpop.f32.mrf.mxu0
        %v2446 = vadd.f32 0.0, %v2445
        %2447 = vmatmul.bf16.gmra.mxu0 %v2298
        %v2448 = vpop.f32.mrf.mxu0
        %v2449 = vadd.f32 0.0, %v2448
        %v2450 = vpop.f32.mrf.mxu0
        %v2451 = vadd.f32 0.0, %v2450
        %2452 = vdwg.mxu0
        %v2453 = vadd.f32 %v2212, %v2374
        %v2454 = vadd.f32 %v2213, %v2376
        %v2455 = vadd.f32 %v2214, %v2379
        %v2456 = vadd.f32 %v2215, %v2381
        %v2457 = vadd.f32 %v2216, %v2384
        %v2458 = vadd.f32 %v2217, %v2386
        %v2459 = vadd.f32 %v2218, %v2389
        %v2460 = vadd.f32 %v2219, %v2391
        %v2461 = vadd.f32 %v2220, %v2394
        %v2462 = vadd.f32 %v2221, %v2396
        %v2463 = vadd.f32 %v2222, %v2399
        %v2464 = vadd.f32 %v2223, %v2401
        %v2465 = vadd.f32 %v2224, %v2404
        %v2466 = vadd.f32 %v2225, %v2406
        %v2467 = vadd.f32 %v2226, %v2409
        %v2468 = vadd.f32 %v2227, %v2411
        %v2469 = vadd.f32 %v2228, %v2414
        %v2470 = vadd.f32 %v2229, %v2416
        %v2471 = vadd.f32 %v2230, %v2419
        %v2472 = vadd.f32 %v2231, %v2421
        %v2473 = vadd.f32 %v2232, %v2424
        %v2474 = vadd.f32 %v2233, %v2426
        %v2475 = vadd.f32 %v2234, %v2429
        %v2476 = vadd.f32 %v2235, %v2431
        %v2477 = vadd.f32 %v2236, %v2434
        %v2478 = vadd.f32 %v2237, %v2436
        %v2479 = vadd.f32 %v2238, %v2439
        %v2480 = vadd.f32 %v2239, %v2441
        %v2481 = vadd.f32 %v2240, %v2444
        %v2482 = vadd.f32 %v2241, %v2446
        %v2483 = vadd.f32 %v2242, %v2449
        %v2484 = vadd.f32 %v2243, %v2451
        %v2486 = vrot.slane %v369, 7
        %v2487 = vsel %vm950, %v1819, %v2486
        %v2488 = vrot.slane %v370, 7
        %v2489 = vsel %vm950, %v2486, %v2488
        %v2492 = vsel %vm885, %v961, 0.0
        %v2493 = vsel %vm886, %v963, 0.0
        %v2494 = vsel %vm887, %v965, 0.0
        %v2495 = vsel %vm888, %v967, 0.0
        %v2496 = vsel %vm889, %v969, 0.0
        %v2497 = vsel %vm890, %v971, 0.0
        %v2498 = vsel %vm891, %v973, 0.0
        %v2499 = vsel %vm892, %v975, 0.0
        %v2500 = vsel %vm893, %v977, 0.0
        %v2501 = vsel %vm894, %v979, 0.0
        %v2502 = vsel %vm895, %v981, 0.0
        %v2503 = vsel %vm896, %v983, 0.0
        %v2504 = vsel %vm897, %v985, 0.0
        %v2505 = vsel %vm898, %v987, 0.0
        %v2506 = vsel %vm899, %v989, 0.0
        %v2507 = vsel %vm900, %v991, 0.0
        %v2508 = vsel %vm901, %v993, 0.0
        %v2509 = vsel %vm902, %v995, 0.0
        %v2510 = vsel %vm903, %v997, 0.0
        %v2511 = vsel %vm904, %v999, 0.0
        %v2512 = vsel %vm905, %v1001, 0.0
        %v2513 = vsel %vm906, %v1003, 0.0
        %v2514 = vsel %vm907, %v1005, 0.0
        %v2515 = vsel %vm908, %v1007, 0.0
        %v2516 = vsel %vm909, %v1009, 0.0
        %v2517 = vsel %vm910, %v1011, 0.0
        %v2518 = vsel %vm911, %v1013, 0.0
        %v2519 = vsel %vm912, %v1015, 0.0
        %v2520 = vsel %vm913, %v1818, 0.0
        %v2521 = vsel %vm914, %v1820, 0.0
        %v2522 = vsel %vm915, %v2487, 0.0
        %v2523 = vsel %vm916, %v2489, 0.0
        %v2524 = vpack.c.bf16 %v2493, %v2492
        %v2525 = vpack.c.bf16 %v2495, %v2494
        %v2526 = vpack.c.bf16 %v2497, %v2496
        %v2527 = vpack.c.bf16 %v2499, %v2498
        %v2528 = vpack.c.bf16 %v2501, %v2500
        %v2529 = vpack.c.bf16 %v2503, %v2502
        %v2530 = vpack.c.bf16 %v2505, %v2504
        %v2531 = vpack.c.bf16 %v2507, %v2506
        %v2532 = vpack.c.bf16 %v2509, %v2508
        %v2533 = vpack.c.bf16 %v2511, %v2510
        %v2534 = vpack.c.bf16 %v2513, %v2512
        %v2535 = vpack.c.bf16 %v2515, %v2514
        %v2536 = vpack.c.bf16 %v2517, %v2516
        %v2537 = vpack.c.bf16 %v2519, %v2518
        %v2538 = vpack.c.bf16 %v2521, %v2520
        %v2539 = vpack.c.bf16 %v2523, %v2522
        %s2540 = scalar_lea.vmem %s208, 384 [#allocation3]
        %v2541 = vld [vmem:[%s2540] sm:$0xf]
        %v2542 = vld [vmem:[%s2540 + $0x4] sm:$0xf]
        %v2543 = vld [vmem:[%s2540 + $0x8] sm:$0xf]
        %v2544 = vld [vmem:[%s2540 + $0xc] sm:$0xf]
        %v2545 = vld [vmem:[%s2540 + $0x10] sm:$0xf]
        %v2546 = vld [vmem:[%s2540 + $0x14] sm:$0xf]
        %v2547 = vld [vmem:[%s2540 + $0x18] sm:$0xf]
        %v2548 = vld [vmem:[%s2540 + $0x1c] sm:$0xf]
        %v2549 = vld [vmem:[%s2540 + $0x20] sm:$0xf]
        %v2550 = vld [vmem:[%s2540 + $0x24] sm:$0xf]
        %v2551 = vld [vmem:[%s2540 + $0x28] sm:$0xf]
        %v2552 = vld [vmem:[%s2540 + $0x2c] sm:$0xf]
        %v2553 = vld [vmem:[%s2540 + $0x30] sm:$0xf]
        %v2554 = vld [vmem:[%s2540 + $0x34] sm:$0xf]
        %v2555 = vld [vmem:[%s2540 + $0x38] sm:$0xf]
        %v2556 = vld [vmem:[%s2540 + $0x3c] sm:$0xf]
        %v2573 = vunpack.c.l.b16 %v2541
        %v2574 = vunpack.c.l.b16 %v2542
        %v2575 = vunpack.c.l.b16 %v2543
        %v2576 = vunpack.c.l.b16 %v2544
        %v2577 = vunpack.c.l.b16 %v2545
        %v2578 = vunpack.c.l.b16 %v2546
        %v2579 = vunpack.c.l.b16 %v2547
        %v2580 = vunpack.c.l.b16 %v2548
        %v2581 = vunpack.c.l.b16 %v2549
        %v2582 = vunpack.c.l.b16 %v2550
        %v2583 = vunpack.c.l.b16 %v2551
        %v2584 = vunpack.c.l.b16 %v2552
        %v2585 = vunpack.c.l.b16 %v2553
        %v2586 = vunpack.c.l.b16 %v2554
        %v2587 = vunpack.c.l.b16 %v2555
        %v2588 = vunpack.c.l.b16 %v2556
        %v2589 = vpack.c.b16 %v2574, %v2573
        %v2590 = vpack.c.b16 %v2576, %v2575
        %v2591 = vpack.c.b16 %v2578, %v2577
        %v2592 = vpack.c.b16 %v2580, %v2579
        %v2593 = vpack.c.b16 %v2582, %v2581
        %v2594 = vpack.c.b16 %v2584, %v2583
        %v2595 = vpack.c.b16 %v2586, %v2585
        %v2596 = vpack.c.b16 %v2588, %v2587
        %2605 = vmatpush.bf16.msra.mxu0 %v2596
        %2606 = vmatpush.bf16.msra.mxu0 %v2595
        %2607 = vmatpush.bf16.msra.mxu0 %v2594
        %2608 = vmatpush.bf16.msra.mxu0 %v2593
        %2609 = vmatpush.bf16.msra.mxu0 %v2592
        %2610 = vmatpush.bf16.msra.mxu0 %v2591
        %2611 = vmatpush.bf16.msra.mxu0 %v2590
        %2612 = vmatpush.bf16.msra.mxu0 %v2589
        %2613 = vmatmul.bf16.gmra.mxu0 %v2524
        %v2614 = vpop.f32.mrf.mxu0
        %v2615 = vadd.f32 0.0, %v2614
        %v2616 = vpop.f32.mrf.mxu0
        %v2617 = vadd.f32 0.0, %v2616
        %2618 = vmatmul.bf16.gmra.mxu0 %v2525
        %v2619 = vpop.f32.mrf.mxu0
        %v2620 = vadd.f32 0.0, %v2619
        %v2621 = vpop.f32.mrf.mxu0
        %v2622 = vadd.f32 0.0, %v2621
        %2623 = vmatmul.bf16.gmra.mxu0 %v2526
        %v2624 = vpop.f32.mrf.mxu0
        %v2625 = vadd.f32 0.0, %v2624
        %v2626 = vpop.f32.mrf.mxu0
        %v2627 = vadd.f32 0.0, %v2626
        %2628 = vmatmul.bf16.gmra.mxu0 %v2527
        %v2629 = vpop.f32.mrf.mxu0
        %v2630 = vadd.f32 0.0, %v2629
        %v2631 = vpop.f32.mrf.mxu0
        %v2632 = vadd.f32 0.0, %v2631
        %2633 = vmatmul.bf16.gmra.mxu0 %v2528
        %v2634 = vpop.f32.mrf.mxu0
        %v2635 = vadd.f32 0.0, %v2634
        %v2636 = vpop.f32.mrf.mxu0
        %v2637 = vadd.f32 0.0, %v2636
        %2638 = vmatmul.bf16.gmra.mxu0 %v2529
        %v2639 = vpop.f32.mrf.mxu0
        %v2640 = vadd.f32 0.0, %v2639
        %v2641 = vpop.f32.mrf.mxu0
        %v2642 = vadd.f32 0.0, %v2641
        %2643 = vmatmul.bf16.gmra.mxu0 %v2530
        %v2644 = vpop.f32.mrf.mxu0
        %v2645 = vadd.f32 0.0, %v2644
        %v2646 = vpop.f32.mrf.mxu0
        %v2647 = vadd.f32 0.0, %v2646
        %2648 = vmatmul.bf16.gmra.mxu0 %v2531
        %v2649 = vpop.f32.mrf.mxu0
        %v2650 = vadd.f32 0.0, %v2649
        %v2651 = vpop.f32.mrf.mxu0
        %v2652 = vadd.f32 0.0, %v2651
        %2653 = vmatmul.bf16.gmra.mxu0 %v2532
        %v2654 = vpop.f32.mrf.mxu0
        %v2655 = vadd.f32 0.0, %v2654
        %v2656 = vpop.f32.mrf.mxu0
        %v2657 = vadd.f32 0.0, %v2656
        %2658 = vmatmul.bf16.gmra.mxu0 %v2533
        %v2659 = vpop.f32.mrf.mxu0
        %v2660 = vadd.f32 0.0, %v2659
        %v2661 = vpop.f32.mrf.mxu0
        %v2662 = vadd.f32 0.0, %v2661
        %2663 = vmatmul.bf16.gmra.mxu0 %v2534
        %v2664 = vpop.f32.mrf.mxu0
        %v2665 = vadd.f32 0.0, %v2664
        %v2666 = vpop.f32.mrf.mxu0
        %v2667 = vadd.f32 0.0, %v2666
        %2668 = vmatmul.bf16.gmra.mxu0 %v2535
        %v2669 = vpop.f32.mrf.mxu0
        %v2670 = vadd.f32 0.0, %v2669
        %v2671 = vpop.f32.mrf.mxu0
        %v2672 = vadd.f32 0.0, %v2671
        %2673 = vmatmul.bf16.gmra.mxu0 %v2536
        %v2674 = vpop.f32.mrf.mxu0
        %v2675 = vadd.f32 0.0, %v2674
        %v2676 = vpop.f32.mrf.mxu0
        %v2677 = vadd.f32 0.0, %v2676
        %2678 = vmatmul.bf16.gmra.mxu0 %v2537
        %v2679 = vpop.f32.mrf.mxu0
        %v2680 = vadd.f32 0.0, %v2679
        %v2681 = vpop.f32.mrf.mxu0
        %v2682 = vadd.f32 0.0, %v2681
        %2683 = vmatmul.bf16.gmra.mxu0 %v2538
        %v2684 = vpop.f32.mrf.mxu0
        %v2685 = vadd.f32 0.0, %v2684
        %v2686 = vpop.f32.mrf.mxu0
        %v2687 = vadd.f32 0.0, %v2686
        %2688 = vmatmul.bf16.gmra.mxu0 %v2539
        %v2689 = vpop.f32.mrf.mxu0
        %v2690 = vadd.f32 0.0, %v2689
        %v2691 = vpop.f32.mrf.mxu0
        %v2692 = vadd.f32 0.0, %v2691
        %2693 = vdwg.mxu0
        %v2694 = vadd.f32 %v2453, %v2615
        %v2695 = vadd.f32 %v2454, %v2617
        %v2696 = vadd.f32 %v2455, %v2620
        %v2697 = vadd.f32 %v2456, %v2622
        %v2698 = vadd.f32 %v2457, %v2625
        %v2699 = vadd.f32 %v2458, %v2627
        %v2700 = vadd.f32 %v2459, %v2630
        %v2701 = vadd.f32 %v2460, %v2632
        %v2702 = vadd.f32 %v2461, %v2635
        %v2703 = vadd.f32 %v2462, %v2637
        %v2704 = vadd.f32 %v2463, %v2640
        %v2705 = vadd.f32 %v2464, %v2642
        %v2706 = vadd.f32 %v2465, %v2645
        %v2707 = vadd.f32 %v2466, %v2647
        %v2708 = vadd.f32 %v2467, %v2650
        %v2709 = vadd.f32 %v2468, %v2652
        %v2710 = vadd.f32 %v2469, %v2655
        %v2711 = vadd.f32 %v2470, %v2657
        %v2712 = vadd.f32 %v2471, %v2660
        %v2713 = vadd.f32 %v2472, %v2662
        %v2714 = vadd.f32 %v2473, %v2665
        %v2715 = vadd.f32 %v2474, %v2667
        %v2716 = vadd.f32 %v2475, %v2670
        %v2717 = vadd.f32 %v2476, %v2672
        %v2718 = vadd.f32 %v2477, %v2675
        %v2719 = vadd.f32 %v2478, %v2677
        %v2720 = vadd.f32 %v2479, %v2680
        %v2721 = vadd.f32 %v2480, %v2682
        %v2722 = vadd.f32 %v2481, %v2685
        %v2723 = vadd.f32 %v2482, %v2687
        %v2724 = vadd.f32 %v2483, %v2690
        %v2725 = vadd.f32 %v2484, %v2692
        %v2726 = vpack.c.bf16 %v370, %v369
        %s2727 = scalar_lea.vmem %s208, 448 [#allocation3]
        %v2728 = vld [vmem:[%s2727] sm:$0xf]
        %v2729 = vld [vmem:[%s2727 + $0x4] sm:$0xf]
        %v2730 = vld [vmem:[%s2727 + $0x8] sm:$0xf]
        %v2731 = vld [vmem:[%s2727 + $0xc] sm:$0xf]
        %v2732 = vld [vmem:[%s2727 + $0x10] sm:$0xf]
        %v2733 = vld [vmem:[%s2727 + $0x14] sm:$0xf]
        %v2734 = vld [vmem:[%s2727 + $0x18] sm:$0xf]
        %v2735 = vld [vmem:[%s2727 + $0x1c] sm:$0xf]
        %v2736 = vld [vmem:[%s2727 + $0x20] sm:$0xf]
        %v2737 = vld [vmem:[%s2727 + $0x24] sm:$0xf]
        %v2738 = vld [vmem:[%s2727 + $0x28] sm:$0xf]
        %v2739 = vld [vmem:[%s2727 + $0x2c] sm:$0xf]
        %v2740 = vld [vmem:[%s2727 + $0x30] sm:$0xf]
        %v2741 = vld [vmem:[%s2727 + $0x34] sm:$0xf]
        %v2742 = vld [vmem:[%s2727 + $0x38] sm:$0xf]
        %v2743 = vld [vmem:[%s2727 + $0x3c] sm:$0xf]
        %v2760 = vunpack.c.l.b16 %v2728
        %v2761 = vunpack.c.l.b16 %v2729
        %v2762 = vunpack.c.l.b16 %v2730
        %v2763 = vunpack.c.l.b16 %v2731
        %v2764 = vunpack.c.l.b16 %v2732
        %v2765 = vunpack.c.l.b16 %v2733
        %v2766 = vunpack.c.l.b16 %v2734
        %v2767 = vunpack.c.l.b16 %v2735
        %v2768 = vunpack.c.l.b16 %v2736
        %v2769 = vunpack.c.l.b16 %v2737
        %v2770 = vunpack.c.l.b16 %v2738
        %v2771 = vunpack.c.l.b16 %v2739
        %v2772 = vunpack.c.l.b16 %v2740
        %v2773 = vunpack.c.l.b16 %v2741
        %v2774 = vunpack.c.l.b16 %v2742
        %v2775 = vunpack.c.l.b16 %v2743
        %v2776 = vpack.c.b16 %v2761, %v2760
        %v2777 = vpack.c.b16 %v2763, %v2762
        %v2778 = vpack.c.b16 %v2765, %v2764
        %v2779 = vpack.c.b16 %v2767, %v2766
        %v2780 = vpack.c.b16 %v2769, %v2768
        %v2781 = vpack.c.b16 %v2771, %v2770
        %v2782 = vpack.c.b16 %v2773, %v2772
        %v2783 = vpack.c.b16 %v2775, %v2774
        %2792 = vmatpush.bf16.msra.mxu0 %v2783
        %2793 = vmatpush.bf16.msra.mxu0 %v2782
        %2794 = vmatpush.bf16.msra.mxu0 %v2781
        %2795 = vmatpush.bf16.msra.mxu0 %v2780
        %2796 = vmatpush.bf16.msra.mxu0 %v2779
        %2797 = vmatpush.bf16.msra.mxu0 %v2778
        %2798 = vmatpush.bf16.msra.mxu0 %v2777
        %2799 = vmatpush.bf16.msra.mxu0 %v2776
        %2800 = vmatmul.bf16.gmra.mxu0 %v1114
        %v2801 = vpop.f32.mrf.mxu0
        %v2802 = vadd.f32 0.0, %v2801
        %v2803 = vpop.f32.mrf.mxu0
        %v2804 = vadd.f32 0.0, %v2803
        %2805 = vmatmul.bf16.gmra.mxu0 %v1115
        %v2806 = vpop.f32.mrf.mxu0
        %v2807 = vadd.f32 0.0, %v2806
        %v2808 = vpop.f32.mrf.mxu0
        %v2809 = vadd.f32 0.0, %v2808
        %2810 = vmatmul.bf16.gmra.mxu0 %v1116
        %v2811 = vpop.f32.mrf.mxu0
        %v2812 = vadd.f32 0.0, %v2811
        %v2813 = vpop.f32.mrf.mxu0
        %v2814 = vadd.f32 0.0, %v2813
        %2815 = vmatmul.bf16.gmra.mxu0 %v1117
        %v2816 = vpop.f32.mrf.mxu0
        %v2817 = vadd.f32 0.0, %v2816
        %v2818 = vpop.f32.mrf.mxu0
        %v2819 = vadd.f32 0.0, %v2818
        %2820 = vmatmul.bf16.gmra.mxu0 %v1118
        %v2821 = vpop.f32.mrf.mxu0
        %v2822 = vadd.f32 0.0, %v2821
        %v2823 = vpop.f32.mrf.mxu0
        %v2824 = vadd.f32 0.0, %v2823
        %2825 = vmatmul.bf16.gmra.mxu0 %v1119
        %v2826 = vpop.f32.mrf.mxu0
        %v2827 = vadd.f32 0.0, %v2826
        %v2828 = vpop.f32.mrf.mxu0
        %v2829 = vadd.f32 0.0, %v2828
        %2830 = vmatmul.bf16.gmra.mxu0 %v1120
        %v2831 = vpop.f32.mrf.mxu0
        %v2832 = vadd.f32 0.0, %v2831
        %v2833 = vpop.f32.mrf.mxu0
        %v2834 = vadd.f32 0.0, %v2833
        %2835 = vmatmul.bf16.gmra.mxu0 %v1121
        %v2836 = vpop.f32.mrf.mxu0
        %v2837 = vadd.f32 0.0, %v2836
        %v2838 = vpop.f32.mrf.mxu0
        %v2839 = vadd.f32 0.0, %v2838
        %2840 = vmatmul.bf16.gmra.mxu0 %v1122
        %v2841 = vpop.f32.mrf.mxu0
        %v2842 = vadd.f32 0.0, %v2841
        %v2843 = vpop.f32.mrf.mxu0
        %v2844 = vadd.f32 0.0, %v2843
        %2845 = vmatmul.bf16.gmra.mxu0 %v1123
        %v2846 = vpop.f32.mrf.mxu0
        %v2847 = vadd.f32 0.0, %v2846
        %v2848 = vpop.f32.mrf.mxu0
        %v2849 = vadd.f32 0.0, %v2848
        %2850 = vmatmul.bf16.gmra.mxu0 %v1124
        %v2851 = vpop.f32.mrf.mxu0
        %v2852 = vadd.f32 0.0, %v2851
        %v2853 = vpop.f32.mrf.mxu0
        %v2854 = vadd.f32 0.0, %v2853
        %2855 = vmatmul.bf16.gmra.mxu0 %v1125
        %v2856 = vpop.f32.mrf.mxu0
        %v2857 = vadd.f32 0.0, %v2856
        %v2858 = vpop.f32.mrf.mxu0
        %v2859 = vadd.f32 0.0, %v2858
        %2860 = vmatmul.bf16.gmra.mxu0 %v1126
        %v2861 = vpop.f32.mrf.mxu0
        %v2862 = vadd.f32 0.0, %v2861
        %v2863 = vpop.f32.mrf.mxu0
        %v2864 = vadd.f32 0.0, %v2863
        %2865 = vmatmul.bf16.gmra.mxu0 %v1127
        %v2866 = vpop.f32.mrf.mxu0
        %v2867 = vadd.f32 0.0, %v2866
        %v2868 = vpop.f32.mrf.mxu0
        %v2869 = vadd.f32 0.0, %v2868
        %2870 = vmatmul.bf16.gmra.mxu0 %v2057
        %v2871 = vpop.f32.mrf.mxu0
        %v2872 = vadd.f32 0.0, %v2871
        %v2873 = vpop.f32.mrf.mxu0
        %v2874 = vadd.f32 0.0, %v2873
        %2875 = vmatmul.bf16.gmra.mxu0 %v2726
        %v2876 = vpop.f32.mrf.mxu0
        %v2877 = vadd.f32 0.0, %v2876
        %v2878 = vpop.f32.mrf.mxu0
        %v2879 = vadd.f32 0.0, %v2878
        %2880 = vdwg.mxu0
        %v2881 = vadd.f32 %v2694, %v2802
        %v2882 = vadd.f32 %v2695, %v2804
        %v2883 = vadd.f32 %v2696, %v2807
        %v2884 = vadd.f32 %v2697, %v2809
        %v2885 = vadd.f32 %v2698, %v2812
        %v2886 = vadd.f32 %v2699, %v2814
        %v2887 = vadd.f32 %v2700, %v2817
        %v2888 = vadd.f32 %v2701, %v2819
        %v2889 = vadd.f32 %v2702, %v2822
        %v2890 = vadd.f32 %v2703, %v2824
        %v2891 = vadd.f32 %v2704, %v2827
        %v2892 = vadd.f32 %v2705, %v2829
        %v2893 = vadd.f32 %v2706, %v2832
        %v2894 = vadd.f32 %v2707, %v2834
        %v2895 = vadd.f32 %v2708, %v2837
        %v2896 = vadd.f32 %v2709, %v2839
        %v2897 = vadd.f32 %v2710, %v2842
        %v2898 = vadd.f32 %v2711, %v2844
        %v2899 = vadd.f32 %v2712, %v2847
        %v2900 = vadd.f32 %v2713, %v2849
        %v2901 = vadd.f32 %v2714, %v2852
        %v2902 = vadd.f32 %v2715, %v2854
        %v2903 = vadd.f32 %v2716, %v2857
        %v2904 = vadd.f32 %v2717, %v2859
        %v2905 = vadd.f32 %v2718, %v2862
        %v2906 = vadd.f32 %v2719, %v2864
        %v2907 = vadd.f32 %v2720, %v2867
        %v2908 = vadd.f32 %v2721, %v2869
        %v2909 = vadd.f32 %v2722, %v2872
        %v2910 = vadd.f32 %v2723, %v2874
        %v2911 = vadd.f32 %v2724, %v2877
        %v2912 = vadd.f32 %v2725, %v2879
        %v2914 = vrot.slane %v370, 1
        %v2915 = vsel %vm1484, %v2247, %v2914
        %v2916 = vrot.slane %v371, 1
        %v2917 = vsel %vm1484, %v2914, %v2916
        %v2920 = vsel %vm1451, %v1495, 0.0
        %v2921 = vsel %vm1452, %v1497, 0.0
        %v2922 = vsel %vm1453, %v1499, 0.0
        %v2923 = vsel %vm1454, %v1501, 0.0
        %v2924 = vsel %vm1455, %v1503, 0.0
        %v2925 = vsel %vm1456, %v1505, 0.0
        %v2926 = vsel %vm1457, %v1507, 0.0
        %v2927 = vsel %vm1458, %v1509, 0.0
        %v2928 = vsel %vm1459, %v1511, 0.0
        %v2929 = vsel %vm1460, %v1513, 0.0
        %v2930 = vsel %vm1461, %v1515, 0.0
        %v2931 = vsel %vm1462, %v1517, 0.0
        %v2932 = vsel %vm1463, %v1519, 0.0
        %v2933 = vsel %vm1464, %v1521, 0.0
        %v2934 = vsel %vm1465, %v1523, 0.0
        %v2935 = vsel %vm1466, %v1525, 0.0
        %v2936 = vsel %vm1467, %v1527, 0.0
        %v2937 = vsel %vm1468, %v1529, 0.0
        %v2938 = vsel %vm1469, %v1531, 0.0
        %v2939 = vsel %vm1470, %v1533, 0.0
        %v2940 = vsel %vm1471, %v1535, 0.0
        %v2941 = vsel %vm1472, %v1537, 0.0
        %v2942 = vsel %vm1473, %v1539, 0.0
        %v2943 = vsel %vm1474, %v1541, 0.0
        %v2944 = vsel %vm1475, %v1543, 0.0
        %v2945 = vsel %vm1476, %v1545, 0.0
        %v2946 = vsel %vm1477, %v1547, 0.0
        %v2947 = vsel %vm1478, %v1549, 0.0
        %v2948 = vsel %vm1479, %v2246, 0.0
        %v2949 = vsel %vm1480, %v2248, 0.0
        %v2950 = vsel %vm1481, %v2915, 0.0
        %v2951 = vsel %vm1482, %v2917, 0.0
        %v2952 = vpack.c.bf16 %v2921, %v2920
        %v2953 = vpack.c.bf16 %v2923, %v2922
        %v2954 = vpack.c.bf16 %v2925, %v2924
        %v2955 = vpack.c.bf16 %v2927, %v2926
        %v2956 = vpack.c.bf16 %v2929, %v2928
        %v2957 = vpack.c.bf16 %v2931, %v2930
        %v2958 = vpack.c.bf16 %v2933, %v2932
        %v2959 = vpack.c.bf16 %v2935, %v2934
        %v2960 = vpack.c.bf16 %v2937, %v2936
        %v2961 = vpack.c.bf16 %v2939, %v2938
        %v2962 = vpack.c.bf16 %v2941, %v2940
        %v2963 = vpack.c.bf16 %v2943, %v2942
        %v2964 = vpack.c.bf16 %v2945, %v2944
        %v2965 = vpack.c.bf16 %v2947, %v2946
        %v2966 = vpack.c.bf16 %v2949, %v2948
        %v2967 = vpack.c.bf16 %v2951, %v2950
        %s2968 = scalar_lea.vmem %s208, 512 [#allocation3]
        %v2969 = vld [vmem:[%s2968] sm:$0xf]
        %v2970 = vld [vmem:[%s2968 + $0x4] sm:$0xf]
        %v2971 = vld [vmem:[%s2968 + $0x8] sm:$0xf]
        %v2972 = vld [vmem:[%s2968 + $0xc] sm:$0xf]
        %v2973 = vld [vmem:[%s2968 + $0x10] sm:$0xf]
        %v2974 = vld [vmem:[%s2968 + $0x14] sm:$0xf]
        %v2975 = vld [vmem:[%s2968 + $0x18] sm:$0xf]
        %v2976 = vld [vmem:[%s2968 + $0x1c] sm:$0xf]
        %v2977 = vld [vmem:[%s2968 + $0x20] sm:$0xf]
        %v2978 = vld [vmem:[%s2968 + $0x24] sm:$0xf]
        %v2979 = vld [vmem:[%s2968 + $0x28] sm:$0xf]
        %v2980 = vld [vmem:[%s2968 + $0x2c] sm:$0xf]
        %v2981 = vld [vmem:[%s2968 + $0x30] sm:$0xf]
        %v2982 = vld [vmem:[%s2968 + $0x34] sm:$0xf]
        %v2983 = vld [vmem:[%s2968 + $0x38] sm:$0xf]
        %v2984 = vld [vmem:[%s2968 + $0x3c] sm:$0xf]
        %v3001 = vunpack.c.l.b16 %v2969
        %v3002 = vunpack.c.l.b16 %v2970
        %v3003 = vunpack.c.l.b16 %v2971
        %v3004 = vunpack.c.l.b16 %v2972
        %v3005 = vunpack.c.l.b16 %v2973
        %v3006 = vunpack.c.l.b16 %v2974
        %v3007 = vunpack.c.l.b16 %v2975
        %v3008 = vunpack.c.l.b16 %v2976
        %v3009 = vunpack.c.l.b16 %v2977
        %v3010 = vunpack.c.l.b16 %v2978
        %v3011 = vunpack.c.l.b16 %v2979
        %v3012 = vunpack.c.l.b16 %v2980
        %v3013 = vunpack.c.l.b16 %v2981
        %v3014 = vunpack.c.l.b16 %v2982
        %v3015 = vunpack.c.l.b16 %v2983
        %v3016 = vunpack.c.l.b16 %v2984
        %v3017 = vpack.c.b16 %v3002, %v3001
        %v3018 = vpack.c.b16 %v3004, %v3003
        %v3019 = vpack.c.b16 %v3006, %v3005
        %v3020 = vpack.c.b16 %v3008, %v3007
        %v3021 = vpack.c.b16 %v3010, %v3009
        %v3022 = vpack.c.b16 %v3012, %v3011
        %v3023 = vpack.c.b16 %v3014, %v3013
        %v3024 = vpack.c.b16 %v3016, %v3015
        %3033 = vmatpush.bf16.msra.mxu0 %v3024
        %3034 = vmatpush.bf16.msra.mxu0 %v3023
        %3035 = vmatpush.bf16.msra.mxu0 %v3022
        %3036 = vmatpush.bf16.msra.mxu0 %v3021
        %3037 = vmatpush.bf16.msra.mxu0 %v3020
        %3038 = vmatpush.bf16.msra.mxu0 %v3019
        %3039 = vmatpush.bf16.msra.mxu0 %v3018
        %3040 = vmatpush.bf16.msra.mxu0 %v3017
        %3041 = vmatmul.bf16.gmra.mxu0 %v2952
        %v3042 = vpop.f32.mrf.mxu0
        %v3043 = vadd.f32 0.0, %v3042
        %v3044 = vpop.f32.mrf.mxu0
        %v3045 = vadd.f32 0.0, %v3044
        %3046 = vmatmul.bf16.gmra.mxu0 %v2953
        %v3047 = vpop.f32.mrf.mxu0
        %v3048 = vadd.f32 0.0, %v3047
        %v3049 = vpop.f32.mrf.mxu0
        %v3050 = vadd.f32 0.0, %v3049
        %3051 = vmatmul.bf16.gmra.mxu0 %v2954
        %v3052 = vpop.f32.mrf.mxu0
        %v3053 = vadd.f32 0.0, %v3052
        %v3054 = vpop.f32.mrf.mxu0
        %v3055 = vadd.f32 0.0, %v3054
        %3056 = vmatmul.bf16.gmra.mxu0 %v2955
        %v3057 = vpop.f32.mrf.mxu0
        %v3058 = vadd.f32 0.0, %v3057
        %v3059 = vpop.f32.mrf.mxu0
        %v3060 = vadd.f32 0.0, %v3059
        %3061 = vmatmul.bf16.gmra.mxu0 %v2956
        %v3062 = vpop.f32.mrf.mxu0
        %v3063 = vadd.f32 0.0, %v3062
        %v3064 = vpop.f32.mrf.mxu0
        %v3065 = vadd.f32 0.0, %v3064
        %3066 = vmatmul.bf16.gmra.mxu0 %v2957
        %v3067 = vpop.f32.mrf.mxu0
        %v3068 = vadd.f32 0.0, %v3067
        %v3069 = vpop.f32.mrf.mxu0
        %v3070 = vadd.f32 0.0, %v3069
        %3071 = vmatmul.bf16.gmra.mxu0 %v2958
        %v3072 = vpop.f32.mrf.mxu0
        %v3073 = vadd.f32 0.0, %v3072
        %v3074 = vpop.f32.mrf.mxu0
        %v3075 = vadd.f32 0.0, %v3074
        %3076 = vmatmul.bf16.gmra.mxu0 %v2959
        %v3077 = vpop.f32.mrf.mxu0
        %v3078 = vadd.f32 0.0, %v3077
        %v3079 = vpop.f32.mrf.mxu0
        %v3080 = vadd.f32 0.0, %v3079
        %3081 = vmatmul.bf16.gmra.mxu0 %v2960
        %v3082 = vpop.f32.mrf.mxu0
        %v3083 = vadd.f32 0.0, %v3082
        %v3084 = vpop.f32.mrf.mxu0
        %v3085 = vadd.f32 0.0, %v3084
        %3086 = vmatmul.bf16.gmra.mxu0 %v2961
        %v3087 = vpop.f32.mrf.mxu0
        %v3088 = vadd.f32 0.0, %v3087
        %v3089 = vpop.f32.mrf.mxu0
        %v3090 = vadd.f32 0.0, %v3089
        %3091 = vmatmul.bf16.gmra.mxu0 %v2962
        %v3092 = vpop.f32.mrf.mxu0
        %v3093 = vadd.f32 0.0, %v3092
        %v3094 = vpop.f32.mrf.mxu0
        %v3095 = vadd.f32 0.0, %v3094
        %3096 = vmatmul.bf16.gmra.mxu0 %v2963
        %v3097 = vpop.f32.mrf.mxu0
        %v3098 = vadd.f32 0.0, %v3097
        %v3099 = vpop.f32.mrf.mxu0
        %v3100 = vadd.f32 0.0, %v3099
        %3101 = vmatmul.bf16.gmra.mxu0 %v2964
        %v3102 = vpop.f32.mrf.mxu0
        %v3103 = vadd.f32 0.0, %v3102
        %v3104 = vpop.f32.mrf.mxu0
        %v3105 = vadd.f32 0.0, %v3104
        %3106 = vmatmul.bf16.gmra.mxu0 %v2965
        %v3107 = vpop.f32.mrf.mxu0
        %v3108 = vadd.f32 0.0, %v3107
        %v3109 = vpop.f32.mrf.mxu0
        %v3110 = vadd.f32 0.0, %v3109
        %3111 = vmatmul.bf16.gmra.mxu0 %v2966
        %v3112 = vpop.f32.mrf.mxu0
        %v3113 = vadd.f32 0.0, %v3112
        %v3114 = vpop.f32.mrf.mxu0
        %v3115 = vadd.f32 0.0, %v3114
        %3116 = vmatmul.bf16.gmra.mxu0 %v2967
        %v3117 = vpop.f32.mrf.mxu0
        %v3118 = vadd.f32 0.0, %v3117
        %v3119 = vpop.f32.mrf.mxu0
        %v3120 = vadd.f32 0.0, %v3119
        %3121 = vdwg.mxu0
        %v3122 = vadd.f32 %v2881, %v3043
        %v3123 = vadd.f32 %v2882, %v3045
        %v3124 = vadd.f32 %v2883, %v3048
        %v3125 = vadd.f32 %v2884, %v3050
        %v3126 = vadd.f32 %v2885, %v3053
        %v3127 = vadd.f32 %v2886, %v3055
        %v3128 = vadd.f32 %v2887, %v3058
        %v3129 = vadd.f32 %v2888, %v3060
        %v3130 = vadd.f32 %v2889, %v3063
        %v3131 = vadd.f32 %v2890, %v3065
        %v3132 = vadd.f32 %v2891, %v3068
        %v3133 = vadd.f32 %v2892, %v3070
        %v3134 = vadd.f32 %v2893, %v3073
        %v3135 = vadd.f32 %v2894, %v3075
        %v3136 = vadd.f32 %v2895, %v3078
        %v3137 = vadd.f32 %v2896, %v3080
        %v3138 = vadd.f32 %v2897, %v3083
        %v3139 = vadd.f32 %v2898, %v3085
        %v3140 = vadd.f32 %v2899, %v3088
        %v3141 = vadd.f32 %v2900, %v3090
        %v3142 = vadd.f32 %v2901, %v3093
        %v3143 = vadd.f32 %v2902, %v3095
        %v3144 = vadd.f32 %v2903, %v3098
        %v3145 = vadd.f32 %v2904, %v3100
        %v3146 = vadd.f32 %v2905, %v3103
        %v3147 = vadd.f32 %v2906, %v3105
        %v3148 = vadd.f32 %v2907, %v3108
        %v3149 = vadd.f32 %v2908, %v3110
        %v3150 = vadd.f32 %v2909, %v3113
        %v3151 = vadd.f32 %v2910, %v3115
        %v3152 = vadd.f32 %v2911, %v3118
        %v3153 = vadd.f32 %v2912, %v3120
        %v3154 = vld [vmem:[%s217] sm:$0x1]
        %v3156 = vperm.slane %v3154, 0
        %v3158 = vadd.f32 %v3122, %v3156
        %v3159 = vadd.f32 %v3123, %v3156
        %v3160 = vadd.f32 %v3124, %v3156
        %v3161 = vadd.f32 %v3125, %v3156
        %v3162 = vadd.f32 %v3126, %v3156
        %v3163 = vadd.f32 %v3127, %v3156
        %v3164 = vadd.f32 %v3128, %v3156
        %v3165 = vadd.f32 %v3129, %v3156
        %v3166 = vadd.f32 %v3130, %v3156
        %v3167 = vadd.f32 %v3131, %v3156
        %v3168 = vadd.f32 %v3132, %v3156
        %v3169 = vadd.f32 %v3133, %v3156
        %v3170 = vadd.f32 %v3134, %v3156
        %v3171 = vadd.f32 %v3135, %v3156
        %v3172 = vadd.f32 %v3136, %v3156
        %v3173 = vadd.f32 %v3137, %v3156
        %v3174 = vadd.f32 %v3138, %v3156
        %v3175 = vadd.f32 %v3139, %v3156
        %v3176 = vadd.f32 %v3140, %v3156
        %v3177 = vadd.f32 %v3141, %v3156
        %v3178 = vadd.f32 %v3142, %v3156
        %v3179 = vadd.f32 %v3143, %v3156
        %v3180 = vadd.f32 %v3144, %v3156
        %v3181 = vadd.f32 %v3145, %v3156
        %v3182 = vadd.f32 %v3146, %v3156
        %v3183 = vadd.f32 %v3147, %v3156
        %v3184 = vadd.f32 %v3148, %v3156
        %v3185 = vadd.f32 %v3149, %v3156
        %v3186 = vadd.f32 %v3150, %v3156
        %v3187 = vadd.f32 %v3151, %v3156
        %v3188 = vadd.f32 %v3152, %v3156
        %v3189 = vadd.f32 %v3153, %v3156
        %p3190 = scmp.lt.s32.totalorder %s25, 4
        // Predicated region
        $region45: #{classification_model_forward.1} parent=31 // pred_check
          %p3191 = pneg %p3190
        $region46: #{classification_model_forward.1} parent=31 // pred_check_branch
          %3193 = sbr.rel (%p3191) target = $region48
        $region47: #{classification_model_forward.1} parent=31 // pred_region
          %v3194 = vmax.f32 %v3158, 0.0
          %v3195 = vmax.f32 %v3159, 0.0
          %v3196 = vmax.f32 %v3160, 0.0
          %v3197 = vmax.f32 %v3161, 0.0
          %v3198 = vmax.f32 %v3162, 0.0
          %v3199 = vmax.f32 %v3163, 0.0
          %v3200 = vmax.f32 %v3164, 0.0
          %v3201 = vmax.f32 %v3165, 0.0
          %v3202 = vmax.f32 %v3166, 0.0
          %v3203 = vmax.f32 %v3167, 0.0
          %v3204 = vmax.f32 %v3168, 0.0
          %v3205 = vmax.f32 %v3169, 0.0
          %v3206 = vmax.f32 %v3170, 0.0
          %v3207 = vmax.f32 %v3171, 0.0
          %v3208 = vmax.f32 %v3172, 0.0
          %v3209 = vmax.f32 %v3173, 0.0
          %v3210 = vmax.f32 %v3174, 0.0
          %v3211 = vmax.f32 %v3175, 0.0
          %v3212 = vmax.f32 %v3176, 0.0
          %v3213 = vmax.f32 %v3177, 0.0
          %v3214 = vmax.f32 %v3178, 0.0
          %v3215 = vmax.f32 %v3179, 0.0
          %v3216 = vmax.f32 %v3180, 0.0
          %v3217 = vmax.f32 %v3181, 0.0
          %v3218 = vmax.f32 %v3182, 0.0
          %v3219 = vmax.f32 %v3183, 0.0
          %v3220 = vmax.f32 %v3184, 0.0
          %v3221 = vmax.f32 %v3185, 0.0
          %v3222 = vmax.f32 %v3186, 0.0
          %v3223 = vmax.f32 %v3187, 0.0
          %v3224 = vmax.f32 %v3188, 0.0
          %v3225 = vmax.f32 %v3189, 0.0
          %3226 = vst [vmem:[#allocation2 + $0x18] sm:$0xff] %v3194
          %3227 = vst [vmem:[#allocation2 + $0x20] sm:$0xff] %v3195
          %3228 = vst [vmem:[#allocation2 + $0x28] sm:$0xff] %v3196
          %3229 = vst [vmem:[#allocation2 + $0x30] sm:$0xff] %v3197
          %3230 = vst [vmem:[#allocation2 + $0x38] sm:$0xff] %v3198
          %3231 = vst [vmem:[#allocation2 + $0x40] sm:$0xff] %v3199
          %3232 = vst [vmem:[#allocation2 + $0x48] sm:$0xff] %v3200
          %3233 = vst [vmem:[#allocation2 + $0x50] sm:$0xff] %v3201
          %3234 = vst [vmem:[#allocation2 + $0x58] sm:$0xff] %v3202
          %3235 = vst [vmem:[#allocation2 + $0x60] sm:$0xff] %v3203
          %3236 = vst [vmem:[#allocation2 + $0x68] sm:$0xff] %v3204
          %3237 = vst [vmem:[#allocation2 + $0x70] sm:$0xff] %v3205
          %3238 = vst [vmem:[#allocation2 + $0x78] sm:$0xff] %v3206
          %3239 = vst [vmem:[#allocation2 + $0x80] sm:$0xff] %v3207
          %3240 = vst [vmem:[#allocation2 + $0x88] sm:$0xff] %v3208
          %3241 = vst [vmem:[#allocation2 + $0x90] sm:$0xff] %v3209
          %3242 = vst [vmem:[#allocation2 + $0x98] sm:$0xff] %v3210
          %3243 = vst [vmem:[#allocation2 + $0xa0] sm:$0xff] %v3211
          %3244 = vst [vmem:[#allocation2 + $0xa8] sm:$0xff] %v3212
          %3245 = vst [vmem:[#allocation2 + $0xb0] sm:$0xff] %v3213
          %3246 = vst [vmem:[#allocation2 + $0xb8] sm:$0xff] %v3214
          %3247 = vst [vmem:[#allocation2 + $0xc0] sm:$0xff] %v3215
          %3248 = vst [vmem:[#allocation2 + $0xc8] sm:$0xff] %v3216
          %3249 = vst [vmem:[#allocation2 + $0xd0] sm:$0xff] %v3217
          %3250 = vst [vmem:[#allocation2 + $0xd8] sm:$0xff] %v3218
          %3251 = vst [vmem:[#allocation2 + $0xe0] sm:$0xff] %v3219
          %3252 = vst [vmem:[#allocation2 + $0xe8] sm:$0xff] %v3220
          %3253 = vst [vmem:[#allocation2 + $0xf0] sm:$0xff] %v3221
          %3254 = vst [vmem:[#allocation2 + $0xf8] sm:$0xff] %v3222
          %3255 = vst [vmem:[#allocation2 + $0x100] sm:$0xff] %v3223
          %3256 = vst [vmem:[#allocation2 + $0x108] sm:$0xff] %v3224
          %3257 = vst [vmem:[#allocation2 + $0x110] sm:$0xff] %v3225
        $region48: #{classification_model_forward.1} parent=31 // pred_fallthru
          _
        %p3258 = scmp.eq.s32.totalorder %s25, 4
        // Predicated region
        $region49: #{classification_model_forward.1} parent=31 // pred_check
          %p3259 = pneg %p3258
        $region50: #{classification_model_forward.1} parent=31 // pred_check_branch
          %3261 = sbr.rel (%p3259) target = $region52
        $region51: #{classification_model_forward.1} parent=31 // pred_region
          %v3262 = vxor.u32 %v3158, 2147483648
          %v3263 = vxor.u32 %v3159, 2147483648
          %v3264 = vxor.u32 %v3160, 2147483648
          %v3265 = vxor.u32 %v3161, 2147483648
          %v3266 = vxor.u32 %v3162, 2147483648
          %v3267 = vxor.u32 %v3163, 2147483648
          %v3268 = vxor.u32 %v3164, 2147483648
          %v3269 = vxor.u32 %v3165, 2147483648
          %v3270 = vxor.u32 %v3166, 2147483648
          %v3271 = vxor.u32 %v3167, 2147483648
          %v3272 = vxor.u32 %v3168, 2147483648
          %v3273 = vxor.u32 %v3169, 2147483648
          %v3274 = vxor.u32 %v3170, 2147483648
          %v3275 = vxor.u32 %v3171, 2147483648
          %v3276 = vxor.u32 %v3172, 2147483648
          %v3277 = vxor.u32 %v3173, 2147483648
          %v3278 = vxor.u32 %v3174, 2147483648
          %v3279 = vxor.u32 %v3175, 2147483648
          %v3280 = vxor.u32 %v3176, 2147483648
          %v3281 = vxor.u32 %v3177, 2147483648
          %v3282 = vxor.u32 %v3178, 2147483648
          %v3283 = vxor.u32 %v3179, 2147483648
          %v3284 = vxor.u32 %v3180, 2147483648
          %v3285 = vxor.u32 %v3181, 2147483648
          %v3286 = vxor.u32 %v3182, 2147483648
          %v3287 = vxor.u32 %v3183, 2147483648
          %v3288 = vxor.u32 %v3184, 2147483648
          %v3289 = vxor.u32 %v3185, 2147483648
          %v3290 = vxor.u32 %v3186, 2147483648
          %v3291 = vxor.u32 %v3187, 2147483648
          %v3292 = vxor.u32 %v3188, 2147483648
          %v3293 = vxor.u32 %v3189, 2147483648
          %v3294 = vmul.f32 %v3262, 1.442695
          %v3295 = vpow.pop %v3294
          %v3296 = vmul.f32 %v3263, 1.442695
          %v3297 = vpow.pop %v3296
          %v3298 = vmul.f32 %v3264, 1.442695
          %v3299 = vpow.pop %v3298
          %v3300 = vmul.f32 %v3265, 1.442695
          %v3301 = vpow.pop %v3300
          %v3302 = vmul.f32 %v3266, 1.442695
          %v3303 = vpow.pop %v3302
          %v3304 = vmul.f32 %v3267, 1.442695
          %v3305 = vpow.pop %v3304
          %v3306 = vmul.f32 %v3268, 1.442695
          %v3307 = vpow.pop %v3306
          %v3308 = vmul.f32 %v3269, 1.442695
          %v3309 = vpow.pop %v3308
          %v3310 = vmul.f32 %v3270, 1.442695
          %v3311 = vpow.pop %v3310
          %v3312 = vmul.f32 %v3271, 1.442695
          %v3313 = vpow.pop %v3312
          %v3314 = vmul.f32 %v3272, 1.442695
          %v3315 = vpow.pop %v3314
          %v3316 = vmul.f32 %v3273, 1.442695
          %v3317 = vpow.pop %v3316
          %v3318 = vmul.f32 %v3274, 1.442695
          %v3319 = vpow.pop %v3318
          %v3320 = vmul.f32 %v3275, 1.442695
          %v3321 = vpow.pop %v3320
          %v3322 = vmul.f32 %v3276, 1.442695
          %v3323 = vpow.pop %v3322
          %v3324 = vmul.f32 %v3277, 1.442695
          %v3325 = vpow.pop %v3324
          %v3326 = vmul.f32 %v3278, 1.442695
          %v3327 = vpow.pop %v3326
          %v3328 = vmul.f32 %v3279, 1.442695
          %v3329 = vpow.pop %v3328
          %v3330 = vmul.f32 %v3280, 1.442695
          %v3331 = vpow.pop %v3330
          %v3332 = vmul.f32 %v3281, 1.442695
          %v3333 = vpow.pop %v3332
          %v3334 = vmul.f32 %v3282, 1.442695
          %v3335 = vpow.pop %v3334
          %v3336 = vmul.f32 %v3283, 1.442695
          %v3337 = vpow.pop %v3336
          %v3338 = vmul.f32 %v3284, 1.442695
          %v3339 = vpow.pop %v3338
          %v3340 = vmul.f32 %v3285, 1.442695
          %v3341 = vpow.pop %v3340
          %v3342 = vmul.f32 %v3286, 1.442695
          %v3343 = vpow.pop %v3342
          %v3344 = vmul.f32 %v3287, 1.442695
          %v3345 = vpow.pop %v3344
          %v3346 = vmul.f32 %v3288, 1.442695
          %v3347 = vpow.pop %v3346
          %v3348 = vmul.f32 %v3289, 1.442695
          %v3349 = vpow.pop %v3348
          %v3350 = vmul.f32 %v3290, 1.442695
          %v3351 = vpow.pop %v3350
          %v3352 = vmul.f32 %v3291, 1.442695
          %v3353 = vpow.pop %v3352
          %v3354 = vmul.f32 %v3292, 1.442695
          %v3355 = vpow.pop %v3354
          %v3356 = vmul.f32 %v3293, 1.442695
          %v3357 = vpow.pop %v3356
          %v3358 = vadd.f32 %v3295, 1.0
          %v3359 = vadd.f32 %v3297, 1.0
          %v3360 = vadd.f32 %v3299, 1.0
          %v3361 = vadd.f32 %v3301, 1.0
          %v3362 = vadd.f32 %v3303, 1.0
          %v3363 = vadd.f32 %v3305, 1.0
          %v3364 = vadd.f32 %v3307, 1.0
          %v3365 = vadd.f32 %v3309, 1.0
          %v3366 = vadd.f32 %v3311, 1.0
          %v3367 = vadd.f32 %v3313, 1.0
          %v3368 = vadd.f32 %v3315, 1.0
          %v3369 = vadd.f32 %v3317, 1.0
          %v3370 = vadd.f32 %v3319, 1.0
          %v3371 = vadd.f32 %v3321, 1.0
          %v3372 = vadd.f32 %v3323, 1.0
          %v3373 = vadd.f32 %v3325, 1.0
          %v3374 = vadd.f32 %v3327, 1.0
          %v3375 = vadd.f32 %v3329, 1.0
          %v3376 = vadd.f32 %v3331, 1.0
          %v3377 = vadd.f32 %v3333, 1.0
          %v3378 = vadd.f32 %v3335, 1.0
          %v3379 = vadd.f32 %v3337, 1.0
          %v3380 = vadd.f32 %v3339, 1.0
          %v3381 = vadd.f32 %v3341, 1.0
          %v3382 = vadd.f32 %v3343, 1.0
          %v3383 = vadd.f32 %v3345, 1.0
          %v3384 = vadd.f32 %v3347, 1.0
          %v3385 = vadd.f32 %v3349, 1.0
          %v3386 = vadd.f32 %v3351, 1.0
          %v3387 = vadd.f32 %v3353, 1.0
          %v3388 = vadd.f32 %v3355, 1.0
          %v3389 = vadd.f32 %v3357, 1.0
          %v3390 = vrcp.pop %v3358
          %v3391 = vmul.f32 %v3358, %v3390
          %v3392 = vsub.f32 1.0, %v3391
          %v3393 = vmul.f32 %v3390, %v3392
          %v3394 = vadd.f32 %v3390, %v3393
          %vm3395 = vweird.f32 %v3358
          %vm3396 = vweird.f32 %v3390
          %vm3397 = vmor %vm3395, %vm3396
          %v3398 = vsel %vm3397, %v3390, %v3394
          %v3399 = vand.u32 2147483647, %v3358
          %vm3400 = vcmp.eq.f32.partialorder %v3399, 8.507059e+37
          %v3401 = vand.u32 %v3358, 2147483648
          %v3402 = vor.u32 1.1754944e-38, %v3401
          %v3403 = vsel %vm3400, %v3402, %v3398
          %v3404 = vmul.f32 1.0, %v3403
          %v3405 = vrcp.pop %v3359
          %v3406 = vmul.f32 %v3359, %v3405
          %v3407 = vsub.f32 1.0, %v3406
          %v3408 = vmul.f32 %v3405, %v3407
          %v3409 = vadd.f32 %v3405, %v3408
          %vm3410 = vweird.f32 %v3359
          %vm3411 = vweird.f32 %v3405
          %vm3412 = vmor %vm3410, %vm3411
          %v3413 = vsel %vm3412, %v3405, %v3409
          %v3414 = vand.u32 2147483647, %v3359
          %vm3415 = vcmp.eq.f32.partialorder %v3414, 8.507059e+37
          %v3416 = vand.u32 %v3359, 2147483648
          %v3417 = vor.u32 1.1754944e-38, %v3416
          %v3418 = vsel %vm3415, %v3417, %v3413
          %v3419 = vmul.f32 1.0, %v3418
          %v3420 = vrcp.pop %v3360
          %v3421 = vmul.f32 %v3360, %v3420
          %v3422 = vsub.f32 1.0, %v3421
          %v3423 = vmul.f32 %v3420, %v3422
          %v3424 = vadd.f32 %v3420, %v3423
          %vm3425 = vweird.f32 %v3360
          %vm3426 = vweird.f32 %v3420
          %vm3427 = vmor %vm3425, %vm3426
          %v3428 = vsel %vm3427, %v3420, %v3424
          %v3429 = vand.u32 2147483647, %v3360
          %vm3430 = vcmp.eq.f32.partialorder %v3429, 8.507059e+37
          %v3431 = vand.u32 %v3360, 2147483648
          %v3432 = vor.u32 1.1754944e-38, %v3431
          %v3433 = vsel %vm3430, %v3432, %v3428
          %v3434 = vmul.f32 1.0, %v3433
          %v3435 = vrcp.pop %v3361
          %v3436 = vmul.f32 %v3361, %v3435
          %v3437 = vsub.f32 1.0, %v3436
          %v3438 = vmul.f32 %v3435, %v3437
          %v3439 = vadd.f32 %v3435, %v3438
          %vm3440 = vweird.f32 %v3361
          %vm3441 = vweird.f32 %v3435
          %vm3442 = vmor %vm3440, %vm3441
          %v3443 = vsel %vm3442, %v3435, %v3439
          %v3444 = vand.u32 2147483647, %v3361
          %vm3445 = vcmp.eq.f32.partialorder %v3444, 8.507059e+37
          %v3446 = vand.u32 %v3361, 2147483648
          %v3447 = vor.u32 1.1754944e-38, %v3446
          %v3448 = vsel %vm3445, %v3447, %v3443
          %v3449 = vmul.f32 1.0, %v3448
          %v3450 = vrcp.pop %v3362
          %v3451 = vmul.f32 %v3362, %v3450
          %v3452 = vsub.f32 1.0, %v3451
          %v3453 = vmul.f32 %v3450, %v3452
          %v3454 = vadd.f32 %v3450, %v3453
          %vm3455 = vweird.f32 %v3362
          %vm3456 = vweird.f32 %v3450
          %vm3457 = vmor %vm3455, %vm3456
          %v3458 = vsel %vm3457, %v3450, %v3454
          %v3459 = vand.u32 2147483647, %v3362
          %vm3460 = vcmp.eq.f32.partialorder %v3459, 8.507059e+37
          %v3461 = vand.u32 %v3362, 2147483648
          %v3462 = vor.u32 1.1754944e-38, %v3461
          %v3463 = vsel %vm3460, %v3462, %v3458
          %v3464 = vmul.f32 1.0, %v3463
          %v3465 = vrcp.pop %v3363
          %v3466 = vmul.f32 %v3363, %v3465
          %v3467 = vsub.f32 1.0, %v3466
          %v3468 = vmul.f32 %v3465, %v3467
          %v3469 = vadd.f32 %v3465, %v3468
          %vm3470 = vweird.f32 %v3363
          %vm3471 = vweird.f32 %v3465
          %vm3472 = vmor %vm3470, %vm3471
          %v3473 = vsel %vm3472, %v3465, %v3469
          %v3474 = vand.u32 2147483647, %v3363
          %vm3475 = vcmp.eq.f32.partialorder %v3474, 8.507059e+37
          %v3476 = vand.u32 %v3363, 2147483648
          %v3477 = vor.u32 1.1754944e-38, %v3476
          %v3478 = vsel %vm3475, %v3477, %v3473
          %v3479 = vmul.f32 1.0, %v3478
          %v3480 = vrcp.pop %v3364
          %v3481 = vmul.f32 %v3364, %v3480
          %v3482 = vsub.f32 1.0, %v3481
          %v3483 = vmul.f32 %v3480, %v3482
          %v3484 = vadd.f32 %v3480, %v3483
          %vm3485 = vweird.f32 %v3364
          %vm3486 = vweird.f32 %v3480
          %vm3487 = vmor %vm3485, %vm3486
          %v3488 = vsel %vm3487, %v3480, %v3484
          %v3489 = vand.u32 2147483647, %v3364
          %vm3490 = vcmp.eq.f32.partialorder %v3489, 8.507059e+37
          %v3491 = vand.u32 %v3364, 2147483648
          %v3492 = vor.u32 1.1754944e-38, %v3491
          %v3493 = vsel %vm3490, %v3492, %v3488
          %v3494 = vmul.f32 1.0, %v3493
          %v3495 = vrcp.pop %v3365
          %v3496 = vmul.f32 %v3365, %v3495
          %v3497 = vsub.f32 1.0, %v3496
          %v3498 = vmul.f32 %v3495, %v3497
          %v3499 = vadd.f32 %v3495, %v3498
          %vm3500 = vweird.f32 %v3365
          %vm3501 = vweird.f32 %v3495
          %vm3502 = vmor %vm3500, %vm3501
          %v3503 = vsel %vm3502, %v3495, %v3499
          %v3504 = vand.u32 2147483647, %v3365
          %vm3505 = vcmp.eq.f32.partialorder %v3504, 8.507059e+37
          %v3506 = vand.u32 %v3365, 2147483648
          %v3507 = vor.u32 1.1754944e-38, %v3506
          %v3508 = vsel %vm3505, %v3507, %v3503
          %v3509 = vmul.f32 1.0, %v3508
          %v3510 = vrcp.pop %v3366
          %v3511 = vmul.f32 %v3366, %v3510
          %v3512 = vsub.f32 1.0, %v3511
          %v3513 = vmul.f32 %v3510, %v3512
          %v3514 = vadd.f32 %v3510, %v3513
          %vm3515 = vweird.f32 %v3366
          %vm3516 = vweird.f32 %v3510
          %vm3517 = vmor %vm3515, %vm3516
          %v3518 = vsel %vm3517, %v3510, %v3514
          %v3519 = vand.u32 2147483647, %v3366
          %vm3520 = vcmp.eq.f32.partialorder %v3519, 8.507059e+37
          %v3521 = vand.u32 %v3366, 2147483648
          %v3522 = vor.u32 1.1754944e-38, %v3521
          %v3523 = vsel %vm3520, %v3522, %v3518
          %v3524 = vmul.f32 1.0, %v3523
          %v3525 = vrcp.pop %v3367
          %v3526 = vmul.f32 %v3367, %v3525
          %v3527 = vsub.f32 1.0, %v3526
          %v3528 = vmul.f32 %v3525, %v3527
          %v3529 = vadd.f32 %v3525, %v3528
          %vm3530 = vweird.f32 %v3367
          %vm3531 = vweird.f32 %v3525
          %vm3532 = vmor %vm3530, %vm3531
          %v3533 = vsel %vm3532, %v3525, %v3529
          %v3534 = vand.u32 2147483647, %v3367
          %vm3535 = vcmp.eq.f32.partialorder %v3534, 8.507059e+37
          %v3536 = vand.u32 %v3367, 2147483648
          %v3537 = vor.u32 1.1754944e-38, %v3536
          %v3538 = vsel %vm3535, %v3537, %v3533
          %v3539 = vmul.f32 1.0, %v3538
          %v3540 = vrcp.pop %v3368
          %v3541 = vmul.f32 %v3368, %v3540
          %v3542 = vsub.f32 1.0, %v3541
          %v3543 = vmul.f32 %v3540, %v3542
          %v3544 = vadd.f32 %v3540, %v3543
          %vm3545 = vweird.f32 %v3368
          %vm3546 = vweird.f32 %v3540
          %vm3547 = vmor %vm3545, %vm3546
          %v3548 = vsel %vm3547, %v3540, %v3544
          %v3549 = vand.u32 2147483647, %v3368
          %vm3550 = vcmp.eq.f32.partialorder %v3549, 8.507059e+37
          %v3551 = vand.u32 %v3368, 2147483648
          %v3552 = vor.u32 1.1754944e-38, %v3551
          %v3553 = vsel %vm3550, %v3552, %v3548
          %v3554 = vmul.f32 1.0, %v3553
          %v3555 = vrcp.pop %v3369
          %v3556 = vmul.f32 %v3369, %v3555
          %v3557 = vsub.f32 1.0, %v3556
          %v3558 = vmul.f32 %v3555, %v3557
          %v3559 = vadd.f32 %v3555, %v3558
          %vm3560 = vweird.f32 %v3369
          %vm3561 = vweird.f32 %v3555
          %vm3562 = vmor %vm3560, %vm3561
          %v3563 = vsel %vm3562, %v3555, %v3559
          %v3564 = vand.u32 2147483647, %v3369
          %vm3565 = vcmp.eq.f32.partialorder %v3564, 8.507059e+37
          %v3566 = vand.u32 %v3369, 2147483648
          %v3567 = vor.u32 1.1754944e-38, %v3566
          %v3568 = vsel %vm3565, %v3567, %v3563
          %v3569 = vmul.f32 1.0, %v3568
          %v3570 = vrcp.pop %v3370
          %v3571 = vmul.f32 %v3370, %v3570
          %v3572 = vsub.f32 1.0, %v3571
          %v3573 = vmul.f32 %v3570, %v3572
          %v3574 = vadd.f32 %v3570, %v3573
          %vm3575 = vweird.f32 %v3370
          %vm3576 = vweird.f32 %v3570
          %vm3577 = vmor %vm3575, %vm3576
          %v3578 = vsel %vm3577, %v3570, %v3574
          %v3579 = vand.u32 2147483647, %v3370
          %vm3580 = vcmp.eq.f32.partialorder %v3579, 8.507059e+37
          %v3581 = vand.u32 %v3370, 2147483648
          %v3582 = vor.u32 1.1754944e-38, %v3581
          %v3583 = vsel %vm3580, %v3582, %v3578
          %v3584 = vmul.f32 1.0, %v3583
          %v3585 = vrcp.pop %v3371
          %v3586 = vmul.f32 %v3371, %v3585
          %v3587 = vsub.f32 1.0, %v3586
          %v3588 = vmul.f32 %v3585, %v3587
          %v3589 = vadd.f32 %v3585, %v3588
          %vm3590 = vweird.f32 %v3371
          %vm3591 = vweird.f32 %v3585
          %vm3592 = vmor %vm3590, %vm3591
          %v3593 = vsel %vm3592, %v3585, %v3589
          %v3594 = vand.u32 2147483647, %v3371
          %vm3595 = vcmp.eq.f32.partialorder %v3594, 8.507059e+37
          %v3596 = vand.u32 %v3371, 2147483648
          %v3597 = vor.u32 1.1754944e-38, %v3596
          %v3598 = vsel %vm3595, %v3597, %v3593
          %v3599 = vmul.f32 1.0, %v3598
          %v3600 = vrcp.pop %v3372
          %v3601 = vmul.f32 %v3372, %v3600
          %v3602 = vsub.f32 1.0, %v3601
          %v3603 = vmul.f32 %v3600, %v3602
          %v3604 = vadd.f32 %v3600, %v3603
          %vm3605 = vweird.f32 %v3372
          %vm3606 = vweird.f32 %v3600
          %vm3607 = vmor %vm3605, %vm3606
          %v3608 = vsel %vm3607, %v3600, %v3604
          %v3609 = vand.u32 2147483647, %v3372
          %vm3610 = vcmp.eq.f32.partialorder %v3609, 8.507059e+37
          %v3611 = vand.u32 %v3372, 2147483648
          %v3612 = vor.u32 1.1754944e-38, %v3611
          %v3613 = vsel %vm3610, %v3612, %v3608
          %v3614 = vmul.f32 1.0, %v3613
          %v3615 = vrcp.pop %v3373
          %v3616 = vmul.f32 %v3373, %v3615
          %v3617 = vsub.f32 1.0, %v3616
          %v3618 = vmul.f32 %v3615, %v3617
          %v3619 = vadd.f32 %v3615, %v3618
          %vm3620 = vweird.f32 %v3373
          %vm3621 = vweird.f32 %v3615
          %vm3622 = vmor %vm3620, %vm3621
          %v3623 = vsel %vm3622, %v3615, %v3619
          %v3624 = vand.u32 2147483647, %v3373
          %vm3625 = vcmp.eq.f32.partialorder %v3624, 8.507059e+37
          %v3626 = vand.u32 %v3373, 2147483648
          %v3627 = vor.u32 1.1754944e-38, %v3626
          %v3628 = vsel %vm3625, %v3627, %v3623
          %v3629 = vmul.f32 1.0, %v3628
          %v3630 = vrcp.pop %v3374
          %v3631 = vmul.f32 %v3374, %v3630
          %v3632 = vsub.f32 1.0, %v3631
          %v3633 = vmul.f32 %v3630, %v3632
          %v3634 = vadd.f32 %v3630, %v3633
          %vm3635 = vweird.f32 %v3374
          %vm3636 = vweird.f32 %v3630
          %vm3637 = vmor %vm3635, %vm3636
          %v3638 = vsel %vm3637, %v3630, %v3634
          %v3639 = vand.u32 2147483647, %v3374
          %vm3640 = vcmp.eq.f32.partialorder %v3639, 8.507059e+37
          %v3641 = vand.u32 %v3374, 2147483648
          %v3642 = vor.u32 1.1754944e-38, %v3641
          %v3643 = vsel %vm3640, %v3642, %v3638
          %v3644 = vmul.f32 1.0, %v3643
          %v3645 = vrcp.pop %v3375
          %v3646 = vmul.f32 %v3375, %v3645
          %v3647 = vsub.f32 1.0, %v3646
          %v3648 = vmul.f32 %v3645, %v3647
          %v3649 = vadd.f32 %v3645, %v3648
          %vm3650 = vweird.f32 %v3375
          %vm3651 = vweird.f32 %v3645
          %vm3652 = vmor %vm3650, %vm3651
          %v3653 = vsel %vm3652, %v3645, %v3649
          %v3654 = vand.u32 2147483647, %v3375
          %vm3655 = vcmp.eq.f32.partialorder %v3654, 8.507059e+37
          %v3656 = vand.u32 %v3375, 2147483648
          %v3657 = vor.u32 1.1754944e-38, %v3656
          %v3658 = vsel %vm3655, %v3657, %v3653
          %v3659 = vmul.f32 1.0, %v3658
          %v3660 = vrcp.pop %v3376
          %v3661 = vmul.f32 %v3376, %v3660
          %v3662 = vsub.f32 1.0, %v3661
          %v3663 = vmul.f32 %v3660, %v3662
          %v3664 = vadd.f32 %v3660, %v3663
          %vm3665 = vweird.f32 %v3376
          %vm3666 = vweird.f32 %v3660
          %vm3667 = vmor %vm3665, %vm3666
          %v3668 = vsel %vm3667, %v3660, %v3664
          %v3669 = vand.u32 2147483647, %v3376
          %vm3670 = vcmp.eq.f32.partialorder %v3669, 8.507059e+37
          %v3671 = vand.u32 %v3376, 2147483648
          %v3672 = vor.u32 1.1754944e-38, %v3671
          %v3673 = vsel %vm3670, %v3672, %v3668
          %v3674 = vmul.f32 1.0, %v3673
          %v3675 = vrcp.pop %v3377
          %v3676 = vmul.f32 %v3377, %v3675
          %v3677 = vsub.f32 1.0, %v3676
          %v3678 = vmul.f32 %v3675, %v3677
          %v3679 = vadd.f32 %v3675, %v3678
          %vm3680 = vweird.f32 %v3377
          %vm3681 = vweird.f32 %v3675
          %vm3682 = vmor %vm3680, %vm3681
          %v3683 = vsel %vm3682, %v3675, %v3679
          %v3684 = vand.u32 2147483647, %v3377
          %vm3685 = vcmp.eq.f32.partialorder %v3684, 8.507059e+37
          %v3686 = vand.u32 %v3377, 2147483648
          %v3687 = vor.u32 1.1754944e-38, %v3686
          %v3688 = vsel %vm3685, %v3687, %v3683
          %v3689 = vmul.f32 1.0, %v3688
          %v3690 = vrcp.pop %v3378
          %v3691 = vmul.f32 %v3378, %v3690
          %v3692 = vsub.f32 1.0, %v3691
          %v3693 = vmul.f32 %v3690, %v3692
          %v3694 = vadd.f32 %v3690, %v3693
          %vm3695 = vweird.f32 %v3378
          %vm3696 = vweird.f32 %v3690
          %vm3697 = vmor %vm3695, %vm3696
          %v3698 = vsel %vm3697, %v3690, %v3694
          %v3699 = vand.u32 2147483647, %v3378
          %vm3700 = vcmp.eq.f32.partialorder %v3699, 8.507059e+37
          %v3701 = vand.u32 %v3378, 2147483648
          %v3702 = vor.u32 1.1754944e-38, %v3701
          %v3703 = vsel %vm3700, %v3702, %v3698
          %v3704 = vmul.f32 1.0, %v3703
          %v3705 = vrcp.pop %v3379
          %v3706 = vmul.f32 %v3379, %v3705
          %v3707 = vsub.f32 1.0, %v3706
          %v3708 = vmul.f32 %v3705, %v3707
          %v3709 = vadd.f32 %v3705, %v3708
          %vm3710 = vweird.f32 %v3379
          %vm3711 = vweird.f32 %v3705
          %vm3712 = vmor %vm3710, %vm3711
          %v3713 = vsel %vm3712, %v3705, %v3709
          %v3714 = vand.u32 2147483647, %v3379
          %vm3715 = vcmp.eq.f32.partialorder %v3714, 8.507059e+37
          %v3716 = vand.u32 %v3379, 2147483648
          %v3717 = vor.u32 1.1754944e-38, %v3716
          %v3718 = vsel %vm3715, %v3717, %v3713
          %v3719 = vmul.f32 1.0, %v3718
          %v3720 = vrcp.pop %v3380
          %v3721 = vmul.f32 %v3380, %v3720
          %v3722 = vsub.f32 1.0, %v3721
          %v3723 = vmul.f32 %v3720, %v3722
          %v3724 = vadd.f32 %v3720, %v3723
          %vm3725 = vweird.f32 %v3380
          %vm3726 = vweird.f32 %v3720
          %vm3727 = vmor %vm3725, %vm3726
          %v3728 = vsel %vm3727, %v3720, %v3724
          %v3729 = vand.u32 2147483647, %v3380
          %vm3730 = vcmp.eq.f32.partialorder %v3729, 8.507059e+37
          %v3731 = vand.u32 %v3380, 2147483648
          %v3732 = vor.u32 1.1754944e-38, %v3731
          %v3733 = vsel %vm3730, %v3732, %v3728
          %v3734 = vmul.f32 1.0, %v3733
          %v3735 = vrcp.pop %v3381
          %v3736 = vmul.f32 %v3381, %v3735
          %v3737 = vsub.f32 1.0, %v3736
          %v3738 = vmul.f32 %v3735, %v3737
          %v3739 = vadd.f32 %v3735, %v3738
          %vm3740 = vweird.f32 %v3381
          %vm3741 = vweird.f32 %v3735
          %vm3742 = vmor %vm3740, %vm3741
          %v3743 = vsel %vm3742, %v3735, %v3739
          %v3744 = vand.u32 2147483647, %v3381
          %vm3745 = vcmp.eq.f32.partialorder %v3744, 8.507059e+37
          %v3746 = vand.u32 %v3381, 2147483648
          %v3747 = vor.u32 1.1754944e-38, %v3746
          %v3748 = vsel %vm3745, %v3747, %v3743
          %v3749 = vmul.f32 1.0, %v3748
          %v3750 = vrcp.pop %v3382
          %v3751 = vmul.f32 %v3382, %v3750
          %v3752 = vsub.f32 1.0, %v3751
          %v3753 = vmul.f32 %v3750, %v3752
          %v3754 = vadd.f32 %v3750, %v3753
          %vm3755 = vweird.f32 %v3382
          %vm3756 = vweird.f32 %v3750
          %vm3757 = vmor %vm3755, %vm3756
          %v3758 = vsel %vm3757, %v3750, %v3754
          %v3759 = vand.u32 2147483647, %v3382
          %vm3760 = vcmp.eq.f32.partialorder %v3759, 8.507059e+37
          %v3761 = vand.u32 %v3382, 2147483648
          %v3762 = vor.u32 1.1754944e-38, %v3761
          %v3763 = vsel %vm3760, %v3762, %v3758
          %v3764 = vmul.f32 1.0, %v3763
          %v3765 = vrcp.pop %v3383
          %v3766 = vmul.f32 %v3383, %v3765
          %v3767 = vsub.f32 1.0, %v3766
          %v3768 = vmul.f32 %v3765, %v3767
          %v3769 = vadd.f32 %v3765, %v3768
          %vm3770 = vweird.f32 %v3383
          %vm3771 = vweird.f32 %v3765
          %vm3772 = vmor %vm3770, %vm3771
          %v3773 = vsel %vm3772, %v3765, %v3769
          %v3774 = vand.u32 2147483647, %v3383
          %vm3775 = vcmp.eq.f32.partialorder %v3774, 8.507059e+37
          %v3776 = vand.u32 %v3383, 2147483648
          %v3777 = vor.u32 1.1754944e-38, %v3776
          %v3778 = vsel %vm3775, %v3777, %v3773
          %v3779 = vmul.f32 1.0, %v3778
          %v3780 = vrcp.pop %v3384
          %v3781 = vmul.f32 %v3384, %v3780
          %v3782 = vsub.f32 1.0, %v3781
          %v3783 = vmul.f32 %v3780, %v3782
          %v3784 = vadd.f32 %v3780, %v3783
          %vm3785 = vweird.f32 %v3384
          %vm3786 = vweird.f32 %v3780
          %vm3787 = vmor %vm3785, %vm3786
          %v3788 = vsel %vm3787, %v3780, %v3784
          %v3789 = vand.u32 2147483647, %v3384
          %vm3790 = vcmp.eq.f32.partialorder %v3789, 8.507059e+37
          %v3791 = vand.u32 %v3384, 2147483648
          %v3792 = vor.u32 1.1754944e-38, %v3791
          %v3793 = vsel %vm3790, %v3792, %v3788
          %v3794 = vmul.f32 1.0, %v3793
          %v3795 = vrcp.pop %v3385
          %v3796 = vmul.f32 %v3385, %v3795
          %v3797 = vsub.f32 1.0, %v3796
          %v3798 = vmul.f32 %v3795, %v3797
          %v3799 = vadd.f32 %v3795, %v3798
          %vm3800 = vweird.f32 %v3385
          %vm3801 = vweird.f32 %v3795
          %vm3802 = vmor %vm3800, %vm3801
          %v3803 = vsel %vm3802, %v3795, %v3799
          %v3804 = vand.u32 2147483647, %v3385
          %vm3805 = vcmp.eq.f32.partialorder %v3804, 8.507059e+37
          %v3806 = vand.u32 %v3385, 2147483648
          %v3807 = vor.u32 1.1754944e-38, %v3806
          %v3808 = vsel %vm3805, %v3807, %v3803
          %v3809 = vmul.f32 1.0, %v3808
          %v3810 = vrcp.pop %v3386
          %v3811 = vmul.f32 %v3386, %v3810
          %v3812 = vsub.f32 1.0, %v3811
          %v3813 = vmul.f32 %v3810, %v3812
          %v3814 = vadd.f32 %v3810, %v3813
          %vm3815 = vweird.f32 %v3386
          %vm3816 = vweird.f32 %v3810
          %vm3817 = vmor %vm3815, %vm3816
          %v3818 = vsel %vm3817, %v3810, %v3814
          %v3819 = vand.u32 2147483647, %v3386
          %vm3820 = vcmp.eq.f32.partialorder %v3819, 8.507059e+37
          %v3821 = vand.u32 %v3386, 2147483648
          %v3822 = vor.u32 1.1754944e-38, %v3821
          %v3823 = vsel %vm3820, %v3822, %v3818
          %v3824 = vmul.f32 1.0, %v3823
          %v3825 = vrcp.pop %v3387
          %v3826 = vmul.f32 %v3387, %v3825
          %v3827 = vsub.f32 1.0, %v3826
          %v3828 = vmul.f32 %v3825, %v3827
          %v3829 = vadd.f32 %v3825, %v3828
          %vm3830 = vweird.f32 %v3387
          %vm3831 = vweird.f32 %v3825
          %vm3832 = vmor %vm3830, %vm3831
          %v3833 = vsel %vm3832, %v3825, %v3829
          %v3834 = vand.u32 2147483647, %v3387
          %vm3835 = vcmp.eq.f32.partialorder %v3834, 8.507059e+37
          %v3836 = vand.u32 %v3387, 2147483648
          %v3837 = vor.u32 1.1754944e-38, %v3836
          %v3838 = vsel %vm3835, %v3837, %v3833
          %v3839 = vmul.f32 1.0, %v3838
          %v3840 = vrcp.pop %v3388
          %v3841 = vmul.f32 %v3388, %v3840
          %v3842 = vsub.f32 1.0, %v3841
          %v3843 = vmul.f32 %v3840, %v3842
          %v3844 = vadd.f32 %v3840, %v3843
          %vm3845 = vweird.f32 %v3388
          %vm3846 = vweird.f32 %v3840
          %vm3847 = vmor %vm3845, %vm3846
          %v3848 = vsel %vm3847, %v3840, %v3844
          %v3849 = vand.u32 2147483647, %v3388
          %vm3850 = vcmp.eq.f32.partialorder %v3849, 8.507059e+37
          %v3851 = vand.u32 %v3388, 2147483648
          %v3852 = vor.u32 1.1754944e-38, %v3851
          %v3853 = vsel %vm3850, %v3852, %v3848
          %v3854 = vmul.f32 1.0, %v3853
          %v3855 = vrcp.pop %v3389
          %v3856 = vmul.f32 %v3389, %v3855
          %v3857 = vsub.f32 1.0, %v3856
          %v3858 = vmul.f32 %v3855, %v3857
          %v3859 = vadd.f32 %v3855, %v3858
          %vm3860 = vweird.f32 %v3389
          %vm3861 = vweird.f32 %v3855
          %vm3862 = vmor %vm3860, %vm3861
          %v3863 = vsel %vm3862, %v3855, %v3859
          %v3864 = vand.u32 2147483647, %v3389
          %vm3865 = vcmp.eq.f32.partialorder %v3864, 8.507059e+37
          %v3866 = vand.u32 %v3389, 2147483648
          %v3867 = vor.u32 1.1754944e-38, %v3866
          %v3868 = vsel %vm3865, %v3867, %v3863
          %v3869 = vmul.f32 1.0, %v3868
          %3870 = vst [vmem:[%s259] sm:$0xff] %v3404
          %3871 = vst [vmem:[%s259 + $0x8] sm:$0xff] %v3419
          %3872 = vst [vmem:[%s259 + $0x10] sm:$0xff] %v3434
          %3873 = vst [vmem:[%s259 + $0x18] sm:$0xff] %v3449
          %3874 = vst [vmem:[%s259 + $0x20] sm:$0xff] %v3464
          %3875 = vst [vmem:[%s259 + $0x28] sm:$0xff] %v3479
          %3876 = vst [vmem:[%s259 + $0x30] sm:$0xff] %v3494
          %3877 = vst [vmem:[%s259 + $0x38] sm:$0xff] %v3509
          %3878 = vst [vmem:[%s259 + $0x40] sm:$0xff] %v3524
          %3879 = vst [vmem:[%s259 + $0x48] sm:$0xff] %v3539
          %3880 = vst [vmem:[%s259 + $0x50] sm:$0xff] %v3554
          %3881 = vst [vmem:[%s259 + $0x58] sm:$0xff] %v3569
          %3882 = vst [vmem:[%s259 + $0x60] sm:$0xff] %v3584
          %3883 = vst [vmem:[%s259 + $0x68] sm:$0xff] %v3599
          %3884 = vst [vmem:[%s259 + $0x70] sm:$0xff] %v3614
          %3885 = vst [vmem:[%s259 + $0x78] sm:$0xff] %v3629
          %3886 = vst [vmem:[%s259 + $0x80] sm:$0xff] %v3644
          %3887 = vst [vmem:[%s259 + $0x88] sm:$0xff] %v3659
          %3888 = vst [vmem:[%s259 + $0x90] sm:$0xff] %v3674
          %3889 = vst [vmem:[%s259 + $0x98] sm:$0xff] %v3689
          %3890 = vst [vmem:[%s259 + $0xa0] sm:$0xff] %v3704
          %3891 = vst [vmem:[%s259 + $0xa8] sm:$0xff] %v3719
          %3892 = vst [vmem:[%s259 + $0xb0] sm:$0xff] %v3734
          %3893 = vst [vmem:[%s259 + $0xb8] sm:$0xff] %v3749
          %3894 = vst [vmem:[%s259 + $0xc0] sm:$0xff] %v3764
          %3895 = vst [vmem:[%s259 + $0xc8] sm:$0xff] %v3779
          %3896 = vst [vmem:[%s259 + $0xd0] sm:$0xff] %v3794
          %3897 = vst [vmem:[%s259 + $0xd8] sm:$0xff] %v3809
          %3898 = vst [vmem:[%s259 + $0xe0] sm:$0xff] %v3824
          %3899 = vst [vmem:[%s259 + $0xe8] sm:$0xff] %v3839
          %3900 = vst [vmem:[%s259 + $0xf0] sm:$0xff] %v3854
          %3901 = vst [vmem:[%s259 + $0xf8] sm:$0xff] %v3869
        $region52: #{classification_model_forward.1} parent=31 // pred_fallthru
          _
        %p3902 = scmp.lt.s32.totalorder %s24, 1
        %s3903 = scalar_select %p3902, %s24, 1
        %s3904 = smul.addr %s3903, 32
        %s3905 = smul.addr %s3904, 8
        %s3906 = scalar_lea.vmem %s3, %s3905
        // Predicated region
        $region53: #{classification_model_forward.1} parent=31 // pred_check
          %p3907 = pneg %p128
        $region54: #{classification_model_forward.1} parent=31 // pred_check_branch
          %3909 = sbr.rel (%p3907) target = $region56
        $region55: #{classification_model_forward.1} parent=31 // pred_region
          _
        $region56: #{classification_model_forward.1} parent=31 // pred_fallthru
          _
      $region32: #{classification_model_forward.1} parent=5 // pred_fallthru
        _
      %p3910 = scmp.le.s32.totalorder 2, %s15
      // Predicated region
      $region57: #{classification_model_forward.1} parent=5 // pred_check
        %p3911 = pneg %p3910
      $region58: #{classification_model_forward.1} parent=5 // pred_check_branch
        %3913 = sbr.rel (%p3911) target = $region60
      $region59: #{classification_model_forward.1} parent=5 // pred_region
        %s3914 = ssub.s32 %s15, 2
        // Predicated region
        $region61: #{classification_model_forward.1} parent=59 // pred_check
          %p3915 = pneg %p134
        $region62: #{classification_model_forward.1} parent=59 // pred_check_branch
          %3917 = sbr.rel (%p3915) target = $region64
        $region63: #{classification_model_forward.1} parent=59 // pred_region
          %p3918 = scmp.lt.s32.totalorder %s26, 1
          %s3919 = scalar_select %p3918, %s26, 1
          %s3920 = smul.addr %s3919, 32
          %s3921 = smul.addr %s3920, 8
          %s3922 = scalar_lea.vmem %s3, %s3921
        $region64: #{classification_model_forward.1} parent=59 // pred_fallthru
          _
      $region60: #{classification_model_forward.1} parent=5 // pred_fallthru
        _
    $region6: #{classification_model_forward.1} parent=1 // loop_footer
      %s19 = sadd.s32 1, %s15
    $region7: #{classification_model_forward.1} parent=1 // loop_footer_branch
      %14 = sbr.rel target = $region3
    $region8: #{classification_model_forward.1} parent=1 // loop_exit
      _
    %3923 = vsyncpa [#allocation4], 1
    %s3924 = scalar_lea.sflag [#allocation4], 1
    %3925 = vsyncpa %s3924, 1
    %3926 = vsyncpa [#allocation6], 1
    %s3927 = scalar_lea.sflag [#allocation6], 1
    %3928 = vsyncpa %s3927, 1

</llo_original>
